<compile_context>
chip_gen: v7x
topology: tpu7x:2x2x1
jax: 0.10.0
libtpu: 0.0.40
codegen_flags: <defaults>
</compile_context>

<pallas_src>
import jax
import jax.numpy as jnp
from jax import lax
from jax.experimental import pallas as pl
from jax.experimental.pallas import tpu as pltpu

_EPS = 1e-5
_PADL = 128                                               # lane halo (>= max |tap shift|, lane-tile aligned)
_TAPS = tuple((dy, dx) for dy in (-1, 0, 1) for dx in (-1, 0, 1))   # row-major (ky, kx) order


def _make_kernel(N, H, W, C):
    M = N * H * W
    inv_m = 1.0 / M

    def kernel(x_ref, mask_ref, w1_ref, g1_ref, b1_ref, w2_ref, g2_ref, b2_ref,
               o_ref, act_ref, patch_ref):

        def conv_bn_relu(src_ref, w_ref, g_ref, b_ref):
            # im2col: 9 lane-shifted (C, M) tap slices of the halo-padded source,
            # border-masked, packed into the (9*C, M) patch matrix.
            for t, (dy, dx) in enumerate(_TAPS):
                s = dy * W + dx
                blk = src_ref[:, pl.ds(_PADL + s, M)]              # (C, M)
                if dy == 0 and dx == 0:
                    patch_ref[pl.ds(t * C, C), :] = blk
                else:
                    m = mask_ref[pl.ds(t, 1), :]                   # (1, M), 0/1
                    patch_ref[pl.ds(t * C, C), :] = blk * m

            # One MXU matmul per layer: (C, 9C) x (9C, M) -> (C, M), K = 9*C.
            y = jnp.dot(w_ref[...], patch_ref[...],
                        preferred_element_type=jnp.float32)

            # One-pass BatchNorm (training mode, biased variance) + ReLU.
            ssum = jnp.sum(y, axis=1, keepdims=True)               # (C, 1)
            ssq = jnp.sum(y * y, axis=1, keepdims=True)            # (C, 1)
            mean = ssum * inv_m
            var = ssq * inv_m - mean * mean
            scale = g_ref[...] * lax.rsqrt(var + _EPS)             # (C, 1)
            shift = b_ref[...] - mean * scale
            return jnp.maximum(y * scale + shift, 0.0)

        # Zero only the halos of the layer-2 activation scratch (the input
        # arrives halo-padded from the wrapper, so layer 1 reads x_ref directly).
        act_ref[:, pl.ds(0, _PADL)] = jnp.zeros((C, _PADL), jnp.float32)
        act_ref[:, pl.ds(_PADL + M, _PADL)] = jnp.zeros((C, _PADL), jnp.float32)

        y1 = conv_bn_relu(x_ref, w1_ref, g1_ref, b1_ref)
        act_ref[:, pl.ds(_PADL, M)] = y1                           # aligned interior store
        o_ref[...] = conv_bn_relu(act_ref, w2_ref, g2_ref, b2_ref) # lane-dense output store

    return kernel


def _prep_conv_weight(w_hwio):
    """HWIO (3,3,Cin,Cout) -> (Cout, 9*Cin), tap order matching _TAPS (row-major ky,kx)."""
    c_in, c_out = w_hwio.shape[2], w_hwio.shape[3]
    return jnp.transpose(w_hwio, (3, 0, 1, 2)).reshape(c_out, 9 * c_in)


def _prep_vec(v):
    return v.reshape(v.shape[0], 1)                        # per-channel -> per-sublane column


def _make_masks(N, H, W):
    """(9, M) 0/1 f32 border-validity masks, one row per tap (center row = ones)."""
    M = N * H * W
    hw = jnp.arange(M, dtype=jnp.int32) % (H * W)
    hh = hw // W
    ww = hw % W
    rows = []
    for dy, dx in _TAPS:
        valid = ((hh + dy >= 0) & (hh + dy < H) & (ww + dx >= 0) & (ww + dx < W))
        rows.append(valid.astype(jnp.float32))
    return jnp.stack(rows, axis=0)


def net_forward(x_nchw, params):
    """Forward pass matching Net.forward (training-mode BatchNorm). NCHW in/out, float32."""
    (w1, b1, g1, be1, w2, b2, g2, be2) = params
    del b1, b2            # exactly cancelled by train-mode BatchNorm mean subtraction
    N, C, H, W = x_nchw.shape
    M = N * H * W

    # Channels-on-sublanes / pixels-on-lanes, lane-halo-padded: (C, PADL + M + PADL).
    x_cm = jnp.transpose(x_nchw, (1, 0, 2, 3)).reshape(C, M)
    xp = jnp.pad(x_cm, ((0, 0), (_PADL, _PADL)))
    masks = _make_masks(N, H, W)

    kernel = _make_kernel(N, H, W, C)
    vmem = pl.BlockSpec(memory_space=pltpu.MemorySpace.VMEM)
    # TODO(synk): v7x dual-TensorCore split (grid over M + cross-core BN combine)
    # is not implemented; the whole problem runs on one TC with grid=().
    out_cm = pl.pallas_call(
        kernel,
        out_shape=jax.ShapeDtypeStruct((C, M), jnp.float32),
        in_specs=[vmem] * 8,
        out_specs=vmem,
        scratch_shapes=[
            pltpu.VMEM((C, M + 2 * _PADL), jnp.float32),   # halo-padded layer-2 activation
            pltpu.VMEM((9 * C, M), jnp.float32),           # im2col patch matrix
        ],
    )(xp, masks,
      _prep_conv_weight(w1), _prep_vec(g1), _prep_vec(be1),
      _prep_conv_weight(w2), _prep_vec(g2), _prep_vec(be2))

    out = out_cm.reshape(C, N, H, W)
    return jnp.transpose(out, (1, 0, 2, 3))                # -> NCHW


def _ref_forward(x_nchw, params):
    """Pure-JAX reference (for correctness check only)."""
    (w1, b1, g1, be1, w2, b2, g2, be2) = params
    x = jnp.transpose(x_nchw, (0, 2, 3, 1))

    def layer(x, w, b, g, be):
        y = lax.conv_general_dilated(
            x, w, window_strides=(1, 1), padding='SAME',
            dimension_numbers=('NHWC', 'HWIO', 'NHWC')) + b
        m = y.mean(axis=(0, 1, 2))
        v = ((y - m) ** 2).mean(axis=(0, 1, 2))
        y = (y - m) * lax.rsqrt(v + _EPS) * g + be
        return jnp.maximum(y, 0.0)

    x = layer(x, w1, b1, g1, be1)
    x = layer(x, w2, b2, g2, be2)
    return jnp.transpose(x, (0, 3, 1, 2))


def _init_params(key, hidden_size):
    """Deterministic init mimicking PyTorch defaults (uniform +/- 1/sqrt(fan_in))."""
    C = hidden_size
    fan_in = C * 9
    bound = 1.0 / (fan_in ** 0.5)
    k = jax.random.split(key, 4)
    w1 = jax.random.uniform(k[0], (3, 3, C, C), jnp.float32, -bound, bound)  # HWIO
    b1 = jax.random.uniform(k[1], (C,), jnp.float32, -bound, bound)
    w2 = jax.random.uniform(k[2], (3, 3, C, C), jnp.float32, -bound, bound)
    b2 = jax.random.uniform(k[3], (C,), jnp.float32, -bound, bound)
    g1 = jnp.ones((C,), jnp.float32)
    be1 = jnp.zeros((C,), jnp.float32)
    g2 = jnp.ones((C,), jnp.float32)
    be2 = jnp.zeros((C,), jnp.float32)
    return (w1, b1, g1, be1, w2, b2, g2, be2)


if __name__ == "__main__":
    key = jax.random.PRNGKey(0)
    k_param, k_x = jax.random.split(key)

    N, C, H, W = 2, 32, 16, 16          # hidden_size = 32
    params = _init_params(k_param, C)
    x = jax.random.normal(k_x, (N, C, H, W), jnp.float32)

    fwd = jax.jit(net_forward)
    out = fwd(x, params)
    jax.block_until_ready(out)

    ref = _ref_forward(x, params)
    assert out.shape == (N, C, H, W)
    assert jnp.allclose(out, ref, atol=1e-4, rtol=1e-4), float(jnp.max(jnp.abs(out - ref)))

    print("KERNEL_OK")
</pallas_src>

<mosaic_0001>
module attributes {stable_mosaic.version = 11 : i64} {
  func.func @kernel(%arg0: memref<32x768xf32, #tpu.memory_space<vmem>>, %arg1: memref<9x512xf32, #tpu.memory_space<vmem>>, %arg2: memref<32x288xf32, #tpu.memory_space<vmem>>, %arg3: memref<32x1xf32, #tpu.memory_space<vmem>>, %arg4: memref<32x1xf32, #tpu.memory_space<vmem>>, %arg5: memref<32x288xf32, #tpu.memory_space<vmem>>, %arg6: memref<32x1xf32, #tpu.memory_space<vmem>>, %arg7: memref<32x1xf32, #tpu.memory_space<vmem>>, %arg8: memref<32x512xf32, #tpu.memory_space<vmem>>, %arg9: memref<32x768xf32, #tpu.memory_space<vmem>>, %arg10: memref<288x512xf32, #tpu.memory_space<vmem>>) attributes {dimension_semantics = [], scalar_prefetch = 0 : i64, scratch_operands = 2 : i64, tpu.core_type = #tpu.core_type<tc>} {
    %cst = arith.constant 0.000000e+00 : f32
    %0 = vector.broadcast %cst : f32 to vector<32x128xf32>
    %c0 = arith.constant 0 : index
    %c0_0 = arith.constant 0 : index
    %1 = vector.load %arg9[%c0, %c0_0] : memref<32x768xf32, #tpu.memory_space<vmem>>, vector<32x128xf32>
    tpu.vector_store %arg9[%c0, %c0_0], %0 {strides = array<i32>} : memref<32x768xf32, #tpu.memory_space<vmem>>, vector<32x128xf32>,
    %cst_1 = arith.constant 0.000000e+00 : f32
    %2 = vector.broadcast %cst_1 : f32 to vector<32x128xf32>
    %c0_2 = arith.constant 0 : index
    %c640 = arith.constant 640 : index
    %3 = vector.load %arg9[%c0_2, %c640] : memref<32x768xf32, #tpu.memory_space<vmem>>, vector<32x128xf32>
    tpu.vector_store %arg9[%c0_2, %c640], %2 {strides = array<i32>} : memref<32x768xf32, #tpu.memory_space<vmem>>, vector<32x128xf32>,
    %c0_3 = arith.constant 0 : index
    %c111 = arith.constant 111 : index
    %4 = vector.load %arg0[%c0_3, %c111] : memref<32x768xf32, #tpu.memory_space<vmem>>, vector<32x512xf32>
    %c0_4 = arith.constant 0 : index
    %c0_5 = arith.constant 0 : index
    %5 = vector.load %arg1[%c0_4, %c0_5] : memref<9x512xf32, #tpu.memory_space<vmem>>, vector<1x512xf32>
    %6 = vector.broadcast %5 : vector<1x512xf32> to vector<32x512xf32>
    %7 = arith.mulf %4, %6 : vector<32x512xf32>
    %c0_6 = arith.constant 0 : index
    %c0_7 = arith.constant 0 : index
    %8 = vector.load %arg10[%c0_6, %c0_7] : memref<288x512xf32, #tpu.memory_space<vmem>>, vector<32x512xf32>
    tpu.vector_store %arg10[%c0_6, %c0_7], %7 {strides = array<i32>} : memref<288x512xf32, #tpu.memory_space<vmem>>, vector<32x512xf32>,
    %c0_8 = arith.constant 0 : index
    %c112 = arith.constant 112 : index
    %9 = vector.load %arg0[%c0_8, %c112] : memref<32x768xf32, #tpu.memory_space<vmem>>, vector<32x512xf32>
    %c1 = arith.constant 1 : index
    %c0_9 = arith.constant 0 : index
    %10 = vector.load %arg1[%c1, %c0_9] : memref<9x512xf32, #tpu.memory_space<vmem>>, vector<1x512xf32>
    %11 = vector.broadcast %10 : vector<1x512xf32> to vector<32x512xf32>
    %12 = arith.mulf %9, %11 : vector<32x512xf32>
    %c32 = arith.constant 32 : index
    %c0_10 = arith.constant 0 : index
    %13 = vector.load %arg10[%c32, %c0_10] : memref<288x512xf32, #tpu.memory_space<vmem>>, vector<32x512xf32>
    tpu.vector_store %arg10[%c32, %c0_10], %12 {strides = array<i32>} : memref<288x512xf32, #tpu.memory_space<vmem>>, vector<32x512xf32>,
    %c0_11 = arith.constant 0 : index
    %c113 = arith.constant 113 : index
    %14 = vector.load %arg0[%c0_11, %c113] : memref<32x768xf32, #tpu.memory_space<vmem>>, vector<32x512xf32>
    %c2 = arith.constant 2 : index
    %c0_12 = arith.constant 0 : index
    %15 = vector.load %arg1[%c2, %c0_12] : memref<9x512xf32, #tpu.memory_space<vmem>>, vector<1x512xf32>
    %16 = vector.broadcast %15 : vector<1x512xf32> to vector<32x512xf32>
    %17 = arith.mulf %14, %16 : vector<32x512xf32>
    %c64 = arith.constant 64 : index
    %c0_13 = arith.constant 0 : index
    %18 = vector.load %arg10[%c64, %c0_13] : memref<288x512xf32, #tpu.memory_space<vmem>>, vector<32x512xf32>
    tpu.vector_store %arg10[%c64, %c0_13], %17 {strides = array<i32>} : memref<288x512xf32, #tpu.memory_space<vmem>>, vector<32x512xf32>,
    %c0_14 = arith.constant 0 : index
    %c127 = arith.constant 127 : index
    %19 = vector.load %arg0[%c0_14, %c127] : memref<32x768xf32, #tpu.memory_space<vmem>>, vector<32x512xf32>
    %c3 = arith.constant 3 : index
    %c0_15 = arith.constant 0 : index
    %20 = vector.load %arg1[%c3, %c0_15] : memref<9x512xf32, #tpu.memory_space<vmem>>, vector<1x512xf32>
    %21 = vector.broadcast %20 : vector<1x512xf32> to vector<32x512xf32>
    %22 = arith.mulf %19, %21 : vector<32x512xf32>
    %c96 = arith.constant 96 : index
    %c0_16 = arith.constant 0 : index
    %23 = vector.load %arg10[%c96, %c0_16] : memref<288x512xf32, #tpu.memory_space<vmem>>, vector<32x512xf32>
    tpu.vector_store %arg10[%c96, %c0_16], %22 {strides = array<i32>} : memref<288x512xf32, #tpu.memory_space<vmem>>, vector<32x512xf32>,
    %c0_17 = arith.constant 0 : index
    %c128 = arith.constant 128 : index
    %24 = vector.load %arg0[%c0_17, %c128] : memref<32x768xf32, #tpu.memory_space<vmem>>, vector<32x512xf32>
    %c128_18 = arith.constant 128 : index
    %c0_19 = arith.constant 0 : index
    %25 = vector.load %arg10[%c128_18, %c0_19] : memref<288x512xf32, #tpu.memory_space<vmem>>, vector<32x512xf32>
    tpu.vector_store %arg10[%c128_18, %c0_19], %24 {strides = array<i32>} : memref<288x512xf32, #tpu.memory_space<vmem>>, vector<32x512xf32>,
    %c0_20 = arith.constant 0 : index
    %c129 = arith.constant 129 : index
    %26 = vector.load %arg0[%c0_20, %c129] : memref<32x768xf32, #tpu.memory_space<vmem>>, vector<32x512xf32>
    %c5 = arith.constant 5 : index
    %c0_21 = arith.constant 0 : index
    %27 = vector.load %arg1[%c5, %c0_21] : memref<9x512xf32, #tpu.memory_space<vmem>>, vector<1x512xf32>
    %28 = vector.broadcast %27 : vector<1x512xf32> to vector<32x512xf32>
    %29 = arith.mulf %26, %28 : vector<32x512xf32>
    %c160 = arith.constant 160 : index
    %c0_22 = arith.constant 0 : index
    %30 = vector.load %arg10[%c160, %c0_22] : memref<288x512xf32, #tpu.memory_space<vmem>>, vector<32x512xf32>
    tpu.vector_store %arg10[%c160, %c0_22], %29 {strides = array<i32>} : memref<288x512xf32, #tpu.memory_space<vmem>>, vector<32x512xf32>,
    %c0_23 = arith.constant 0 : index
    %c143 = arith.constant 143 : index
    %31 = vector.load %arg0[%c0_23, %c143] : memref<32x768xf32, #tpu.memory_space<vmem>>, vector<32x512xf32>
    %c6 = arith.constant 6 : index
    %c0_24 = arith.constant 0 : index
    %32 = vector.load %arg1[%c6, %c0_24] : memref<9x512xf32, #tpu.memory_space<vmem>>, vector<1x512xf32>
    %33 = vector.broadcast %32 : vector<1x512xf32> to vector<32x512xf32>
    %34 = arith.mulf %31, %33 : vector<32x512xf32>
    %c192 = arith.constant 192 : index
    %c0_25 = arith.constant 0 : index
    %35 = vector.load %arg10[%c192, %c0_25] : memref<288x512xf32, #tpu.memory_space<vmem>>, vector<32x512xf32>
    tpu.vector_store %arg10[%c192, %c0_25], %34 {strides = array<i32>} : memref<288x512xf32, #tpu.memory_space<vmem>>, vector<32x512xf32>,
    %c0_26 = arith.constant 0 : index
    %c144 = arith.constant 144 : index
    %36 = vector.load %arg0[%c0_26, %c144] : memref<32x768xf32, #tpu.memory_space<vmem>>, vector<32x512xf32>
    %c7 = arith.constant 7 : index
    %c0_27 = arith.constant 0 : index
    %37 = vector.load %arg1[%c7, %c0_27] : memref<9x512xf32, #tpu.memory_space<vmem>>, vector<1x512xf32>
    %38 = vector.broadcast %37 : vector<1x512xf32> to vector<32x512xf32>
    %39 = arith.mulf %36, %38 : vector<32x512xf32>
    %c224 = arith.constant 224 : index
    %c0_28 = arith.constant 0 : index
    %40 = vector.load %arg10[%c224, %c0_28] : memref<288x512xf32, #tpu.memory_space<vmem>>, vector<32x512xf32>
    tpu.vector_store %arg10[%c224, %c0_28], %39 {strides = array<i32>} : memref<288x512xf32, #tpu.memory_space<vmem>>, vector<32x512xf32>,
    %c0_29 = arith.constant 0 : index
    %c145 = arith.constant 145 : index
    %41 = vector.load %arg0[%c0_29, %c145] : memref<32x768xf32, #tpu.memory_space<vmem>>, vector<32x512xf32>
    %c8 = arith.constant 8 : index
    %c0_30 = arith.constant 0 : index
    %42 = vector.load %arg1[%c8, %c0_30] : memref<9x512xf32, #tpu.memory_space<vmem>>, vector<1x512xf32>
    %43 = vector.broadcast %42 : vector<1x512xf32> to vector<32x512xf32>
    %44 = arith.mulf %41, %43 : vector<32x512xf32>
    %c256 = arith.constant 256 : index
    %c0_31 = arith.constant 0 : index
    %45 = vector.load %arg10[%c256, %c0_31] : memref<288x512xf32, #tpu.memory_space<vmem>>, vector<32x512xf32>
    tpu.vector_store %arg10[%c256, %c0_31], %44 {strides = array<i32>} : memref<288x512xf32, #tpu.memory_space<vmem>>, vector<32x512xf32>,
    %c0_32 = arith.constant 0 : index
    %c0_33 = arith.constant 0 : index
    %46 = vector.load %arg2[%c0_32, %c0_33] : memref<32x288xf32, #tpu.memory_space<vmem>>, vector<32x288xf32>
    %c0_34 = arith.constant 0 : index
    %c0_35 = arith.constant 0 : index
    %47 = vector.load %arg10[%c0_34, %c0_35] : memref<288x512xf32, #tpu.memory_space<vmem>>, vector<288x512xf32>
    %cst_36 = arith.constant dense<0.000000e+00> : vector<32x512xf32>
    %48 = tpu.matmul %46, %47, %cst_36 {dimension_numbers = #tpu.dot_dimension_numbers<[1], [0], [0], [1], [0, 0, 1, 1], [], []>} : vector<32x288xf32>, vector<288x512xf32>, vector<32x512xf32> -> vector<32x512xf32>
    %cst_37 = arith.constant dense<0.000000e+00> : vector<32xf32>
    %49 = vector.multi_reduction <add>, %48, %cst_37 [1] : vector<32x512xf32> to vector<32xf32>
    %50 = vector.shape_cast %49 : vector<32xf32> to vector<32x1xf32>
    %51 = arith.mulf %48, %48 : vector<32x512xf32>
    %cst_38 = arith.constant dense<0.000000e+00> : vector<32xf32>
    %52 = vector.multi_reduction <add>, %51, %cst_38 [1] : vector<32x512xf32> to vector<32xf32>
    %53 = vector.shape_cast %52 : vector<32xf32> to vector<32x1xf32>
    %cst_39 = arith.constant 0.001953125 : f32
    %54 = vector.broadcast %cst_39 : f32 to vector<32x1xf32>
    %55 = arith.mulf %50, %54 : vector<32x1xf32>
    %cst_40 = arith.constant 0.001953125 : f32
    %56 = vector.broadcast %cst_40 : f32 to vector<32x1xf32>
    %57 = arith.mulf %53, %56 : vector<32x1xf32>
    %58 = arith.mulf %55, %55 : vector<32x1xf32>
    %59 = arith.subf %57, %58 : vector<32x1xf32>
    %c0_41 = arith.constant 0 : index
    %c0_42 = arith.constant 0 : index
    %60 = vector.load %arg3[%c0_41, %c0_42] : memref<32x1xf32, #tpu.memory_space<vmem>>, vector<32x1xf32>
    %cst_43 = arith.constant 9.99999974E-6 : f32
    %61 = vector.broadcast %cst_43 : f32 to vector<32x1xf32>
    %62 = arith.addf %59, %61 : vector<32x1xf32>
    %63 = math.rsqrt %62 : vector<32x1xf32>
    %64 = arith.mulf %60, %63 : vector<32x1xf32>
    %c0_44 = arith.constant 0 : index
    %c0_45 = arith.constant 0 : index
    %65 = vector.load %arg4[%c0_44, %c0_45] : memref<32x1xf32, #tpu.memory_space<vmem>>, vector<32x1xf32>
    %66 = arith.mulf %55, %64 : vector<32x1xf32>
    %67 = arith.subf %65, %66 : vector<32x1xf32>
    %68 = vector.broadcast %64 : vector<32x1xf32> to vector<32x512xf32>
    %69 = arith.mulf %48, %68 : vector<32x512xf32>
    %70 = vector.broadcast %67 : vector<32x1xf32> to vector<32x512xf32>
    %71 = arith.addf %69, %70 : vector<32x512xf32>
    %cst_46 = arith.constant 0.000000e+00 : f32
    %72 = vector.broadcast %cst_46 : f32 to vector<32x512xf32>
    %73 = arith.maximumf %71, %72 : vector<32x512xf32>
    %c0_47 = arith.constant 0 : index
    %c128_48 = arith.constant 128 : index
    %74 = vector.load %arg9[%c0_47, %c128_48] : memref<32x768xf32, #tpu.memory_space<vmem>>, vector<32x512xf32>
    tpu.vector_store %arg9[%c0_47, %c128_48], %73 {strides = array<i32>} : memref<32x768xf32, #tpu.memory_space<vmem>>, vector<32x512xf32>,
    %c0_49 = arith.constant 0 : index
    %c111_50 = arith.constant 111 : index
    %75 = vector.load %arg9[%c0_49, %c111_50] : memref<32x768xf32, #tpu.memory_space<vmem>>, vector<32x512xf32>
    %c0_51 = arith.constant 0 : index
    %c0_52 = arith.constant 0 : index
    %76 = vector.load %arg1[%c0_51, %c0_52] : memref<9x512xf32, #tpu.memory_space<vmem>>, vector<1x512xf32>
    %77 = vector.broadcast %76 : vector<1x512xf32> to vector<32x512xf32>
    %78 = arith.mulf %75, %77 : vector<32x512xf32>
    %c0_53 = arith.constant 0 : index
    %c0_54 = arith.constant 0 : index
    %79 = vector.load %arg10[%c0_53, %c0_54] : memref<288x512xf32, #tpu.memory_space<vmem>>, vector<32x512xf32>
    tpu.vector_store %arg10[%c0_53, %c0_54], %78 {strides = array<i32>} : memref<288x512xf32, #tpu.memory_space<vmem>>, vector<32x512xf32>,
    %c0_55 = arith.constant 0 : index
    %c112_56 = arith.constant 112 : index
    %80 = vector.load %arg9[%c0_55, %c112_56] : memref<32x768xf32, #tpu.memory_space<vmem>>, vector<32x512xf32>
    %c1_57 = arith.constant 1 : index
    %c0_58 = arith.constant 0 : index
    %81 = vector.load %arg1[%c1_57, %c0_58] : memref<9x512xf32, #tpu.memory_space<vmem>>, vector<1x512xf32>
    %82 = vector.broadcast %81 : vector<1x512xf32> to vector<32x512xf32>
    %83 = arith.mulf %80, %82 : vector<32x512xf32>
    %c32_59 = arith.constant 32 : index
    %c0_60 = arith.constant 0 : index
    %84 = vector.load %arg10[%c32_59, %c0_60] : memref<288x512xf32, #tpu.memory_space<vmem>>, vector<32x512xf32>
    tpu.vector_store %arg10[%c32_59, %c0_60], %83 {strides = array<i32>} : memref<288x512xf32, #tpu.memory_space<vmem>>, vector<32x512xf32>,
    %c0_61 = arith.constant 0 : index
    %c113_62 = arith.constant 113 : index
    %85 = vector.load %arg9[%c0_61, %c113_62] : memref<32x768xf32, #tpu.memory_space<vmem>>, vector<32x512xf32>
    %c2_63 = arith.constant 2 : index
    %c0_64 = arith.constant 0 : index
    %86 = vector.load %arg1[%c2_63, %c0_64] : memref<9x512xf32, #tpu.memory_space<vmem>>, vector<1x512xf32>
    %87 = vector.broadcast %86 : vector<1x512xf32> to vector<32x512xf32>
    %88 = arith.mulf %85, %87 : vector<32x512xf32>
    %c64_65 = arith.constant 64 : index
    %c0_66 = arith.constant 0 : index
    %89 = vector.load %arg10[%c64_65, %c0_66] : memref<288x512xf32, #tpu.memory_space<vmem>>, vector<32x512xf32>
    tpu.vector_store %arg10[%c64_65, %c0_66], %88 {strides = array<i32>} : memref<288x512xf32, #tpu.memory_space<vmem>>, vector<32x512xf32>,
    %c0_67 = arith.constant 0 : index
    %c127_68 = arith.constant 127 : index
    %90 = vector.load %arg9[%c0_67, %c127_68] : memref<32x768xf32, #tpu.memory_space<vmem>>, vector<32x512xf32>
    %c3_69 = arith.constant 3 : index
    %c0_70 = arith.constant 0 : index
    %91 = vector.load %arg1[%c3_69, %c0_70] : memref<9x512xf32, #tpu.memory_space<vmem>>, vector<1x512xf32>
    %92 = vector.broadcast %91 : vector<1x512xf32> to vector<32x512xf32>
    %93 = arith.mulf %90, %92 : vector<32x512xf32>
    %c96_71 = arith.constant 96 : index
    %c0_72 = arith.constant 0 : index
    %94 = vector.load %arg10[%c96_71, %c0_72] : memref<288x512xf32, #tpu.memory_space<vmem>>, vector<32x512xf32>
    tpu.vector_store %arg10[%c96_71, %c0_72], %93 {strides = array<i32>} : memref<288x512xf32, #tpu.memory_space<vmem>>, vector<32x512xf32>,
    %c0_73 = arith.constant 0 : index
    %c128_74 = arith.constant 128 : index
    %95 = vector.load %arg9[%c0_73, %c128_74] : memref<32x768xf32, #tpu.memory_space<vmem>>, vector<32x512xf32>
    %c128_75 = arith.constant 128 : index
    %c0_76 = arith.constant 0 : index
    %96 = vector.load %arg10[%c128_75, %c0_76] : memref<288x512xf32, #tpu.memory_space<vmem>>, vector<32x512xf32>
    tpu.vector_store %arg10[%c128_75, %c0_76], %95 {strides = array<i32>} : memref<288x512xf32, #tpu.memory_space<vmem>>, vector<32x512xf32>,
    %c0_77 = arith.constant 0 : index
    %c129_78 = arith.constant 129 : index
    %97 = vector.load %arg9[%c0_77, %c129_78] : memref<32x768xf32, #tpu.memory_space<vmem>>, vector<32x512xf32>
    %c5_79 = arith.constant 5 : index
    %c0_80 = arith.constant 0 : index
    %98 = vector.load %arg1[%c5_79, %c0_80] : memref<9x512xf32, #tpu.memory_space<vmem>>, vector<1x512xf32>
    %99 = vector.broadcast %98 : vector<1x512xf32> to vector<32x512xf32>
    %100 = arith.mulf %97, %99 : vector<32x512xf32>
    %c160_81 = arith.constant 160 : index
    %c0_82 = arith.constant 0 : index
    %101 = vector.load %arg10[%c160_81, %c0_82] : memref<288x512xf32, #tpu.memory_space<vmem>>, vector<32x512xf32>
    tpu.vector_store %arg10[%c160_81, %c0_82], %100 {strides = array<i32>} : memref<288x512xf32, #tpu.memory_space<vmem>>, vector<32x512xf32>,
    %c0_83 = arith.constant 0 : index
    %c143_84 = arith.constant 143 : index
    %102 = vector.load %arg9[%c0_83, %c143_84] : memref<32x768xf32, #tpu.memory_space<vmem>>, vector<32x512xf32>
    %c6_85 = arith.constant 6 : index
    %c0_86 = arith.constant 0 : index
    %103 = vector.load %arg1[%c6_85, %c0_86] : memref<9x512xf32, #tpu.memory_space<vmem>>, vector<1x512xf32>
    %104 = vector.broadcast %103 : vector<1x512xf32> to vector<32x512xf32>
    %105 = arith.mulf %102, %104 : vector<32x512xf32>
    %c192_87 = arith.constant 192 : index
    %c0_88 = arith.constant 0 : index
    %106 = vector.load %arg10[%c192_87, %c0_88] : memref<288x512xf32, #tpu.memory_space<vmem>>, vector<32x512xf32>
    tpu.vector_store %arg10[%c192_87, %c0_88], %105 {strides = array<i32>} : memref<288x512xf32, #tpu.memory_space<vmem>>, vector<32x512xf32>,
    %c0_89 = arith.constant 0 : index
    %c144_90 = arith.constant 144 : index
    %107 = vector.load %arg9[%c0_89, %c144_90] : memref<32x768xf32, #tpu.memory_space<vmem>>, vector<32x512xf32>
    %c7_91 = arith.constant 7 : index
    %c0_92 = arith.constant 0 : index
    %108 = vector.load %arg1[%c7_91, %c0_92] : memref<9x512xf32, #tpu.memory_space<vmem>>, vector<1x512xf32>
    %109 = vector.broadcast %108 : vector<1x512xf32> to vector<32x512xf32>
    %110 = arith.mulf %107, %109 : vector<32x512xf32>
    %c224_93 = arith.constant 224 : index
    %c0_94 = arith.constant 0 : index
    %111 = vector.load %arg10[%c224_93, %c0_94] : memref<288x512xf32, #tpu.memory_space<vmem>>, vector<32x512xf32>
    tpu.vector_store %arg10[%c224_93, %c0_94], %110 {strides = array<i32>} : memref<288x512xf32, #tpu.memory_space<vmem>>, vector<32x512xf32>,
    %c0_95 = arith.constant 0 : index
    %c145_96 = arith.constant 145 : index
    %112 = vector.load %arg9[%c0_95, %c145_96] : memref<32x768xf32, #tpu.memory_space<vmem>>, vector<32x512xf32>
    %c8_97 = arith.constant 8 : index
    %c0_98 = arith.constant 0 : index
    %113 = vector.load %arg1[%c8_97, %c0_98] : memref<9x512xf32, #tpu.memory_space<vmem>>, vector<1x512xf32>
    %114 = vector.broadcast %113 : vector<1x512xf32> to vector<32x512xf32>
    %115 = arith.mulf %112, %114 : vector<32x512xf32>
    %c256_99 = arith.constant 256 : index
    %c0_100 = arith.constant 0 : index
    %116 = vector.load %arg10[%c256_99, %c0_100] : memref<288x512xf32, #tpu.memory_space<vmem>>, vector<32x512xf32>
    tpu.vector_store %arg10[%c256_99, %c0_100], %115 {strides = array<i32>} : memref<288x512xf32, #tpu.memory_space<vmem>>, vector<32x512xf32>,
    %c0_101 = arith.constant 0 : index
    %c0_102 = arith.constant 0 : index
    %117 = vector.load %arg5[%c0_101, %c0_102] : memref<32x288xf32, #tpu.memory_space<vmem>>, vector<32x288xf32>
    %c0_103 = arith.constant 0 : index
    %c0_104 = arith.constant 0 : index
    %118 = vector.load %arg10[%c0_103, %c0_104] : memref<288x512xf32, #tpu.memory_space<vmem>>, vector<288x512xf32>
    %cst_105 = arith.constant dense<0.000000e+00> : vector<32x512xf32>
    %119 = tpu.matmul %117, %118, %cst_105 {dimension_numbers = #tpu.dot_dimension_numbers<[1], [0], [0], [1], [0, 0, 1, 1], [], []>} : vector<32x288xf32>, vector<288x512xf32>, vector<32x512xf32> -> vector<32x512xf32>
    %cst_106 = arith.constant dense<0.000000e+00> : vector<32xf32>
    %120 = vector.multi_reduction <add>, %119, %cst_106 [1] : vector<32x512xf32> to vector<32xf32>
    %121 = vector.shape_cast %120 : vector<32xf32> to vector<32x1xf32>
    %122 = arith.mulf %119, %119 : vector<32x512xf32>
    %cst_107 = arith.constant dense<0.000000e+00> : vector<32xf32>
    %123 = vector.multi_reduction <add>, %122, %cst_107 [1] : vector<32x512xf32> to vector<32xf32>
    %124 = vector.shape_cast %123 : vector<32xf32> to vector<32x1xf32>
    %cst_108 = arith.constant 0.001953125 : f32
    %125 = vector.broadcast %cst_108 : f32 to vector<32x1xf32>
    %126 = arith.mulf %121, %125 : vector<32x1xf32>
    %cst_109 = arith.constant 0.001953125 : f32
    %127 = vector.broadcast %cst_109 : f32 to vector<32x1xf32>
    %128 = arith.mulf %124, %127 : vector<32x1xf32>
    %129 = arith.mulf %126, %126 : vector<32x1xf32>
    %130 = arith.subf %128, %129 : vector<32x1xf32>
    %c0_110 = arith.constant 0 : index
    %c0_111 = arith.constant 0 : index
    %131 = vector.load %arg6[%c0_110, %c0_111] : memref<32x1xf32, #tpu.memory_space<vmem>>, vector<32x1xf32>
    %cst_112 = arith.constant 9.99999974E-6 : f32
    %132 = vector.broadcast %cst_112 : f32 to vector<32x1xf32>
    %133 = arith.addf %130, %132 : vector<32x1xf32>
    %134 = math.rsqrt %133 : vector<32x1xf32>
    %135 = arith.mulf %131, %134 : vector<32x1xf32>
    %c0_113 = arith.constant 0 : index
    %c0_114 = arith.constant 0 : index
    %136 = vector.load %arg7[%c0_113, %c0_114] : memref<32x1xf32, #tpu.memory_space<vmem>>, vector<32x1xf32>
    %137 = arith.mulf %126, %135 : vector<32x1xf32>
    %138 = arith.subf %136, %137 : vector<32x1xf32>
    %139 = vector.broadcast %135 : vector<32x1xf32> to vector<32x512xf32>
    %140 = arith.mulf %119, %139 : vector<32x512xf32>
    %141 = vector.broadcast %138 : vector<32x1xf32> to vector<32x512xf32>
    %142 = arith.addf %140, %141 : vector<32x512xf32>
    %cst_115 = arith.constant 0.000000e+00 : f32
    %143 = vector.broadcast %cst_115 : f32 to vector<32x512xf32>
    %144 = arith.maximumf %142, %143 : vector<32x512xf32>
    %c0_116 = arith.constant 0 : index
    %c0_117 = arith.constant 0 : index
    %145 = vector.load %arg8[%c0_116, %c0_117] : memref<32x512xf32, #tpu.memory_space<vmem>>, vector<32x512xf32>
    tpu.vector_store %arg8[%c0_116, %c0_117], %144 {strides = array<i32>} : memref<32x512xf32, #tpu.memory_space<vmem>>, vector<32x512xf32>,
    return
  }
}

</mosaic_0001>

<llo_original>
// kernel: net_forward.1
$region0: #{net_forward.1}
  #allocation0 [shape = 'u32[]', space=smem, size = 0x4, offset = 0x4, fixed_abs, tag = 'smem constant byte address 0x4 - core index']
  #allocation1 [shape = 'u32[144,128]{1,0:T(1,128)}', space=vmem, size = 0x12000, scoped, tag = 'internal scratch']
  #allocation2 [shape = 'f32[32,768]{1,0:T(8,128)}', space=vmem, size = 0x18000, scoped, tag = 'scratch operand']
  #allocation3 [shape = 'f32[288,512]{1,0:T(8,128)}', space=vmem, size = 0x90000, scoped, tag = 'scratch operand']
  %s0 = inlined_call_operand.vmem [shape: f32[32,768], index: 0, kind: input, shape index: {}]
  %s1 = inlined_call_operand.vmem [shape: f32[9,512], index: 1, kind: input, shape index: {}]
  %s2 = inlined_call_operand.vmem [shape: f32[32,288], index: 2, kind: input, shape index: {}]
  %s3 = inlined_call_operand.vmem [shape: f32[32,1], index: 3, kind: input, shape index: {}]
  %s4 = inlined_call_operand.vmem [shape: f32[32,1], index: 4, kind: input, shape index: {}]
  %s5 = inlined_call_operand.vmem [shape: f32[32,288], index: 5, kind: input, shape index: {}]
  %s6 = inlined_call_operand.vmem [shape: f32[32,1], index: 6, kind: input, shape index: {}]
  %s7 = inlined_call_operand.vmem [shape: f32[32,1], index: 7, kind: input, shape index: {}]
  %s8 = inlined_call_operand.vmem [shape: f32[32,512], index: 8, kind: output, shape index: {}]
  %s9 = sld [smem:[#allocation0]]
  $region42: #{net_forward.1} parent=0
    _
  %s11 = ssub.s32 1, %s9
  %s12 = scalar_select 0, %s11, %s9
  // Predicated region
  $region2: #{net_forward.1} parent=0 // pred_check
    _
  $region3: #{net_forward.1} parent=0 // pred_check_branch
    %14 = sbr.rel (0) target = $region5
  $region4: #{net_forward.1} parent=0 // pred_region
    _
  $region5: #{net_forward.1} parent=0 // pred_fallthru
    _
  // Predicated region
  $region6: #{net_forward.1} parent=0 // pred_check
    _
  $region7: #{net_forward.1} parent=0 // pred_check_branch
    %16 = sbr.rel (0) target = $region9
  $region8: #{net_forward.1} parent=0 // pred_region
    _
  $region9: #{net_forward.1} parent=0 // pred_fallthru
    _
  // Predicated region
  $region10: #{net_forward.1} parent=0 // pred_check
    _
  $region11: #{net_forward.1} parent=0 // pred_check_branch
    %18 = sbr.rel (0) target = $region13
  $region12: #{net_forward.1} parent=0 // pred_region
    _
  $region13: #{net_forward.1} parent=0 // pred_fallthru
    _
  // Predicated region
  $region14: #{net_forward.1} parent=0 // pred_check
    _
  $region15: #{net_forward.1} parent=0 // pred_check_branch
    %20 = sbr.rel (0) target = $region17
  $region16: #{net_forward.1} parent=0 // pred_region
    _
  $region17: #{net_forward.1} parent=0 // pred_fallthru
    _
  // Predicated region
  $region18: #{net_forward.1} parent=0 // pred_check
    _
  $region19: #{net_forward.1} parent=0 // pred_check_branch
    %22 = sbr.rel (0) target = $region21
  $region20: #{net_forward.1} parent=0 // pred_region
    _
  $region21: #{net_forward.1} parent=0 // pred_fallthru
    _
  // Predicated region
  $region22: #{net_forward.1} parent=0 // pred_check
    _
  $region23: #{net_forward.1} parent=0 // pred_check_branch
    %24 = sbr.rel (0) target = $region25
  $region24: #{net_forward.1} parent=0 // pred_region
    _
  $region25: #{net_forward.1} parent=0 // pred_fallthru
    _
  // Predicated region
  $region26: #{net_forward.1} parent=0 // pred_check
    _
  $region27: #{net_forward.1} parent=0 // pred_check_branch
    %26 = sbr.rel (0) target = $region29
  $region28: #{net_forward.1} parent=0 // pred_region
    _
  $region29: #{net_forward.1} parent=0 // pred_fallthru
    _
  // Predicated region
  $region30: #{net_forward.1} parent=0 // pred_check
    _
  $region31: #{net_forward.1} parent=0 // pred_check_branch
    %28 = sbr.rel (0) target = $region33
  $region32: #{net_forward.1} parent=0 // pred_region
    _
  $region33: #{net_forward.1} parent=0 // pred_fallthru
    _
  %29 = vst [vmem:[#allocation2] sm:$0xff] 0.0
  %30 = vst [vmem:[#allocation2 + $0x30] sm:$0xff] 0.0
  %31 = vst [vmem:[#allocation2 + $0x60] sm:$0xff] 0.0
  %32 = vst [vmem:[#allocation2 + $0x90] sm:$0xff] 0.0
  %33 = vst [vmem:[#allocation2 + $0x28] sm:$0xff] 0.0
  %34 = vst [vmem:[#allocation2 + $0x58] sm:$0xff] 0.0
  %35 = vst [vmem:[#allocation2 + $0x88] sm:$0xff] 0.0
  %36 = vst [vmem:[#allocation2 + $0xb8] sm:$0xff] 0.0
  %v37 = vld [vmem:[%s0] sm:$0xff]
  %v38 = vld [vmem:[%s0 + $0x8] sm:$0xff]
  %v39 = vld [vmem:[%s0 + $0x10] sm:$0xff]
  %v40 = vld [vmem:[%s0 + $0x18] sm:$0xff]
  %v41 = vld [vmem:[%s0 + $0x20] sm:$0xff]
  %v42 = vld [vmem:[%s0 + $0x30] sm:$0xff]
  %v43 = vld [vmem:[%s0 + $0x38] sm:$0xff]
  %v44 = vld [vmem:[%s0 + $0x40] sm:$0xff]
  %v45 = vld [vmem:[%s0 + $0x48] sm:$0xff]
  %v46 = vld [vmem:[%s0 + $0x50] sm:$0xff]
  %v47 = vld [vmem:[%s0 + $0x60] sm:$0xff]
  %v48 = vld [vmem:[%s0 + $0x68] sm:$0xff]
  %v49 = vld [vmem:[%s0 + $0x70] sm:$0xff]
  %v50 = vld [vmem:[%s0 + $0x78] sm:$0xff]
  %v51 = vld [vmem:[%s0 + $0x80] sm:$0xff]
  %v52 = vld [vmem:[%s0 + $0x90] sm:$0xff]
  %v53 = vld [vmem:[%s0 + $0x98] sm:$0xff]
  %v54 = vld [vmem:[%s0 + $0xa0] sm:$0xff]
  %v55 = vld [vmem:[%s0 + $0xa8] sm:$0xff]
  %v56 = vld [vmem:[%s0 + $0xb0] sm:$0xff]
  %v57 = vld [vmem:[%s1] ss:$8 sm:$0xf]
  %v59 = vlaneseq
  %v60 = vshrl.u32 %v59, 7
  %v61 = vsub.s32 0, %v60
  %v62 = vrot.slane %v57, %v61
  %v63 = vlaneseq
  %v64 = vshrl.u32 %v63, 7
  %v65 = vsub.s32 1, %v64
  %v66 = vrot.slane %v57, %v65
  %v67 = vlaneseq
  %v68 = vshrl.u32 %v67, 7
  %v69 = vsub.s32 2, %v68
  %v70 = vrot.slane %v57, %v69
  %v71 = vlaneseq
  %v72 = vshrl.u32 %v71, 7
  %v73 = vsub.s32 3, %v72
  %v74 = vrot.slane %v57, %v73
  %75 = vrot.lane.b32.xlu0 %v62, 111
  %v76 = vpop.permute.xlu0 %75
  %77 = vrot.lane.b32.xlu0 %v66, 111
  %v78 = vpop.permute.xlu0 %77
  %79 = vrot.lane.b32.xlu0 %v70, 111
  %v80 = vpop.permute.xlu0 %79
  %81 = vrot.lane.b32.xlu0 %v74, 111
  %v82 = vpop.permute.xlu0 %81
  %vm83 = vcmask 908288
  %v84 = vsel %vm83, %v76, %v78
  %v85 = vsel %vm83, %v78, %v80
  %v86 = vsel %vm83, %v80, %v82
  %v92 = vmul.f32 %v37, %v76
  %v93 = vmul.f32 %v38, %v84
  %v94 = vmul.f32 %v39, %v85
  %v95 = vmul.f32 %v40, %v86
  %v96 = vmul.f32 %v41, %v82
  %v97 = vmul.f32 %v42, %v76
  %v98 = vmul.f32 %v43, %v84
  %v99 = vmul.f32 %v44, %v85
  %v100 = vmul.f32 %v45, %v86
  %v101 = vmul.f32 %v46, %v82
  %v102 = vmul.f32 %v47, %v76
  %v103 = vmul.f32 %v48, %v84
  %v104 = vmul.f32 %v49, %v85
  %v105 = vmul.f32 %v50, %v86
  %v106 = vmul.f32 %v51, %v82
  %v107 = vmul.f32 %v52, %v76
  %v108 = vmul.f32 %v53, %v84
  %v109 = vmul.f32 %v54, %v85
  %v110 = vmul.f32 %v55, %v86
  %v111 = vmul.f32 %v56, %v82
  %132 = vrot.lane.b32.xlu0 %v92, 17
  %v133 = vpop.permute.xlu0 %132
  %134 = vrot.lane.b32.xlu0 %v93, 17
  %v135 = vpop.permute.xlu0 %134
  %136 = vrot.lane.b32.xlu0 %v94, 17
  %v137 = vpop.permute.xlu0 %136
  %138 = vrot.lane.b32.xlu0 %v95, 17
  %v139 = vpop.permute.xlu0 %138
  %140 = vrot.lane.b32.xlu0 %v96, 17
  %v141 = vpop.permute.xlu0 %140
  %142 = vrot.lane.b32.xlu0 %v97, 17
  %v143 = vpop.permute.xlu0 %142
  %144 = vrot.lane.b32.xlu0 %v98, 17
  %v145 = vpop.permute.xlu0 %144
  %146 = vrot.lane.b32.xlu0 %v99, 17
  %v147 = vpop.permute.xlu0 %146
  %148 = vrot.lane.b32.xlu0 %v100, 17
  %v149 = vpop.permute.xlu0 %148
  %150 = vrot.lane.b32.xlu0 %v101, 17
  %v151 = vpop.permute.xlu0 %150
  %152 = vrot.lane.b32.xlu0 %v102, 17
  %v153 = vpop.permute.xlu0 %152
  %154 = vrot.lane.b32.xlu0 %v103, 17
  %v155 = vpop.permute.xlu0 %154
  %156 = vrot.lane.b32.xlu0 %v104, 17
  %v157 = vpop.permute.xlu0 %156
  %158 = vrot.lane.b32.xlu0 %v105, 17
  %v159 = vpop.permute.xlu0 %158
  %160 = vrot.lane.b32.xlu0 %v106, 17
  %v161 = vpop.permute.xlu0 %160
  %162 = vrot.lane.b32.xlu0 %v107, 17
  %v163 = vpop.permute.xlu0 %162
  %164 = vrot.lane.b32.xlu0 %v108, 17
  %v165 = vpop.permute.xlu0 %164
  %166 = vrot.lane.b32.xlu0 %v109, 17
  %v167 = vpop.permute.xlu0 %166
  %168 = vrot.lane.b32.xlu0 %v110, 17
  %v169 = vpop.permute.xlu0 %168
  %170 = vrot.lane.b32.xlu0 %v111, 17
  %v171 = vpop.permute.xlu0 %170
  %vm172 = vcmask 138240
  %v173 = vsel %vm172, %v133, %v135
  %v174 = vsel %vm172, %v135, %v137
  %v175 = vsel %vm172, %v137, %v139
  %v176 = vsel %vm172, %v139, %v141
  %v177 = vsel %vm172, %v143, %v145
  %v178 = vsel %vm172, %v145, %v147
  %v179 = vsel %vm172, %v147, %v149
  %v180 = vsel %vm172, %v149, %v151
  %v181 = vsel %vm172, %v153, %v155
  %v182 = vsel %vm172, %v155, %v157
  %v183 = vsel %vm172, %v157, %v159
  %v184 = vsel %vm172, %v159, %v161
  %v185 = vsel %vm172, %v163, %v165
  %v186 = vsel %vm172, %v165, %v167
  %v187 = vsel %vm172, %v167, %v169
  %v188 = vsel %vm172, %v169, %v171
  %205 = vst [vmem:[#allocation3] sm:$0xff] %v173
  %206 = vst [vmem:[#allocation3 + $0x8] sm:$0xff] %v174
  %207 = vst [vmem:[#allocation3 + $0x10] sm:$0xff] %v175
  %208 = vst [vmem:[#allocation3 + $0x18] sm:$0xff] %v176
  %209 = vst [vmem:[#allocation3 + $0x20] sm:$0xff] %v177
  %210 = vst [vmem:[#allocation3 + $0x28] sm:$0xff] %v178
  %211 = vst [vmem:[#allocation3 + $0x30] sm:$0xff] %v179
  %212 = vst [vmem:[#allocation3 + $0x38] sm:$0xff] %v180
  %213 = vst [vmem:[#allocation3 + $0x40] sm:$0xff] %v181
  %214 = vst [vmem:[#allocation3 + $0x48] sm:$0xff] %v182
  %215 = vst [vmem:[#allocation3 + $0x50] sm:$0xff] %v183
  %216 = vst [vmem:[#allocation3 + $0x58] sm:$0xff] %v184
  %217 = vst [vmem:[#allocation3 + $0x60] sm:$0xff] %v185
  %218 = vst [vmem:[#allocation3 + $0x68] sm:$0xff] %v186
  %219 = vst [vmem:[#allocation3 + $0x70] sm:$0xff] %v187
  %220 = vst [vmem:[#allocation3 + $0x78] sm:$0xff] %v188
  %v221 = vld [vmem:[%s0] sm:$0xff]
  %v222 = vld [vmem:[%s0 + $0x8] sm:$0xff]
  %v223 = vld [vmem:[%s0 + $0x10] sm:$0xff]
  %v224 = vld [vmem:[%s0 + $0x18] sm:$0xff]
  %v225 = vld [vmem:[%s0 + $0x20] sm:$0xff]
  %v226 = vld [vmem:[%s0 + $0x30] sm:$0xff]
  %v227 = vld [vmem:[%s0 + $0x38] sm:$0xff]
  %v228 = vld [vmem:[%s0 + $0x40] sm:$0xff]
  %v229 = vld [vmem:[%s0 + $0x48] sm:$0xff]
  %v230 = vld [vmem:[%s0 + $0x50] sm:$0xff]
  %v231 = vld [vmem:[%s0 + $0x60] sm:$0xff]
  %v232 = vld [vmem:[%s0 + $0x68] sm:$0xff]
  %v233 = vld [vmem:[%s0 + $0x70] sm:$0xff]
  %v234 = vld [vmem:[%s0 + $0x78] sm:$0xff]
  %v235 = vld [vmem:[%s0 + $0x80] sm:$0xff]
  %v236 = vld [vmem:[%s0 + $0x90] sm:$0xff]
  %v237 = vld [vmem:[%s0 + $0x98] sm:$0xff]
  %v238 = vld [vmem:[%s0 + $0xa0] sm:$0xff]
  %v239 = vld [vmem:[%s0 + $0xa8] sm:$0xff]
  %v240 = vld [vmem:[%s0 + $0xb0] sm:$0xff]
  %s241 = scalar_lea.vmem %s1, 1
  %v242 = vld [vmem:[%s241] ss:$8 sm:$0xf]
  %v244 = vlaneseq
  %v245 = vshrl.u32 %v244, 7
  %v246 = vsub.s32 0, %v245
  %v247 = vrot.slane %v242, %v246
  %v248 = vlaneseq
  %v249 = vshrl.u32 %v248, 7
  %v250 = vsub.s32 1, %v249
  %v251 = vrot.slane %v242, %v250
  %v252 = vlaneseq
  %v253 = vshrl.u32 %v252, 7
  %v254 = vsub.s32 2, %v253
  %v255 = vrot.slane %v242, %v254
  %v256 = vlaneseq
  %v257 = vshrl.u32 %v256, 7
  %v258 = vsub.s32 3, %v257
  %v259 = vrot.slane %v242, %v258
  %260 = vrot.lane.b32.xlu0 %v247, 112
  %v261 = vpop.permute.xlu0 %260
  %262 = vrot.lane.b32.xlu0 %v251, 112
  %v263 = vpop.permute.xlu0 %262
  %264 = vrot.lane.b32.xlu0 %v255, 112
  %v265 = vpop.permute.xlu0 %264
  %266 = vrot.lane.b32.xlu0 %v259, 112
  %v267 = vpop.permute.xlu0 %266
  %vm268 = vcmask 916480
  %v269 = vsel %vm268, %v261, %v263
  %v270 = vsel %vm268, %v263, %v265
  %v271 = vsel %vm268, %v265, %v267
  %v277 = vmul.f32 %v221, %v261
  %v278 = vmul.f32 %v222, %v269
  %v279 = vmul.f32 %v223, %v270
  %v280 = vmul.f32 %v224, %v271
  %v281 = vmul.f32 %v225, %v267
  %v282 = vmul.f32 %v226, %v261
  %v283 = vmul.f32 %v227, %v269
  %v284 = vmul.f32 %v228, %v270
  %v285 = vmul.f32 %v229, %v271
  %v286 = vmul.f32 %v230, %v267
  %v287 = vmul.f32 %v231, %v261
  %v288 = vmul.f32 %v232, %v269
  %v289 = vmul.f32 %v233, %v270
  %v290 = vmul.f32 %v234, %v271
  %v291 = vmul.f32 %v235, %v267
  %v292 = vmul.f32 %v236, %v261
  %v293 = vmul.f32 %v237, %v269
  %v294 = vmul.f32 %v238, %v270
  %v295 = vmul.f32 %v239, %v271
  %v296 = vmul.f32 %v240, %v267
  %317 = vrot.lane.b32.xlu0 %v277, 16
  %v318 = vpop.permute.xlu0 %317
  %319 = vrot.lane.b32.xlu0 %v278, 16
  %v320 = vpop.permute.xlu0 %319
  %321 = vrot.lane.b32.xlu0 %v279, 16
  %v322 = vpop.permute.xlu0 %321
  %323 = vrot.lane.b32.xlu0 %v280, 16
  %v324 = vpop.permute.xlu0 %323
  %325 = vrot.lane.b32.xlu0 %v281, 16
  %v326 = vpop.permute.xlu0 %325
  %327 = vrot.lane.b32.xlu0 %v282, 16
  %v328 = vpop.permute.xlu0 %327
  %329 = vrot.lane.b32.xlu0 %v283, 16
  %v330 = vpop.permute.xlu0 %329
  %331 = vrot.lane.b32.xlu0 %v284, 16
  %v332 = vpop.permute.xlu0 %331
  %333 = vrot.lane.b32.xlu0 %v285, 16
  %v334 = vpop.permute.xlu0 %333
  %335 = vrot.lane.b32.xlu0 %v286, 16
  %v336 = vpop.permute.xlu0 %335
  %337 = vrot.lane.b32.xlu0 %v287, 16
  %v338 = vpop.permute.xlu0 %337
  %339 = vrot.lane.b32.xlu0 %v288, 16
  %v340 = vpop.permute.xlu0 %339
  %341 = vrot.lane.b32.xlu0 %v289, 16
  %v342 = vpop.permute.xlu0 %341
  %343 = vrot.lane.b32.xlu0 %v290, 16
  %v344 = vpop.permute.xlu0 %343
  %345 = vrot.lane.b32.xlu0 %v291, 16
  %v346 = vpop.permute.xlu0 %345
  %347 = vrot.lane.b32.xlu0 %v292, 16
  %v348 = vpop.permute.xlu0 %347
  %349 = vrot.lane.b32.xlu0 %v293, 16
  %v350 = vpop.permute.xlu0 %349
  %351 = vrot.lane.b32.xlu0 %v294, 16
  %v352 = vpop.permute.xlu0 %351
  %353 = vrot.lane.b32.xlu0 %v295, 16
  %v354 = vpop.permute.xlu0 %353
  %355 = vrot.lane.b32.xlu0 %v296, 16
  %v356 = vpop.permute.xlu0 %355
  %vm357 = vcmask 130048
  %v358 = vsel %vm357, %v318, %v320
  %v359 = vsel %vm357, %v320, %v322
  %v360 = vsel %vm357, %v322, %v324
  %v361 = vsel %vm357, %v324, %v326
  %v362 = vsel %vm357, %v328, %v330
  %v363 = vsel %vm357, %v330, %v332
  %v364 = vsel %vm357, %v332, %v334
  %v365 = vsel %vm357, %v334, %v336
  %v366 = vsel %vm357, %v338, %v340
  %v367 = vsel %vm357, %v340, %v342
  %v368 = vsel %vm357, %v342, %v344
  %v369 = vsel %vm357, %v344, %v346
  %v370 = vsel %vm357, %v348, %v350
  %v371 = vsel %vm357, %v350, %v352
  %v372 = vsel %vm357, %v352, %v354
  %v373 = vsel %vm357, %v354, %v356
  %390 = vst [vmem:[#allocation3 + $0x80] sm:$0xff] %v358
  %391 = vst [vmem:[#allocation3 + $0x88] sm:$0xff] %v359
  %392 = vst [vmem:[#allocation3 + $0x90] sm:$0xff] %v360
  %393 = vst [vmem:[#allocation3 + $0x98] sm:$0xff] %v361
  %394 = vst [vmem:[#allocation3 + $0xa0] sm:$0xff] %v362
  %395 = vst [vmem:[#allocation3 + $0xa8] sm:$0xff] %v363
  %396 = vst [vmem:[#allocation3 + $0xb0] sm:$0xff] %v364
  %397 = vst [vmem:[#allocation3 + $0xb8] sm:$0xff] %v365
  %398 = vst [vmem:[#allocation3 + $0xc0] sm:$0xff] %v366
  %399 = vst [vmem:[#allocation3 + $0xc8] sm:$0xff] %v367
  %400 = vst [vmem:[#allocation3 + $0xd0] sm:$0xff] %v368
  %401 = vst [vmem:[#allocation3 + $0xd8] sm:$0xff] %v369
  %402 = vst [vmem:[#allocation3 + $0xe0] sm:$0xff] %v370
  %403 = vst [vmem:[#allocation3 + $0xe8] sm:$0xff] %v371
  %404 = vst [vmem:[#allocation3 + $0xf0] sm:$0xff] %v372
  %405 = vst [vmem:[#allocation3 + $0xf8] sm:$0xff] %v373
  %v406 = vld [vmem:[%s0] sm:$0xff]
  %v407 = vld [vmem:[%s0 + $0x8] sm:$0xff]
  %v408 = vld [vmem:[%s0 + $0x10] sm:$0xff]
  %v409 = vld [vmem:[%s0 + $0x18] sm:$0xff]
  %v410 = vld [vmem:[%s0 + $0x20] sm:$0xff]
  %v411 = vld [vmem:[%s0 + $0x30] sm:$0xff]
  %v412 = vld [vmem:[%s0 + $0x38] sm:$0xff]
  %v413 = vld [vmem:[%s0 + $0x40] sm:$0xff]
  %v414 = vld [vmem:[%s0 + $0x48] sm:$0xff]
  %v415 = vld [vmem:[%s0 + $0x50] sm:$0xff]
  %v416 = vld [vmem:[%s0 + $0x60] sm:$0xff]
  %v417 = vld [vmem:[%s0 + $0x68] sm:$0xff]
  %v418 = vld [vmem:[%s0 + $0x70] sm:$0xff]
  %v419 = vld [vmem:[%s0 + $0x78] sm:$0xff]
  %v420 = vld [vmem:[%s0 + $0x80] sm:$0xff]
  %v421 = vld [vmem:[%s0 + $0x90] sm:$0xff]
  %v422 = vld [vmem:[%s0 + $0x98] sm:$0xff]
  %v423 = vld [vmem:[%s0 + $0xa0] sm:$0xff]
  %v424 = vld [vmem:[%s0 + $0xa8] sm:$0xff]
  %v425 = vld [vmem:[%s0 + $0xb0] sm:$0xff]
  %s426 = scalar_lea.vmem %s1, 2
  %v427 = vld [vmem:[%s426] ss:$8 sm:$0xf]
  %v429 = vlaneseq
  %v430 = vshrl.u32 %v429, 7
  %v431 = vsub.s32 0, %v430
  %v432 = vrot.slane %v427, %v431
  %v433 = vlaneseq
  %v434 = vshrl.u32 %v433, 7
  %v435 = vsub.s32 1, %v434
  %v436 = vrot.slane %v427, %v435
  %v437 = vlaneseq
  %v438 = vshrl.u32 %v437, 7
  %v439 = vsub.s32 2, %v438
  %v440 = vrot.slane %v427, %v439
  %v441 = vlaneseq
  %v442 = vshrl.u32 %v441, 7
  %v443 = vsub.s32 3, %v442
  %v444 = vrot.slane %v427, %v443
  %445 = vrot.lane.b32.xlu0 %v432, 113
  %v446 = vpop.permute.xlu0 %445
  %447 = vrot.lane.b32.xlu0 %v436, 113
  %v448 = vpop.permute.xlu0 %447
  %449 = vrot.lane.b32.xlu0 %v440, 113
  %v450 = vpop.permute.xlu0 %449
  %451 = vrot.lane.b32.xlu0 %v444, 113
  %v452 = vpop.permute.xlu0 %451
  %vm453 = vcmask 924672
  %v454 = vsel %vm453, %v446, %v448
  %v455 = vsel %vm453, %v448, %v450
  %v456 = vsel %vm453, %v450, %v452
  %v462 = vmul.f32 %v406, %v446
  %v463 = vmul.f32 %v407, %v454
  %v464 = vmul.f32 %v408, %v455
  %v465 = vmul.f32 %v409, %v456
  %v466 = vmul.f32 %v410, %v452
  %v467 = vmul.f32 %v411, %v446
  %v468 = vmul.f32 %v412, %v454
  %v469 = vmul.f32 %v413, %v455
  %v470 = vmul.f32 %v414, %v456
  %v471 = vmul.f32 %v415, %v452
  %v472 = vmul.f32 %v416, %v446
  %v473 = vmul.f32 %v417, %v454
  %v474 = vmul.f32 %v418, %v455
  %v475 = vmul.f32 %v419, %v456
  %v476 = vmul.f32 %v420, %v452
  %v477 = vmul.f32 %v421, %v446
  %v478 = vmul.f32 %v422, %v454
  %v479 = vmul.f32 %v423, %v455
  %v480 = vmul.f32 %v424, %v456
  %v481 = vmul.f32 %v425, %v452
  %502 = vrot.lane.b32.xlu0 %v462, 15
  %v503 = vpop.permute.xlu0 %502
  %504 = vrot.lane.b32.xlu0 %v463, 15
  %v505 = vpop.permute.xlu0 %504
  %506 = vrot.lane.b32.xlu0 %v464, 15
  %v507 = vpop.permute.xlu0 %506
  %508 = vrot.lane.b32.xlu0 %v465, 15
  %v509 = vpop.permute.xlu0 %508
  %510 = vrot.lane.b32.xlu0 %v466, 15
  %v511 = vpop.permute.xlu0 %510
  %512 = vrot.lane.b32.xlu0 %v467, 15
  %v513 = vpop.permute.xlu0 %512
  %514 = vrot.lane.b32.xlu0 %v468, 15
  %v515 = vpop.permute.xlu0 %514
  %516 = vrot.lane.b32.xlu0 %v469, 15
  %v517 = vpop.permute.xlu0 %516
  %518 = vrot.lane.b32.xlu0 %v470, 15
  %v519 = vpop.permute.xlu0 %518
  %520 = vrot.lane.b32.xlu0 %v471, 15
  %v521 = vpop.permute.xlu0 %520
  %522 = vrot.lane.b32.xlu0 %v472, 15
  %v523 = vpop.permute.xlu0 %522
  %524 = vrot.lane.b32.xlu0 %v473, 15
  %v525 = vpop.permute.xlu0 %524
  %526 = vrot.lane.b32.xlu0 %v474, 15
  %v527 = vpop.permute.xlu0 %526
  %528 = vrot.lane.b32.xlu0 %v475, 15
  %v529 = vpop.permute.xlu0 %528
  %530 = vrot.lane.b32.xlu0 %v476, 15
  %v531 = vpop.permute.xlu0 %530
  %532 = vrot.lane.b32.xlu0 %v477, 15
  %v533 = vpop.permute.xlu0 %532
  %534 = vrot.lane.b32.xlu0 %v478, 15
  %v535 = vpop.permute.xlu0 %534
  %536 = vrot.lane.b32.xlu0 %v479, 15
  %v537 = vpop.permute.xlu0 %536
  %538 = vrot.lane.b32.xlu0 %v480, 15
  %v539 = vpop.permute.xlu0 %538
  %540 = vrot.lane.b32.xlu0 %v481, 15
  %v541 = vpop.permute.xlu0 %540
  %vm542 = vcmask 121856
  %v543 = vsel %vm542, %v503, %v505
  %v544 = vsel %vm542, %v505, %v507
  %v545 = vsel %vm542, %v507, %v509
  %v546 = vsel %vm542, %v509, %v511
  %v547 = vsel %vm542, %v513, %v515
  %v548 = vsel %vm542, %v515, %v517
  %v549 = vsel %vm542, %v517, %v519
  %v550 = vsel %vm542, %v519, %v521
  %v551 = vsel %vm542, %v523, %v525
  %v552 = vsel %vm542, %v525, %v527
  %v553 = vsel %vm542, %v527, %v529
  %v554 = vsel %vm542, %v529, %v531
  %v555 = vsel %vm542, %v533, %v535
  %v556 = vsel %vm542, %v535, %v537
  %v557 = vsel %vm542, %v537, %v539
  %v558 = vsel %vm542, %v539, %v541
  %575 = vst [vmem:[#allocation3 + $0x100] sm:$0xff] %v543
  %576 = vst [vmem:[#allocation3 + $0x108] sm:$0xff] %v544
  %577 = vst [vmem:[#allocation3 + $0x110] sm:$0xff] %v545
  %578 = vst [vmem:[#allocation3 + $0x118] sm:$0xff] %v546
  %579 = vst [vmem:[#allocation3 + $0x120] sm:$0xff] %v547
  %580 = vst [vmem:[#allocation3 + $0x128] sm:$0xff] %v548
  %581 = vst [vmem:[#allocation3 + $0x130] sm:$0xff] %v549
  %582 = vst [vmem:[#allocation3 + $0x138] sm:$0xff] %v550
  %583 = vst [vmem:[#allocation3 + $0x140] sm:$0xff] %v551
  %584 = vst [vmem:[#allocation3 + $0x148] sm:$0xff] %v552
  %585 = vst [vmem:[#allocation3 + $0x150] sm:$0xff] %v553
  %586 = vst [vmem:[#allocation3 + $0x158] sm:$0xff] %v554
  %587 = vst [vmem:[#allocation3 + $0x160] sm:$0xff] %v555
  %588 = vst [vmem:[#allocation3 + $0x168] sm:$0xff] %v556
  %589 = vst [vmem:[#allocation3 + $0x170] sm:$0xff] %v557
  %590 = vst [vmem:[#allocation3 + $0x178] sm:$0xff] %v558
  %v591 = vld [vmem:[%s0] sm:$0xff]
  %v592 = vld [vmem:[%s0 + $0x8] sm:$0xff]
  %v593 = vld [vmem:[%s0 + $0x10] sm:$0xff]
  %v594 = vld [vmem:[%s0 + $0x18] sm:$0xff]
  %v595 = vld [vmem:[%s0 + $0x20] sm:$0xff]
  %v596 = vld [vmem:[%s0 + $0x30] sm:$0xff]
  %v597 = vld [vmem:[%s0 + $0x38] sm:$0xff]
  %v598 = vld [vmem:[%s0 + $0x40] sm:$0xff]
  %v599 = vld [vmem:[%s0 + $0x48] sm:$0xff]
  %v600 = vld [vmem:[%s0 + $0x50] sm:$0xff]
  %v601 = vld [vmem:[%s0 + $0x60] sm:$0xff]
  %v602 = vld [vmem:[%s0 + $0x68] sm:$0xff]
  %v603 = vld [vmem:[%s0 + $0x70] sm:$0xff]
  %v604 = vld [vmem:[%s0 + $0x78] sm:$0xff]
  %v605 = vld [vmem:[%s0 + $0x80] sm:$0xff]
  %v606 = vld [vmem:[%s0 + $0x90] sm:$0xff]
  %v607 = vld [vmem:[%s0 + $0x98] sm:$0xff]
  %v608 = vld [vmem:[%s0 + $0xa0] sm:$0xff]
  %v609 = vld [vmem:[%s0 + $0xa8] sm:$0xff]
  %v610 = vld [vmem:[%s0 + $0xb0] sm:$0xff]
  %s611 = scalar_lea.vmem %s1, 3
  %v612 = vld [vmem:[%s611] ss:$8 sm:$0xf]
  %v614 = vlaneseq
  %v615 = vshrl.u32 %v614, 7
  %v616 = vsub.s32 0, %v615
  %v617 = vrot.slane %v612, %v616
  %v618 = vlaneseq
  %v619 = vshrl.u32 %v618, 7
  %v620 = vsub.s32 1, %v619
  %v621 = vrot.slane %v612, %v620
  %v622 = vlaneseq
  %v623 = vshrl.u32 %v622, 7
  %v624 = vsub.s32 2, %v623
  %v625 = vrot.slane %v612, %v624
  %v626 = vlaneseq
  %v627 = vshrl.u32 %v626, 7
  %v628 = vsub.s32 3, %v627
  %v629 = vrot.slane %v612, %v628
  %630 = vrot.lane.b32.xlu0 %v617, 127
  %v631 = vpop.permute.xlu0 %630
  %632 = vrot.lane.b32.xlu0 %v621, 127
  %v633 = vpop.permute.xlu0 %632
  %634 = vrot.lane.b32.xlu0 %v625, 127
  %v635 = vpop.permute.xlu0 %634
  %636 = vrot.lane.b32.xlu0 %v629, 127
  %v637 = vpop.permute.xlu0 %636
  %vm638 = vcmask 1039360
  %v639 = vsel %vm638, %v631, %v633
  %v640 = vsel %vm638, %v633, %v635
  %v641 = vsel %vm638, %v635, %v637
  %v647 = vmul.f32 %v591, %v631
  %v648 = vmul.f32 %v592, %v639
  %v649 = vmul.f32 %v593, %v640
  %v650 = vmul.f32 %v594, %v641
  %v651 = vmul.f32 %v595, %v637
  %v652 = vmul.f32 %v596, %v631
  %v653 = vmul.f32 %v597, %v639
  %v654 = vmul.f32 %v598, %v640
  %v655 = vmul.f32 %v599, %v641
  %v656 = vmul.f32 %v600, %v637
  %v657 = vmul.f32 %v601, %v631
  %v658 = vmul.f32 %v602, %v639
  %v659 = vmul.f32 %v603, %v640
  %v660 = vmul.f32 %v604, %v641
  %v661 = vmul.f32 %v605, %v637
  %v662 = vmul.f32 %v606, %v631
  %v663 = vmul.f32 %v607, %v639
  %v664 = vmul.f32 %v608, %v640
  %v665 = vmul.f32 %v609, %v641
  %v666 = vmul.f32 %v610, %v637
  %687 = vrot.lane.b32.xlu0 %v647, 1
  %v688 = vpop.permute.xlu0 %687
  %689 = vrot.lane.b32.xlu0 %v648, 1
  %v690 = vpop.permute.xlu0 %689
  %691 = vrot.lane.b32.xlu0 %v649, 1
  %v692 = vpop.permute.xlu0 %691
  %693 = vrot.lane.b32.xlu0 %v650, 1
  %v694 = vpop.permute.xlu0 %693
  %695 = vrot.lane.b32.xlu0 %v651, 1
  %v696 = vpop.permute.xlu0 %695
  %697 = vrot.lane.b32.xlu0 %v652, 1
  %v698 = vpop.permute.xlu0 %697
  %699 = vrot.lane.b32.xlu0 %v653, 1
  %v700 = vpop.permute.xlu0 %699
  %701 = vrot.lane.b32.xlu0 %v654, 1
  %v702 = vpop.permute.xlu0 %701
  %703 = vrot.lane.b32.xlu0 %v655, 1
  %v704 = vpop.permute.xlu0 %703
  %705 = vrot.lane.b32.xlu0 %v656, 1
  %v706 = vpop.permute.xlu0 %705
  %707 = vrot.lane.b32.xlu0 %v657, 1
  %v708 = vpop.permute.xlu0 %707
  %709 = vrot.lane.b32.xlu0 %v658, 1
  %v710 = vpop.permute.xlu0 %709
  %711 = vrot.lane.b32.xlu0 %v659, 1
  %v712 = vpop.permute.xlu0 %711
  %713 = vrot.lane.b32.xlu0 %v660, 1
  %v714 = vpop.permute.xlu0 %713
  %715 = vrot.lane.b32.xlu0 %v661, 1
  %v716 = vpop.permute.xlu0 %715
  %717 = vrot.lane.b32.xlu0 %v662, 1
  %v718 = vpop.permute.xlu0 %717
  %719 = vrot.lane.b32.xlu0 %v663, 1
  %v720 = vpop.permute.xlu0 %719
  %721 = vrot.lane.b32.xlu0 %v664, 1
  %v722 = vpop.permute.xlu0 %721
  %723 = vrot.lane.b32.xlu0 %v665, 1
  %v724 = vpop.permute.xlu0 %723
  %725 = vrot.lane.b32.xlu0 %v666, 1
  %v726 = vpop.permute.xlu0 %725
  %vm727 = vcmask 7168
  %v728 = vsel %vm727, %v688, %v690
  %v729 = vsel %vm727, %v690, %v692
  %v730 = vsel %vm727, %v692, %v694
  %v731 = vsel %vm727, %v694, %v696
  %v732 = vsel %vm727, %v698, %v700
  %v733 = vsel %vm727, %v700, %v702
  %v734 = vsel %vm727, %v702, %v704
  %v735 = vsel %vm727, %v704, %v706
  %v736 = vsel %vm727, %v708, %v710
  %v737 = vsel %vm727, %v710, %v712
  %v738 = vsel %vm727, %v712, %v714
  %v739 = vsel %vm727, %v714, %v716
  %v740 = vsel %vm727, %v718, %v720
  %v741 = vsel %vm727, %v720, %v722
  %v742 = vsel %vm727, %v722, %v724
  %v743 = vsel %vm727, %v724, %v726
  %760 = vst [vmem:[#allocation3 + $0x180] sm:$0xff] %v728
  %761 = vst [vmem:[#allocation3 + $0x188] sm:$0xff] %v729
  %762 = vst [vmem:[#allocation3 + $0x190] sm:$0xff] %v730
  %763 = vst [vmem:[#allocation3 + $0x198] sm:$0xff] %v731
  %764 = vst [vmem:[#allocation3 + $0x1a0] sm:$0xff] %v732
  %765 = vst [vmem:[#allocation3 + $0x1a8] sm:$0xff] %v733
  %766 = vst [vmem:[#allocation3 + $0x1b0] sm:$0xff] %v734
  %767 = vst [vmem:[#allocation3 + $0x1b8] sm:$0xff] %v735
  %768 = vst [vmem:[#allocation3 + $0x1c0] sm:$0xff] %v736
  %769 = vst [vmem:[#allocation3 + $0x1c8] sm:$0xff] %v737
  %770 = vst [vmem:[#allocation3 + $0x1d0] sm:$0xff] %v738
  %771 = vst [vmem:[#allocation3 + $0x1d8] sm:$0xff] %v739
  %772 = vst [vmem:[#allocation3 + $0x1e0] sm:$0xff] %v740
  %773 = vst [vmem:[#allocation3 + $0x1e8] sm:$0xff] %v741
  %774 = vst [vmem:[#allocation3 + $0x1f0] sm:$0xff] %v742
  %775 = vst [vmem:[#allocation3 + $0x1f8] sm:$0xff] %v743
  %v776 = vld [vmem:[%s0 + $0x8] sm:$0xff]
  %v777 = vld [vmem:[%s0 + $0x10] sm:$0xff]
  %v778 = vld [vmem:[%s0 + $0x18] sm:$0xff]
  %v779 = vld [vmem:[%s0 + $0x20] sm:$0xff]
  %v780 = vld [vmem:[%s0 + $0x38] sm:$0xff]
  %v781 = vld [vmem:[%s0 + $0x40] sm:$0xff]
  %v782 = vld [vmem:[%s0 + $0x48] sm:$0xff]
  %v783 = vld [vmem:[%s0 + $0x50] sm:$0xff]
  %v784 = vld [vmem:[%s0 + $0x68] sm:$0xff]
  %v785 = vld [vmem:[%s0 + $0x70] sm:$0xff]
  %v786 = vld [vmem:[%s0 + $0x78] sm:$0xff]
  %v787 = vld [vmem:[%s0 + $0x80] sm:$0xff]
  %v788 = vld [vmem:[%s0 + $0x98] sm:$0xff]
  %v789 = vld [vmem:[%s0 + $0xa0] sm:$0xff]
  %v790 = vld [vmem:[%s0 + $0xa8] sm:$0xff]
  %v791 = vld [vmem:[%s0 + $0xb0] sm:$0xff]
  %792 = vst [vmem:[#allocation3 + $0x200] sm:$0xff] %v776
  %793 = vst [vmem:[#allocation3 + $0x208] sm:$0xff] %v777
  %794 = vst [vmem:[#allocation3 + $0x210] sm:$0xff] %v778
  %795 = vst [vmem:[#allocation3 + $0x218] sm:$0xff] %v779
  %796 = vst [vmem:[#allocation3 + $0x220] sm:$0xff] %v780
  %797 = vst [vmem:[#allocation3 + $0x228] sm:$0xff] %v781
  %798 = vst [vmem:[#allocation3 + $0x230] sm:$0xff] %v782
  %799 = vst [vmem:[#allocation3 + $0x238] sm:$0xff] %v783
  %800 = vst [vmem:[#allocation3 + $0x240] sm:$0xff] %v784
  %801 = vst [vmem:[#allocation3 + $0x248] sm:$0xff] %v785
  %802 = vst [vmem:[#allocation3 + $0x250] sm:$0xff] %v786
  %803 = vst [vmem:[#allocation3 + $0x258] sm:$0xff] %v787
  %804 = vst [vmem:[#allocation3 + $0x260] sm:$0xff] %v788
  %805 = vst [vmem:[#allocation3 + $0x268] sm:$0xff] %v789
  %806 = vst [vmem:[#allocation3 + $0x270] sm:$0xff] %v790
  %807 = vst [vmem:[#allocation3 + $0x278] sm:$0xff] %v791
  %v808 = vld [vmem:[%s0 + $0x8] sm:$0xff]
  %v809 = vld [vmem:[%s0 + $0x10] sm:$0xff]
  %v810 = vld [vmem:[%s0 + $0x18] sm:$0xff]
  %v811 = vld [vmem:[%s0 + $0x20] sm:$0xff]
  %v812 = vld [vmem:[%s0 + $0x28] sm:$0xff]
  %v813 = vld [vmem:[%s0 + $0x38] sm:$0xff]
  %v814 = vld [vmem:[%s0 + $0x40] sm:$0xff]
  %v815 = vld [vmem:[%s0 + $0x48] sm:$0xff]
  %v816 = vld [vmem:[%s0 + $0x50] sm:$0xff]
  %v817 = vld [vmem:[%s0 + $0x58] sm:$0xff]
  %v818 = vld [vmem:[%s0 + $0x68] sm:$0xff]
  %v819 = vld [vmem:[%s0 + $0x70] sm:$0xff]
  %v820 = vld [vmem:[%s0 + $0x78] sm:$0xff]
  %v821 = vld [vmem:[%s0 + $0x80] sm:$0xff]
  %v822 = vld [vmem:[%s0 + $0x88] sm:$0xff]
  %v823 = vld [vmem:[%s0 + $0x98] sm:$0xff]
  %v824 = vld [vmem:[%s0 + $0xa0] sm:$0xff]
  %v825 = vld [vmem:[%s0 + $0xa8] sm:$0xff]
  %v826 = vld [vmem:[%s0 + $0xb0] sm:$0xff]
  %v827 = vld [vmem:[%s0 + $0xb8] sm:$0xff]
  %s828 = scalar_lea.vmem %s1, 5
  %v829 = vld [vmem:[%s828] ss:$8 sm:$0xf]
  %v831 = vlaneseq
  %v832 = vshrl.u32 %v831, 7
  %v833 = vsub.s32 0, %v832
  %v834 = vrot.slane %v829, %v833
  %v835 = vlaneseq
  %v836 = vshrl.u32 %v835, 7
  %v837 = vsub.s32 1, %v836
  %v838 = vrot.slane %v829, %v837
  %v839 = vlaneseq
  %v840 = vshrl.u32 %v839, 7
  %v841 = vsub.s32 2, %v840
  %v842 = vrot.slane %v829, %v841
  %v843 = vlaneseq
  %v844 = vshrl.u32 %v843, 7
  %v845 = vsub.s32 3, %v844
  %v846 = vrot.slane %v829, %v845
  %847 = vrot.lane.b32.xlu0 %v834, 1
  %v848 = vpop.permute.xlu0 %847
  %849 = vrot.lane.b32.xlu0 %v838, 1
  %v850 = vpop.permute.xlu0 %849
  %851 = vrot.lane.b32.xlu0 %v842, 1
  %v852 = vpop.permute.xlu0 %851
  %853 = vrot.lane.b32.xlu0 %v846, 1
  %v854 = vpop.permute.xlu0 %853
  %v855 = vsel %vm727, %v848, %v850
  %v856 = vsel %vm727, %v850, %v852
  %v857 = vsel %vm727, %v852, %v854
  %v863 = vmul.f32 %v808, %v848
  %v864 = vmul.f32 %v809, %v855
  %v865 = vmul.f32 %v810, %v856
  %v866 = vmul.f32 %v811, %v857
  %v867 = vmul.f32 %v812, %v854
  %v868 = vmul.f32 %v813, %v848
  %v869 = vmul.f32 %v814, %v855
  %v870 = vmul.f32 %v815, %v856
  %v871 = vmul.f32 %v816, %v857
  %v872 = vmul.f32 %v817, %v854
  %v873 = vmul.f32 %v818, %v848
  %v874 = vmul.f32 %v819, %v855
  %v875 = vmul.f32 %v820, %v856
  %v876 = vmul.f32 %v821, %v857
  %v877 = vmul.f32 %v822, %v854
  %v878 = vmul.f32 %v823, %v848
  %v879 = vmul.f32 %v824, %v855
  %v880 = vmul.f32 %v825, %v856
  %v881 = vmul.f32 %v826, %v857
  %v882 = vmul.f32 %v827, %v854
  %903 = vrot.lane.b32.xlu0 %v863, 127
  %v904 = vpop.permute.xlu0 %903
  %905 = vrot.lane.b32.xlu0 %v864, 127
  %v906 = vpop.permute.xlu0 %905
  %907 = vrot.lane.b32.xlu0 %v865, 127
  %v908 = vpop.permute.xlu0 %907
  %909 = vrot.lane.b32.xlu0 %v866, 127
  %v910 = vpop.permute.xlu0 %909
  %911 = vrot.lane.b32.xlu0 %v867, 127
  %v912 = vpop.permute.xlu0 %911
  %913 = vrot.lane.b32.xlu0 %v868, 127
  %v914 = vpop.permute.xlu0 %913
  %915 = vrot.lane.b32.xlu0 %v869, 127
  %v916 = vpop.permute.xlu0 %915
  %917 = vrot.lane.b32.xlu0 %v870, 127
  %v918 = vpop.permute.xlu0 %917
  %919 = vrot.lane.b32.xlu0 %v871, 127
  %v920 = vpop.permute.xlu0 %919
  %921 = vrot.lane.b32.xlu0 %v872, 127
  %v922 = vpop.permute.xlu0 %921
  %923 = vrot.lane.b32.xlu0 %v873, 127
  %v924 = vpop.permute.xlu0 %923
  %925 = vrot.lane.b32.xlu0 %v874, 127
  %v926 = vpop.permute.xlu0 %925
  %927 = vrot.lane.b32.xlu0 %v875, 127
  %v928 = vpop.permute.xlu0 %927
  %929 = vrot.lane.b32.xlu0 %v876, 127
  %v930 = vpop.permute.xlu0 %929
  %931 = vrot.lane.b32.xlu0 %v877, 127
  %v932 = vpop.permute.xlu0 %931
  %933 = vrot.lane.b32.xlu0 %v878, 127
  %v934 = vpop.permute.xlu0 %933
  %935 = vrot.lane.b32.xlu0 %v879, 127
  %v936 = vpop.permute.xlu0 %935
  %937 = vrot.lane.b32.xlu0 %v880, 127
  %v938 = vpop.permute.xlu0 %937
  %939 = vrot.lane.b32.xlu0 %v881, 127
  %v940 = vpop.permute.xlu0 %939
  %941 = vrot.lane.b32.xlu0 %v882, 127
  %v942 = vpop.permute.xlu0 %941
  %v943 = vsel %vm638, %v904, %v906
  %v944 = vsel %vm638, %v906, %v908
  %v945 = vsel %vm638, %v908, %v910
  %v946 = vsel %vm638, %v910, %v912
  %v947 = vsel %vm638, %v914, %v916
  %v948 = vsel %vm638, %v916, %v918
  %v949 = vsel %vm638, %v918, %v920
  %v950 = vsel %vm638, %v920, %v922
  %v951 = vsel %vm638, %v924, %v926
  %v952 = vsel %vm638, %v926, %v928
  %v953 = vsel %vm638, %v928, %v930
  %v954 = vsel %vm638, %v930, %v932
  %v955 = vsel %vm638, %v934, %v936
  %v956 = vsel %vm638, %v936, %v938
  %v957 = vsel %vm638, %v938, %v940
  %v958 = vsel %vm638, %v940, %v942
  %975 = vst [vmem:[#allocation3 + $0x280] sm:$0xff] %v943
  %976 = vst [vmem:[#allocation3 + $0x288] sm:$0xff] %v944
  %977 = vst [vmem:[#allocation3 + $0x290] sm:$0xff] %v945
  %978 = vst [vmem:[#allocation3 + $0x298] sm:$0xff] %v946
  %979 = vst [vmem:[#allocation3 + $0x2a0] sm:$0xff] %v947
  %980 = vst [vmem:[#allocation3 + $0x2a8] sm:$0xff] %v948
  %981 = vst [vmem:[#allocation3 + $0x2b0] sm:$0xff] %v949
  %982 = vst [vmem:[#allocation3 + $0x2b8] sm:$0xff] %v950
  %983 = vst [vmem:[#allocation3 + $0x2c0] sm:$0xff] %v951
  %984 = vst [vmem:[#allocation3 + $0x2c8] sm:$0xff] %v952
  %985 = vst [vmem:[#allocation3 + $0x2d0] sm:$0xff] %v953
  %986 = vst [vmem:[#allocation3 + $0x2d8] sm:$0xff] %v954
  %987 = vst [vmem:[#allocation3 + $0x2e0] sm:$0xff] %v955
  %988 = vst [vmem:[#allocation3 + $0x2e8] sm:$0xff] %v956
  %989 = vst [vmem:[#allocation3 + $0x2f0] sm:$0xff] %v957
  %990 = vst [vmem:[#allocation3 + $0x2f8] sm:$0xff] %v958
  %v991 = vld [vmem:[%s0 + $0x8] sm:$0xff]
  %v992 = vld [vmem:[%s0 + $0x10] sm:$0xff]
  %v993 = vld [vmem:[%s0 + $0x18] sm:$0xff]
  %v994 = vld [vmem:[%s0 + $0x20] sm:$0xff]
  %v995 = vld [vmem:[%s0 + $0x28] sm:$0xff]
  %v996 = vld [vmem:[%s0 + $0x38] sm:$0xff]
  %v997 = vld [vmem:[%s0 + $0x40] sm:$0xff]
  %v998 = vld [vmem:[%s0 + $0x48] sm:$0xff]
  %v999 = vld [vmem:[%s0 + $0x50] sm:$0xff]
  %v1000 = vld [vmem:[%s0 + $0x58] sm:$0xff]
  %v1001 = vld [vmem:[%s0 + $0x68] sm:$0xff]
  %v1002 = vld [vmem:[%s0 + $0x70] sm:$0xff]
  %v1003 = vld [vmem:[%s0 + $0x78] sm:$0xff]
  %v1004 = vld [vmem:[%s0 + $0x80] sm:$0xff]
  %v1005 = vld [vmem:[%s0 + $0x88] sm:$0xff]
  %v1006 = vld [vmem:[%s0 + $0x98] sm:$0xff]
  %v1007 = vld [vmem:[%s0 + $0xa0] sm:$0xff]
  %v1008 = vld [vmem:[%s0 + $0xa8] sm:$0xff]
  %v1009 = vld [vmem:[%s0 + $0xb0] sm:$0xff]
  %v1010 = vld [vmem:[%s0 + $0xb8] sm:$0xff]
  %s1011 = scalar_lea.vmem %s1, 6
  %v1012 = vld [vmem:[%s1011] ss:$8 sm:$0xf]
  %v1014 = vlaneseq
  %v1015 = vshrl.u32 %v1014, 7
  %v1016 = vsub.s32 0, %v1015
  %v1017 = vrot.slane %v1012, %v1016
  %v1018 = vlaneseq
  %v1019 = vshrl.u32 %v1018, 7
  %v1020 = vsub.s32 1, %v1019
  %v1021 = vrot.slane %v1012, %v1020
  %v1022 = vlaneseq
  %v1023 = vshrl.u32 %v1022, 7
  %v1024 = vsub.s32 2, %v1023
  %v1025 = vrot.slane %v1012, %v1024
  %v1026 = vlaneseq
  %v1027 = vshrl.u32 %v1026, 7
  %v1028 = vsub.s32 3, %v1027
  %v1029 = vrot.slane %v1012, %v1028
  %1030 = vrot.lane.b32.xlu0 %v1017, 15
  %v1031 = vpop.permute.xlu0 %1030
  %1032 = vrot.lane.b32.xlu0 %v1021, 15
  %v1033 = vpop.permute.xlu0 %1032
  %1034 = vrot.lane.b32.xlu0 %v1025, 15
  %v1035 = vpop.permute.xlu0 %1034
  %1036 = vrot.lane.b32.xlu0 %v1029, 15
  %v1037 = vpop.permute.xlu0 %1036
  %v1038 = vsel %vm542, %v1031, %v1033
  %v1039 = vsel %vm542, %v1033, %v1035
  %v1040 = vsel %vm542, %v1035, %v1037
  %v1046 = vmul.f32 %v991, %v1031
  %v1047 = vmul.f32 %v992, %v1038
  %v1048 = vmul.f32 %v993, %v1039
  %v1049 = vmul.f32 %v994, %v1040
  %v1050 = vmul.f32 %v995, %v1037
  %v1051 = vmul.f32 %v996, %v1031
  %v1052 = vmul.f32 %v997, %v1038
  %v1053 = vmul.f32 %v998, %v1039
  %v1054 = vmul.f32 %v999, %v1040
  %v1055 = vmul.f32 %v1000, %v1037
  %v1056 = vmul.f32 %v1001, %v1031
  %v1057 = vmul.f32 %v1002, %v1038
  %v1058 = vmul.f32 %v1003, %v1039
  %v1059 = vmul.f32 %v1004, %v1040
  %v1060 = vmul.f32 %v1005, %v1037
  %v1061 = vmul.f32 %v1006, %v1031
  %v1062 = vmul.f32 %v1007, %v1038
  %v1063 = vmul.f32 %v1008, %v1039
  %v1064 = vmul.f32 %v1009, %v1040
  %v1065 = vmul.f32 %v1010, %v1037
  %1086 = vrot.lane.b32.xlu0 %v1046, 113
  %v1087 = vpop.permute.xlu0 %1086
  %1088 = vrot.lane.b32.xlu0 %v1047, 113
  %v1089 = vpop.permute.xlu0 %1088
  %1090 = vrot.lane.b32.xlu0 %v1048, 113
  %v1091 = vpop.permute.xlu0 %1090
  %1092 = vrot.lane.b32.xlu0 %v1049, 113
  %v1093 = vpop.permute.xlu0 %1092
  %1094 = vrot.lane.b32.xlu0 %v1050, 113
  %v1095 = vpop.permute.xlu0 %1094
  %1096 = vrot.lane.b32.xlu0 %v1051, 113
  %v1097 = vpop.permute.xlu0 %1096
  %1098 = vrot.lane.b32.xlu0 %v1052, 113
  %v1099 = vpop.permute.xlu0 %1098
  %1100 = vrot.lane.b32.xlu0 %v1053, 113
  %v1101 = vpop.permute.xlu0 %1100
  %1102 = vrot.lane.b32.xlu0 %v1054, 113
  %v1103 = vpop.permute.xlu0 %1102
  %1104 = vrot.lane.b32.xlu0 %v1055, 113
  %v1105 = vpop.permute.xlu0 %1104
  %1106 = vrot.lane.b32.xlu0 %v1056, 113
  %v1107 = vpop.permute.xlu0 %1106
  %1108 = vrot.lane.b32.xlu0 %v1057, 113
  %v1109 = vpop.permute.xlu0 %1108
  %1110 = vrot.lane.b32.xlu0 %v1058, 113
  %v1111 = vpop.permute.xlu0 %1110
  %1112 = vrot.lane.b32.xlu0 %v1059, 113
  %v1113 = vpop.permute.xlu0 %1112
  %1114 = vrot.lane.b32.xlu0 %v1060, 113
  %v1115 = vpop.permute.xlu0 %1114
  %1116 = vrot.lane.b32.xlu0 %v1061, 113
  %v1117 = vpop.permute.xlu0 %1116
  %1118 = vrot.lane.b32.xlu0 %v1062, 113
  %v1119 = vpop.permute.xlu0 %1118
  %1120 = vrot.lane.b32.xlu0 %v1063, 113
  %v1121 = vpop.permute.xlu0 %1120
  %1122 = vrot.lane.b32.xlu0 %v1064, 113
  %v1123 = vpop.permute.xlu0 %1122
  %1124 = vrot.lane.b32.xlu0 %v1065, 113
  %v1125 = vpop.permute.xlu0 %1124
  %v1126 = vsel %vm453, %v1087, %v1089
  %v1127 = vsel %vm453, %v1089, %v1091
  %v1128 = vsel %vm453, %v1091, %v1093
  %v1129 = vsel %vm453, %v1093, %v1095
  %v1130 = vsel %vm453, %v1097, %v1099
  %v1131 = vsel %vm453, %v1099, %v1101
  %v1132 = vsel %vm453, %v1101, %v1103
  %v1133 = vsel %vm453, %v1103, %v1105
  %v1134 = vsel %vm453, %v1107, %v1109
  %v1135 = vsel %vm453, %v1109, %v1111
  %v1136 = vsel %vm453, %v1111, %v1113
  %v1137 = vsel %vm453, %v1113, %v1115
  %v1138 = vsel %vm453, %v1117, %v1119
  %v1139 = vsel %vm453, %v1119, %v1121
  %v1140 = vsel %vm453, %v1121, %v1123
  %v1141 = vsel %vm453, %v1123, %v1125
  %1158 = vst [vmem:[#allocation3 + $0x300] sm:$0xff] %v1126
  %1159 = vst [vmem:[#allocation3 + $0x308] sm:$0xff] %v1127
  %1160 = vst [vmem:[#allocation3 + $0x310] sm:$0xff] %v1128
  %1161 = vst [vmem:[#allocation3 + $0x318] sm:$0xff] %v1129
  %1162 = vst [vmem:[#allocation3 + $0x320] sm:$0xff] %v1130
  %1163 = vst [vmem:[#allocation3 + $0x328] sm:$0xff] %v1131
  %1164 = vst [vmem:[#allocation3 + $0x330] sm:$0xff] %v1132
  %1165 = vst [vmem:[#allocation3 + $0x338] sm:$0xff] %v1133
  %1166 = vst [vmem:[#allocation3 + $0x340] sm:$0xff] %v1134
  %1167 = vst [vmem:[#allocation3 + $0x348] sm:$0xff] %v1135
  %1168 = vst [vmem:[#allocation3 + $0x350] sm:$0xff] %v1136
  %1169 = vst [vmem:[#allocation3 + $0x358] sm:$0xff] %v1137
  %1170 = vst [vmem:[#allocation3 + $0x360] sm:$0xff] %v1138
  %1171 = vst [vmem:[#allocation3 + $0x368] sm:$0xff] %v1139
  %1172 = vst [vmem:[#allocation3 + $0x370] sm:$0xff] %v1140
  %1173 = vst [vmem:[#allocation3 + $0x378] sm:$0xff] %v1141
  %v1174 = vld [vmem:[%s0 + $0x8] sm:$0xff]
  %v1175 = vld [vmem:[%s0 + $0x10] sm:$0xff]
  %v1176 = vld [vmem:[%s0 + $0x18] sm:$0xff]
  %v1177 = vld [vmem:[%s0 + $0x20] sm:$0xff]
  %v1178 = vld [vmem:[%s0 + $0x28] sm:$0xff]
  %v1179 = vld [vmem:[%s0 + $0x38] sm:$0xff]
  %v1180 = vld [vmem:[%s0 + $0x40] sm:$0xff]
  %v1181 = vld [vmem:[%s0 + $0x48] sm:$0xff]
  %v1182 = vld [vmem:[%s0 + $0x50] sm:$0xff]
  %v1183 = vld [vmem:[%s0 + $0x58] sm:$0xff]
  %v1184 = vld [vmem:[%s0 + $0x68] sm:$0xff]
  %v1185 = vld [vmem:[%s0 + $0x70] sm:$0xff]
  %v1186 = vld [vmem:[%s0 + $0x78] sm:$0xff]
  %v1187 = vld [vmem:[%s0 + $0x80] sm:$0xff]
  %v1188 = vld [vmem:[%s0 + $0x88] sm:$0xff]
  %v1189 = vld [vmem:[%s0 + $0x98] sm:$0xff]
  %v1190 = vld [vmem:[%s0 + $0xa0] sm:$0xff]
  %v1191 = vld [vmem:[%s0 + $0xa8] sm:$0xff]
  %v1192 = vld [vmem:[%s0 + $0xb0] sm:$0xff]
  %v1193 = vld [vmem:[%s0 + $0xb8] sm:$0xff]
  %s1194 = scalar_lea.vmem %s1, 7
  %v1195 = vld [vmem:[%s1194] ss:$8 sm:$0xf]
  %v1197 = vlaneseq
  %v1198 = vshrl.u32 %v1197, 7
  %v1199 = vsub.s32 0, %v1198
  %v1200 = vrot.slane %v1195, %v1199
  %v1201 = vlaneseq
  %v1202 = vshrl.u32 %v1201, 7
  %v1203 = vsub.s32 1, %v1202
  %v1204 = vrot.slane %v1195, %v1203
  %v1205 = vlaneseq
  %v1206 = vshrl.u32 %v1205, 7
  %v1207 = vsub.s32 2, %v1206
  %v1208 = vrot.slane %v1195, %v1207
  %v1209 = vlaneseq
  %v1210 = vshrl.u32 %v1209, 7
  %v1211 = vsub.s32 3, %v1210
  %v1212 = vrot.slane %v1195, %v1211
  %1213 = vrot.lane.b32.xlu0 %v1200, 16
  %v1214 = vpop.permute.xlu0 %1213
  %1215 = vrot.lane.b32.xlu0 %v1204, 16
  %v1216 = vpop.permute.xlu0 %1215
  %1217 = vrot.lane.b32.xlu0 %v1208, 16
  %v1218 = vpop.permute.xlu0 %1217
  %1219 = vrot.lane.b32.xlu0 %v1212, 16
  %v1220 = vpop.permute.xlu0 %1219
  %v1221 = vsel %vm357, %v1214, %v1216
  %v1222 = vsel %vm357, %v1216, %v1218
  %v1223 = vsel %vm357, %v1218, %v1220
  %v1229 = vmul.f32 %v1174, %v1214
  %v1230 = vmul.f32 %v1175, %v1221
  %v1231 = vmul.f32 %v1176, %v1222
  %v1232 = vmul.f32 %v1177, %v1223
  %v1233 = vmul.f32 %v1178, %v1220
  %v1234 = vmul.f32 %v1179, %v1214
  %v1235 = vmul.f32 %v1180, %v1221
  %v1236 = vmul.f32 %v1181, %v1222
  %v1237 = vmul.f32 %v1182, %v1223
  %v1238 = vmul.f32 %v1183, %v1220
  %v1239 = vmul.f32 %v1184, %v1214
  %v1240 = vmul.f32 %v1185, %v1221
  %v1241 = vmul.f32 %v1186, %v1222
  %v1242 = vmul.f32 %v1187, %v1223
  %v1243 = vmul.f32 %v1188, %v1220
  %v1244 = vmul.f32 %v1189, %v1214
  %v1245 = vmul.f32 %v1190, %v1221
  %v1246 = vmul.f32 %v1191, %v1222
  %v1247 = vmul.f32 %v1192, %v1223
  %v1248 = vmul.f32 %v1193, %v1220
  %1269 = vrot.lane.b32.xlu0 %v1229, 112
  %v1270 = vpop.permute.xlu0 %1269
  %1271 = vrot.lane.b32.xlu0 %v1230, 112
  %v1272 = vpop.permute.xlu0 %1271
  %1273 = vrot.lane.b32.xlu0 %v1231, 112
  %v1274 = vpop.permute.xlu0 %1273
  %1275 = vrot.lane.b32.xlu0 %v1232, 112
  %v1276 = vpop.permute.xlu0 %1275
  %1277 = vrot.lane.b32.xlu0 %v1233, 112
  %v1278 = vpop.permute.xlu0 %1277
  %1279 = vrot.lane.b32.xlu0 %v1234, 112
  %v1280 = vpop.permute.xlu0 %1279
  %1281 = vrot.lane.b32.xlu0 %v1235, 112
  %v1282 = vpop.permute.xlu0 %1281
  %1283 = vrot.lane.b32.xlu0 %v1236, 112
  %v1284 = vpop.permute.xlu0 %1283
  %1285 = vrot.lane.b32.xlu0 %v1237, 112
  %v1286 = vpop.permute.xlu0 %1285
  %1287 = vrot.lane.b32.xlu0 %v1238, 112
  %v1288 = vpop.permute.xlu0 %1287
  %1289 = vrot.lane.b32.xlu0 %v1239, 112
  %v1290 = vpop.permute.xlu0 %1289
  %1291 = vrot.lane.b32.xlu0 %v1240, 112
  %v1292 = vpop.permute.xlu0 %1291
  %1293 = vrot.lane.b32.xlu0 %v1241, 112
  %v1294 = vpop.permute.xlu0 %1293
  %1295 = vrot.lane.b32.xlu0 %v1242, 112
  %v1296 = vpop.permute.xlu0 %1295
  %1297 = vrot.lane.b32.xlu0 %v1243, 112
  %v1298 = vpop.permute.xlu0 %1297
  %1299 = vrot.lane.b32.xlu0 %v1244, 112
  %v1300 = vpop.permute.xlu0 %1299
  %1301 = vrot.lane.b32.xlu0 %v1245, 112
  %v1302 = vpop.permute.xlu0 %1301
  %1303 = vrot.lane.b32.xlu0 %v1246, 112
  %v1304 = vpop.permute.xlu0 %1303
  %1305 = vrot.lane.b32.xlu0 %v1247, 112
  %v1306 = vpop.permute.xlu0 %1305
  %1307 = vrot.lane.b32.xlu0 %v1248, 112
  %v1308 = vpop.permute.xlu0 %1307
  %v1309 = vsel %vm268, %v1270, %v1272
  %v1310 = vsel %vm268, %v1272, %v1274
  %v1311 = vsel %vm268, %v1274, %v1276
  %v1312 = vsel %vm268, %v1276, %v1278
  %v1313 = vsel %vm268, %v1280, %v1282
  %v1314 = vsel %vm268, %v1282, %v1284
  %v1315 = vsel %vm268, %v1284, %v1286
  %v1316 = vsel %vm268, %v1286, %v1288
  %v1317 = vsel %vm268, %v1290, %v1292
  %v1318 = vsel %vm268, %v1292, %v1294
  %v1319 = vsel %vm268, %v1294, %v1296
  %v1320 = vsel %vm268, %v1296, %v1298
  %v1321 = vsel %vm268, %v1300, %v1302
  %v1322 = vsel %vm268, %v1302, %v1304
  %v1323 = vsel %vm268, %v1304, %v1306
  %v1324 = vsel %vm268, %v1306, %v1308
  %1341 = vst [vmem:[#allocation3 + $0x380] sm:$0xff] %v1309
  %1342 = vst [vmem:[#allocation3 + $0x388] sm:$0xff] %v1310
  %1343 = vst [vmem:[#allocation3 + $0x390] sm:$0xff] %v1311
  %1344 = vst [vmem:[#allocation3 + $0x398] sm:$0xff] %v1312
  %1345 = vst [vmem:[#allocation3 + $0x3a0] sm:$0xff] %v1313
  %1346 = vst [vmem:[#allocation3 + $0x3a8] sm:$0xff] %v1314
  %1347 = vst [vmem:[#allocation3 + $0x3b0] sm:$0xff] %v1315
  %1348 = vst [vmem:[#allocation3 + $0x3b8] sm:$0xff] %v1316
  %1349 = vst [vmem:[#allocation3 + $0x3c0] sm:$0xff] %v1317
  %1350 = vst [vmem:[#allocation3 + $0x3c8] sm:$0xff] %v1318
  %1351 = vst [vmem:[#allocation3 + $0x3d0] sm:$0xff] %v1319
  %1352 = vst [vmem:[#allocation3 + $0x3d8] sm:$0xff] %v1320
  %1353 = vst [vmem:[#allocation3 + $0x3e0] sm:$0xff] %v1321
  %1354 = vst [vmem:[#allocation3 + $0x3e8] sm:$0xff] %v1322
  %1355 = vst [vmem:[#allocation3 + $0x3f0] sm:$0xff] %v1323
  %1356 = vst [vmem:[#allocation3 + $0x3f8] sm:$0xff] %v1324
  %v1357 = vld [vmem:[%s0 + $0x8] sm:$0xff]
  %v1358 = vld [vmem:[%s0 + $0x10] sm:$0xff]
  %v1359 = vld [vmem:[%s0 + $0x18] sm:$0xff]
  %v1360 = vld [vmem:[%s0 + $0x20] sm:$0xff]
  %v1361 = vld [vmem:[%s0 + $0x28] sm:$0xff]
  %v1362 = vld [vmem:[%s0 + $0x38] sm:$0xff]
  %v1363 = vld [vmem:[%s0 + $0x40] sm:$0xff]
  %v1364 = vld [vmem:[%s0 + $0x48] sm:$0xff]
  %v1365 = vld [vmem:[%s0 + $0x50] sm:$0xff]
  %v1366 = vld [vmem:[%s0 + $0x58] sm:$0xff]
  %v1367 = vld [vmem:[%s0 + $0x68] sm:$0xff]
  %v1368 = vld [vmem:[%s0 + $0x70] sm:$0xff]
  %v1369 = vld [vmem:[%s0 + $0x78] sm:$0xff]
  %v1370 = vld [vmem:[%s0 + $0x80] sm:$0xff]
  %v1371 = vld [vmem:[%s0 + $0x88] sm:$0xff]
  %v1372 = vld [vmem:[%s0 + $0x98] sm:$0xff]
  %v1373 = vld [vmem:[%s0 + $0xa0] sm:$0xff]
  %v1374 = vld [vmem:[%s0 + $0xa8] sm:$0xff]
  %v1375 = vld [vmem:[%s0 + $0xb0] sm:$0xff]
  %v1376 = vld [vmem:[%s0 + $0xb8] sm:$0xff]
  %s1377 = scalar_lea.vmem %s1, 32
  %v1378 = vld [vmem:[%s1377] ss:$8 sm:$0xf]
  %v1380 = vlaneseq
  %v1381 = vshrl.u32 %v1380, 7
  %v1382 = vsub.s32 0, %v1381
  %v1383 = vrot.slane %v1378, %v1382
  %v1384 = vlaneseq
  %v1385 = vshrl.u32 %v1384, 7
  %v1386 = vsub.s32 1, %v1385
  %v1387 = vrot.slane %v1378, %v1386
  %v1388 = vlaneseq
  %v1389 = vshrl.u32 %v1388, 7
  %v1390 = vsub.s32 2, %v1389
  %v1391 = vrot.slane %v1378, %v1390
  %v1392 = vlaneseq
  %v1393 = vshrl.u32 %v1392, 7
  %v1394 = vsub.s32 3, %v1393
  %v1395 = vrot.slane %v1378, %v1394
  %1396 = vrot.lane.b32.xlu0 %v1383, 17
  %v1397 = vpop.permute.xlu0 %1396
  %1398 = vrot.lane.b32.xlu0 %v1387, 17
  %v1399 = vpop.permute.xlu0 %1398
  %1400 = vrot.lane.b32.xlu0 %v1391, 17
  %v1401 = vpop.permute.xlu0 %1400
  %1402 = vrot.lane.b32.xlu0 %v1395, 17
  %v1403 = vpop.permute.xlu0 %1402
  %v1404 = vsel %vm172, %v1397, %v1399
  %v1405 = vsel %vm172, %v1399, %v1401
  %v1406 = vsel %vm172, %v1401, %v1403
  %v1412 = vmul.f32 %v1357, %v1397
  %v1413 = vmul.f32 %v1358, %v1404
  %v1414 = vmul.f32 %v1359, %v1405
  %v1415 = vmul.f32 %v1360, %v1406
  %v1416 = vmul.f32 %v1361, %v1403
  %v1417 = vmul.f32 %v1362, %v1397
  %v1418 = vmul.f32 %v1363, %v1404
  %v1419 = vmul.f32 %v1364, %v1405
  %v1420 = vmul.f32 %v1365, %v1406
  %v1421 = vmul.f32 %v1366, %v1403
  %v1422 = vmul.f32 %v1367, %v1397
  %v1423 = vmul.f32 %v1368, %v1404
  %v1424 = vmul.f32 %v1369, %v1405
  %v1425 = vmul.f32 %v1370, %v1406
  %v1426 = vmul.f32 %v1371, %v1403
  %v1427 = vmul.f32 %v1372, %v1397
  %v1428 = vmul.f32 %v1373, %v1404
  %v1429 = vmul.f32 %v1374, %v1405
  %v1430 = vmul.f32 %v1375, %v1406
  %v1431 = vmul.f32 %v1376, %v1403
  %1452 = vrot.lane.b32.xlu0 %v1412, 111
  %v1453 = vpop.permute.xlu0 %1452
  %1454 = vrot.lane.b32.xlu0 %v1413, 111
  %v1455 = vpop.permute.xlu0 %1454
  %1456 = vrot.lane.b32.xlu0 %v1414, 111
  %v1457 = vpop.permute.xlu0 %1456
  %1458 = vrot.lane.b32.xlu0 %v1415, 111
  %v1459 = vpop.permute.xlu0 %1458
  %1460 = vrot.lane.b32.xlu0 %v1416, 111
  %v1461 = vpop.permute.xlu0 %1460
  %1462 = vrot.lane.b32.xlu0 %v1417, 111
  %v1463 = vpop.permute.xlu0 %1462
  %1464 = vrot.lane.b32.xlu0 %v1418, 111
  %v1465 = vpop.permute.xlu0 %1464
  %1466 = vrot.lane.b32.xlu0 %v1419, 111
  %v1467 = vpop.permute.xlu0 %1466
  %1468 = vrot.lane.b32.xlu0 %v1420, 111
  %v1469 = vpop.permute.xlu0 %1468
  %1470 = vrot.lane.b32.xlu0 %v1421, 111
  %v1471 = vpop.permute.xlu0 %1470
  %1472 = vrot.lane.b32.xlu0 %v1422, 111
  %v1473 = vpop.permute.xlu0 %1472
  %1474 = vrot.lane.b32.xlu0 %v1423, 111
  %v1475 = vpop.permute.xlu0 %1474
  %1476 = vrot.lane.b32.xlu0 %v1424, 111
  %v1477 = vpop.permute.xlu0 %1476
  %1478 = vrot.lane.b32.xlu0 %v1425, 111
  %v1479 = vpop.permute.xlu0 %1478
  %1480 = vrot.lane.b32.xlu0 %v1426, 111
  %v1481 = vpop.permute.xlu0 %1480
  %1482 = vrot.lane.b32.xlu0 %v1427, 111
  %v1483 = vpop.permute.xlu0 %1482
  %1484 = vrot.lane.b32.xlu0 %v1428, 111
  %v1485 = vpop.permute.xlu0 %1484
  %1486 = vrot.lane.b32.xlu0 %v1429, 111
  %v1487 = vpop.permute.xlu0 %1486
  %1488 = vrot.lane.b32.xlu0 %v1430, 111
  %v1489 = vpop.permute.xlu0 %1488
  %1490 = vrot.lane.b32.xlu0 %v1431, 111
  %v1491 = vpop.permute.xlu0 %1490
  %v1492 = vsel %vm83, %v1453, %v1455
  %v1493 = vsel %vm83, %v1455, %v1457
  %v1494 = vsel %vm83, %v1457, %v1459
  %v1495 = vsel %vm83, %v1459, %v1461
  %v1496 = vsel %vm83, %v1463, %v1465
  %v1497 = vsel %vm83, %v1465, %v1467
  %v1498 = vsel %vm83, %v1467, %v1469
  %v1499 = vsel %vm83, %v1469, %v1471
  %v1500 = vsel %vm83, %v1473, %v1475
  %v1501 = vsel %vm83, %v1475, %v1477
  %v1502 = vsel %vm83, %v1477, %v1479
  %v1503 = vsel %vm83, %v1479, %v1481
  %v1504 = vsel %vm83, %v1483, %v1485
  %v1505 = vsel %vm83, %v1485, %v1487
  %v1506 = vsel %vm83, %v1487, %v1489
  %v1507 = vsel %vm83, %v1489, %v1491
  %1524 = vst [vmem:[#allocation3 + $0x400] sm:$0xff] %v1492
  %1525 = vst [vmem:[#allocation3 + $0x408] sm:$0xff] %v1493
  %1526 = vst [vmem:[#allocation3 + $0x410] sm:$0xff] %v1494
  %1527 = vst [vmem:[#allocation3 + $0x418] sm:$0xff] %v1495
  %1528 = vst [vmem:[#allocation3 + $0x420] sm:$0xff] %v1496
  %1529 = vst [vmem:[#allocation3 + $0x428] sm:$0xff] %v1497
  %1530 = vst [vmem:[#allocation3 + $0x430] sm:$0xff] %v1498
  %1531 = vst [vmem:[#allocation3 + $0x438] sm:$0xff] %v1499
  %1532 = vst [vmem:[#allocation3 + $0x440] sm:$0xff] %v1500
  %1533 = vst [vmem:[#allocation3 + $0x448] sm:$0xff] %v1501
  %1534 = vst [vmem:[#allocation3 + $0x450] sm:$0xff] %v1502
  %1535 = vst [vmem:[#allocation3 + $0x458] sm:$0xff] %v1503
  %1536 = vst [vmem:[#allocation3 + $0x460] sm:$0xff] %v1504
  %1537 = vst [vmem:[#allocation3 + $0x468] sm:$0xff] %v1505
  %1538 = vst [vmem:[#allocation3 + $0x470] sm:$0xff] %v1506
  %1539 = vst [vmem:[#allocation3 + $0x478] sm:$0xff] %v1507
  %v1540 = vld [vmem:[%s2] sm:$0xff]
  %v1541 = vld [vmem:[%s2 + $0x8] sm:$0xff]
  %v1542 = vld [vmem:[%s2 + $0x10] sm:$0xff]
  %v1543 = vld [vmem:[%s2 + $0x18] sm:$0xff]
  %v1544 = vld [vmem:[%s2 + $0x20] sm:$0xff]
  %v1545 = vld [vmem:[%s2 + $0x28] sm:$0xff]
  %v1546 = vld [vmem:[%s2 + $0x30] sm:$0xff]
  %v1547 = vld [vmem:[%s2 + $0x38] sm:$0xff]
  %v1548 = vld [vmem:[%s2 + $0x40] sm:$0xff]
  %v1549 = vld [vmem:[%s2 + $0x48] sm:$0xff]
  %v1550 = vld [vmem:[%s2 + $0x50] sm:$0xff]
  %v1551 = vld [vmem:[%s2 + $0x58] sm:$0xff]
  %v1552 = vld [vmem:[#allocation3] sm:$0xff]
  %v1553 = vld [vmem:[#allocation3 + $0x8] sm:$0xff]
  %v1554 = vld [vmem:[#allocation3 + $0x10] sm:$0xff]
  %v1555 = vld [vmem:[#allocation3 + $0x18] sm:$0xff]
  %v1556 = vld [vmem:[#allocation3 + $0x20] sm:$0xff]
  %v1557 = vld [vmem:[#allocation3 + $0x28] sm:$0xff]
  %v1558 = vld [vmem:[#allocation3 + $0x30] sm:$0xff]
  %v1559 = vld [vmem:[#allocation3 + $0x38] sm:$0xff]
  %v1560 = vld [vmem:[#allocation3 + $0x40] sm:$0xff]
  %v1561 = vld [vmem:[#allocation3 + $0x48] sm:$0xff]
  %v1562 = vld [vmem:[#allocation3 + $0x50] sm:$0xff]
  %v1563 = vld [vmem:[#allocation3 + $0x58] sm:$0xff]
  %v1564 = vld [vmem:[#allocation3 + $0x60] sm:$0xff]
  %v1565 = vld [vmem:[#allocation3 + $0x68] sm:$0xff]
  %v1566 = vld [vmem:[#allocation3 + $0x70] sm:$0xff]
  %v1567 = vld [vmem:[#allocation3 + $0x78] sm:$0xff]
  %v1568 = vld [vmem:[#allocation3 + $0x80] sm:$0xff]
  %v1569 = vld [vmem:[#allocation3 + $0x88] sm:$0xff]
  %v1570 = vld [vmem:[#allocation3 + $0x90] sm:$0xff]
  %v1571 = vld [vmem:[#allocation3 + $0x98] sm:$0xff]
  %v1572 = vld [vmem:[#allocation3 + $0xa0] sm:$0xff]
  %v1573 = vld [vmem:[#allocation3 + $0xa8] sm:$0xff]
  %v1574 = vld [vmem:[#allocation3 + $0xb0] sm:$0xff]
  %v1575 = vld [vmem:[#allocation3 + $0xb8] sm:$0xff]
  %v1576 = vld [vmem:[#allocation3 + $0xc0] sm:$0xff]
  %v1577 = vld [vmem:[#allocation3 + $0xc8] sm:$0xff]
  %v1578 = vld [vmem:[#allocation3 + $0xd0] sm:$0xff]
  %v1579 = vld [vmem:[#allocation3 + $0xd8] sm:$0xff]
  %v1580 = vld [vmem:[#allocation3 + $0xe0] sm:$0xff]
  %v1581 = vld [vmem:[#allocation3 + $0xe8] sm:$0xff]
  %v1582 = vld [vmem:[#allocation3 + $0xf0] sm:$0xff]
  %v1583 = vld [vmem:[#allocation3 + $0xf8] sm:$0xff]
  %v1584 = vld [vmem:[#allocation3 + $0x100] sm:$0xff]
  %v1585 = vld [vmem:[#allocation3 + $0x108] sm:$0xff]
  %v1586 = vld [vmem:[#allocation3 + $0x110] sm:$0xff]
  %v1587 = vld [vmem:[#allocation3 + $0x118] sm:$0xff]
  %v1588 = vld [vmem:[#allocation3 + $0x120] sm:$0xff]
  %v1589 = vld [vmem:[#allocation3 + $0x128] sm:$0xff]
  %v1590 = vld [vmem:[#allocation3 + $0x130] sm:$0xff]
  %v1591 = vld [vmem:[#allocation3 + $0x138] sm:$0xff]
  %v1592 = vld [vmem:[#allocation3 + $0x140] sm:$0xff]
  %v1593 = vld [vmem:[#allocation3 + $0x148] sm:$0xff]
  %v1594 = vld [vmem:[#allocation3 + $0x150] sm:$0xff]
  %v1595 = vld [vmem:[#allocation3 + $0x158] sm:$0xff]
  %v1596 = vld [vmem:[#allocation3 + $0x160] sm:$0xff]
  %v1597 = vld [vmem:[#allocation3 + $0x168] sm:$0xff]
  %v1598 = vld [vmem:[#allocation3 + $0x170] sm:$0xff]
  %v1599 = vld [vmem:[#allocation3 + $0x178] sm:$0xff]
  %v1600 = vld [vmem:[#allocation3 + $0x180] sm:$0xff]
  %v1601 = vld [vmem:[#allocation3 + $0x188] sm:$0xff]
  %v1602 = vld [vmem:[#allocation3 + $0x190] sm:$0xff]
  %v1603 = vld [vmem:[#allocation3 + $0x198] sm:$0xff]
  %v1604 = vld [vmem:[#allocation3 + $0x1a0] sm:$0xff]
  %v1605 = vld [vmem:[#allocation3 + $0x1a8] sm:$0xff]
  %v1606 = vld [vmem:[#allocation3 + $0x1b0] sm:$0xff]
  %v1607 = vld [vmem:[#allocation3 + $0x1b8] sm:$0xff]
  %v1608 = vld [vmem:[#allocation3 + $0x1c0] sm:$0xff]
  %v1609 = vld [vmem:[#allocation3 + $0x1c8] sm:$0xff]
  %v1610 = vld [vmem:[#allocation3 + $0x1d0] sm:$0xff]
  %v1611 = vld [vmem:[#allocation3 + $0x1d8] sm:$0xff]
  %v1612 = vld [vmem:[#allocation3 + $0x1e0] sm:$0xff]
  %v1613 = vld [vmem:[#allocation3 + $0x1e8] sm:$0xff]
  %v1614 = vld [vmem:[#allocation3 + $0x1f0] sm:$0xff]
  %v1615 = vld [vmem:[#allocation3 + $0x1f8] sm:$0xff]
  %v1616 = vld [vmem:[#allocation3 + $0x200] sm:$0xff]
  %v1617 = vld [vmem:[#allocation3 + $0x208] sm:$0xff]
  %v1618 = vld [vmem:[#allocation3 + $0x210] sm:$0xff]
  %v1619 = vld [vmem:[#allocation3 + $0x218] sm:$0xff]
  %v1620 = vld [vmem:[#allocation3 + $0x220] sm:$0xff]
  %v1621 = vld [vmem:[#allocation3 + $0x228] sm:$0xff]
  %v1622 = vld [vmem:[#allocation3 + $0x230] sm:$0xff]
  %v1623 = vld [vmem:[#allocation3 + $0x238] sm:$0xff]
  %v1624 = vld [vmem:[#allocation3 + $0x240] sm:$0xff]
  %v1625 = vld [vmem:[#allocation3 + $0x248] sm:$0xff]
  %v1626 = vld [vmem:[#allocation3 + $0x250] sm:$0xff]
  %v1627 = vld [vmem:[#allocation3 + $0x258] sm:$0xff]
  %v1628 = vld [vmem:[#allocation3 + $0x260] sm:$0xff]
  %v1629 = vld [vmem:[#allocation3 + $0x268] sm:$0xff]
  %v1630 = vld [vmem:[#allocation3 + $0x270] sm:$0xff]
  %v1631 = vld [vmem:[#allocation3 + $0x278] sm:$0xff]
  %v1632 = vld [vmem:[#allocation3 + $0x280] sm:$0xff]
  %v1633 = vld [vmem:[#allocation3 + $0x288] sm:$0xff]
  %v1634 = vld [vmem:[#allocation3 + $0x290] sm:$0xff]
  %v1635 = vld [vmem:[#allocation3 + $0x298] sm:$0xff]
  %v1636 = vld [vmem:[#allocation3 + $0x2a0] sm:$0xff]
  %v1637 = vld [vmem:[#allocation3 + $0x2a8] sm:$0xff]
  %v1638 = vld [vmem:[#allocation3 + $0x2b0] sm:$0xff]
  %v1639 = vld [vmem:[#allocation3 + $0x2b8] sm:$0xff]
  %v1640 = vld [vmem:[#allocation3 + $0x2c0] sm:$0xff]
  %v1641 = vld [vmem:[#allocation3 + $0x2c8] sm:$0xff]
  %v1642 = vld [vmem:[#allocation3 + $0x2d0] sm:$0xff]
  %v1643 = vld [vmem:[#allocation3 + $0x2d8] sm:$0xff]
  %v1644 = vld [vmem:[#allocation3 + $0x2e0] sm:$0xff]
  %v1645 = vld [vmem:[#allocation3 + $0x2e8] sm:$0xff]
  %v1646 = vld [vmem:[#allocation3 + $0x2f0] sm:$0xff]
  %v1647 = vld [vmem:[#allocation3 + $0x2f8] sm:$0xff]
  %v1648 = vld [vmem:[#allocation3 + $0x300] sm:$0xff]
  %v1649 = vld [vmem:[#allocation3 + $0x308] sm:$0xff]
  %v1650 = vld [vmem:[#allocation3 + $0x310] sm:$0xff]
  %v1651 = vld [vmem:[#allocation3 + $0x318] sm:$0xff]
  %v1652 = vld [vmem:[#allocation3 + $0x320] sm:$0xff]
  %v1653 = vld [vmem:[#allocation3 + $0x328] sm:$0xff]
  %v1654 = vld [vmem:[#allocation3 + $0x330] sm:$0xff]
  %v1655 = vld [vmem:[#allocation3 + $0x338] sm:$0xff]
  %v1656 = vld [vmem:[#allocation3 + $0x340] sm:$0xff]
  %v1657 = vld [vmem:[#allocation3 + $0x348] sm:$0xff]
  %v1658 = vld [vmem:[#allocation3 + $0x350] sm:$0xff]
  %v1659 = vld [vmem:[#allocation3 + $0x358] sm:$0xff]
  %v1660 = vld [vmem:[#allocation3 + $0x360] sm:$0xff]
  %v1661 = vld [vmem:[#allocation3 + $0x368] sm:$0xff]
  %v1662 = vld [vmem:[#allocation3 + $0x370] sm:$0xff]
  %v1663 = vld [vmem:[#allocation3 + $0x378] sm:$0xff]
  %v1664 = vld [vmem:[#allocation3 + $0x380] sm:$0xff]
  %v1665 = vld [vmem:[#allocation3 + $0x388] sm:$0xff]
  %v1666 = vld [vmem:[#allocation3 + $0x390] sm:$0xff]
  %v1667 = vld [vmem:[#allocation3 + $0x398] sm:$0xff]
  %v1668 = vld [vmem:[#allocation3 + $0x3a0] sm:$0xff]
  %v1669 = vld [vmem:[#allocation3 + $0x3a8] sm:$0xff]
  %v1670 = vld [vmem:[#allocation3 + $0x3b0] sm:$0xff]
  %v1671 = vld [vmem:[#allocation3 + $0x3b8] sm:$0xff]
  %v1672 = vld [vmem:[#allocation3 + $0x3c0] sm:$0xff]
  %v1673 = vld [vmem:[#allocation3 + $0x3c8] sm:$0xff]
  %v1674 = vld [vmem:[#allocation3 + $0x3d0] sm:$0xff]
  %v1675 = vld [vmem:[#allocation3 + $0x3d8] sm:$0xff]
  %v1676 = vld [vmem:[#allocation3 + $0x3e0] sm:$0xff]
  %v1677 = vld [vmem:[#allocation3 + $0x3e8] sm:$0xff]
  %v1678 = vld [vmem:[#allocation3 + $0x3f0] sm:$0xff]
  %v1679 = vld [vmem:[#allocation3 + $0x3f8] sm:$0xff]
  %v1680 = vld [vmem:[#allocation3 + $0x400] sm:$0xff]
  %v1681 = vld [vmem:[#allocation3 + $0x408] sm:$0xff]
  %v1682 = vld [vmem:[#allocation3 + $0x410] sm:$0xff]
  %v1683 = vld [vmem:[#allocation3 + $0x418] sm:$0xff]
  %v1684 = vld [vmem:[#allocation3 + $0x420] sm:$0xff]
  %v1685 = vld [vmem:[#allocation3 + $0x428] sm:$0xff]
  %v1686 = vld [vmem:[#allocation3 + $0x430] sm:$0xff]
  %v1687 = vld [vmem:[#allocation3 + $0x438] sm:$0xff]
  %v1688 = vld [vmem:[#allocation3 + $0x440] sm:$0xff]
  %v1689 = vld [vmem:[#allocation3 + $0x448] sm:$0xff]
  %v1690 = vld [vmem:[#allocation3 + $0x450] sm:$0xff]
  %v1691 = vld [vmem:[#allocation3 + $0x458] sm:$0xff]
  %v1692 = vld [vmem:[#allocation3 + $0x460] sm:$0xff]
  %v1693 = vld [vmem:[#allocation3 + $0x468] sm:$0xff]
  %v1694 = vld [vmem:[#allocation3 + $0x470] sm:$0xff]
  %v1695 = vld [vmem:[#allocation3 + $0x478] sm:$0xff]
  %vm1696 = vcmask 261120
  %v1698 = vsel %vm1696, %v1542, 0
  %v1701 = vsel %vm1696, %v1545, 0
  %v1704 = vsel %vm1696, %v1548, 0
  %v1707 = vsel %vm1696, %v1551, 0
  %1709 = vmatprep.subr.mxu0 %v1553
  %1710 = vmatpush1.msra.mxu0 %v1552
  %1711 = vmatprep.subr.mxu0 %v1557
  %1712 = vmatpush1.msra.mxu0 %v1556
  %1713 = vmatprep.subr.mxu0 %v1561
  %1714 = vmatpush1.msra.mxu0 %v1560
  %1715 = vmatprep.subr.mxu0 %v1565
  %1716 = vmatpush1.msra.mxu0 %v1564
  %1717 = vmatprep.subr.mxu0 %v1569
  %1718 = vmatpush1.msra.mxu0 %v1568
  %1719 = vmatprep.subr.mxu0 %v1573
  %1720 = vmatpush1.msra.mxu0 %v1572
  %1721 = vmatprep.subr.mxu0 %v1577
  %1722 = vmatpush1.msra.mxu0 %v1576
  %1723 = vmatprep.subr.mxu0 %v1581
  %1724 = vmatpush1.msra.mxu0 %v1580
  %1725 = vmatprep.subr.mxu0 %v1585
  %1726 = vmatpush1.msra.mxu0 %v1584
  %1727 = vmatprep.subr.mxu0 %v1589
  %1728 = vmatpush1.msra.mxu0 %v1588
  %1729 = vmatprep.subr.mxu0 %v1593
  %1730 = vmatpush1.msra.mxu0 %v1592
  %1731 = vmatprep.subr.mxu0 %v1597
  %1732 = vmatpush1.msra.mxu0 %v1596
  %1733 = vmatprep.subr.mxu0 %v1601
  %1734 = vmatpush1.msra.mxu0 %v1600
  %1735 = vmatprep.subr.mxu0 %v1605
  %1736 = vmatpush1.msra.mxu0 %v1604
  %1737 = vmatprep.subr.mxu0 %v1609
  %1738 = vmatpush1.msra.mxu0 %v1608
  %1739 = vmatprep.subr.mxu0 %v1613
  %1740 = vmatpush1.msra.mxu0 %v1612
  %1741 = vmatprep.subr.mxu0 %v1617
  %1742 = vmatpush1.msra.mxu0 %v1616
  %1743 = vmatprep.subr.mxu0 %v1621
  %1744 = vmatpush1.msra.mxu0 %v1620
  %1745 = vmatprep.subr.mxu0 %v1625
  %1746 = vmatpush1.msra.mxu0 %v1624
  %1747 = vmatprep.subr.mxu0 %v1629
  %1748 = vmatpush1.msra.mxu0 %v1628
  %1749 = vmatprep.subr.mxu0 %v1633
  %1750 = vmatpush1.msra.mxu0 %v1632
  %1751 = vmatprep.subr.mxu0 %v1637
  %1752 = vmatpush1.msra.mxu0 %v1636
  %1753 = vmatprep.subr.mxu0 %v1641
  %1754 = vmatpush1.msra.mxu0 %v1640
  %1755 = vmatprep.subr.mxu0 %v1645
  %1756 = vmatpush1.msra.mxu0 %v1644
  %1757 = vmatprep.subr.mxu0 %v1649
  %1758 = vmatpush1.msra.mxu0 %v1648
  %1759 = vmatprep.subr.mxu0 %v1653
  %1760 = vmatpush1.msra.mxu0 %v1652
  %1761 = vmatprep.subr.mxu0 %v1657
  %1762 = vmatpush1.msra.mxu0 %v1656
  %1763 = vmatprep.subr.mxu0 %v1661
  %1764 = vmatpush1.msra.mxu0 %v1660
  %1765 = vmatprep.subr.mxu0 %v1665
  %1766 = vmatpush1.msra.mxu0 %v1664
  %1767 = vmatprep.subr.mxu0 %v1669
  %1768 = vmatpush1.msra.mxu0 %v1668
  %1769 = vmatprep.subr.mxu0 %v1673
  %1770 = vmatpush1.msra.mxu0 %v1672
  %1771 = vmatprep.subr.mxu0 %v1677
  %1772 = vmatpush1.msra.mxu0 %v1676
  %1773 = vmatprep.mubr.f32.mxu0 %v1541
  %1774 = vmatmul.mubr.f32.gmra.mrb[0].mxu0 %v1540
  %v1775 = vpop.f32.mrb[0].mxu0
  %v1776 = vadd.f32 0.0, %v1775
  %v1777 = vpop.f32.mrb[0].mxu0
  %v1778 = vadd.f32 0.0, %v1777
  %1779 = vmatprep.mubr.f32.mxu0 %v1544
  %1780 = vmatmul.mubr.f32.gmra.mrb[0].mxu0 %v1543
  %v1781 = vpop.f32.mrb[0].mxu0
  %v1782 = vadd.f32 0.0, %v1781
  %v1783 = vpop.f32.mrb[0].mxu0
  %v1784 = vadd.f32 0.0, %v1783
  %1785 = vmatprep.mubr.f32.mxu0 %v1547
  %1786 = vmatmul.mubr.f32.gmra.mrb[0].mxu0 %v1546
  %v1787 = vpop.f32.mrb[0].mxu0
  %v1788 = vadd.f32 0.0, %v1787
  %v1789 = vpop.f32.mrb[0].mxu0
  %v1790 = vadd.f32 0.0, %v1789
  %1791 = vmatprep.mubr.f32.mxu0 %v1550
  %1792 = vmatmul.mubr.f32.gmra.mrb[0].mxu0 %v1549
  %v1793 = vpop.f32.mrb[0].mxu0
  %v1794 = vadd.f32 0.0, %v1793
  %v1795 = vpop.f32.mrb[0].mxu0
  %v1796 = vadd.f32 0.0, %v1795
  %1797 = vdwg.mxu0
  %1798 = vmatprep.subr.mxu0 %v1681
  %1799 = vmatpush1.msra.mxu0 %v1680
  %1800 = vmatprep.subr.mxu0 %v1685
  %1801 = vmatpush1.msra.mxu0 %v1684
  %1802 = vmatprep.subr.mxu0 %v1689
  %1803 = vmatpush1.msra.mxu0 %v1688
  %1804 = vmatprep.subr.mxu0 %v1693
  %1805 = vmatpush1.msra.mxu0 %v1692
  %1806 = vmatprep.subr.mxu0 0.0
  %1807 = vmatpush1.msra.mxu0 0.0
  %1808 = vmatprep.subr.mxu0 0.0
  %1809 = vmatpush1.msra.mxu0 0.0
  %1810 = vmatprep.subr.mxu0 0.0
  %1811 = vmatpush1.msra.mxu0 0.0
  %1812 = vmatprep.subr.mxu0 0.0
  %1813 = vmatpush1.msra.mxu0 0.0
  %1814 = vmatprep.subr.mxu0 0.0
  %1815 = vmatpush1.msra.mxu0 0.0
  %1816 = vmatprep.subr.mxu0 0.0
  %1817 = vmatpush1.msra.mxu0 0.0
  %1818 = vmatprep.subr.mxu0 0.0
  %1819 = vmatpush1.msra.mxu0 0.0
  %1820 = vmatprep.subr.mxu0 0.0
  %1821 = vmatpush1.msra.mxu0 0.0
  %1822 = vmatprep.subr.mxu0 0.0
  %1823 = vmatpush1.msra.mxu0 0.0
  %1824 = vmatprep.subr.mxu0 0.0
  %1825 = vmatpush1.msra.mxu0 0.0
  %1826 = vmatprep.subr.mxu0 0.0
  %1827 = vmatpush1.msra.mxu0 0.0
  %1828 = vmatprep.subr.mxu0 0.0
  %1829 = vmatpush1.msra.mxu0 0.0
  %1830 = vmatprep.subr.mxu0 0.0
  %1831 = vmatpush1.msra.mxu0 0.0
  %1832 = vmatprep.subr.mxu0 0.0
  %1833 = vmatpush1.msra.mxu0 0.0
  %1834 = vmatprep.subr.mxu0 0.0
  %1835 = vmatpush1.msra.mxu0 0.0
  %1836 = vmatprep.subr.mxu0 0.0
  %1837 = vmatpush1.msra.mxu0 0.0
  %1838 = vmatprep.subr.mxu0 0.0
  %1839 = vmatpush1.msra.mxu0 0.0
  %1840 = vmatprep.subr.mxu0 0.0
  %1841 = vmatpush1.msra.mxu0 0.0
  %1842 = vmatprep.subr.mxu0 0.0
  %1843 = vmatpush1.msra.mxu0 0.0
  %1844 = vmatprep.subr.mxu0 0.0
  %1845 = vmatpush1.msra.mxu0 0.0
  %1846 = vmatprep.subr.mxu0 0.0
  %1847 = vmatpush1.msra.mxu0 0.0
  %1848 = vmatprep.subr.mxu0 0.0
  %1849 = vmatpush1.msra.mxu0 0.0
  %1850 = vmatprep.subr.mxu0 0.0
  %1851 = vmatpush1.msra.mxu0 0.0
  %1852 = vmatprep.subr.mxu0 0.0
  %1853 = vmatpush1.msra.mxu0 0.0
  %1854 = vmatprep.subr.mxu0 0.0
  %1855 = vmatpush1.msra.mxu0 0.0
  %1856 = vmatprep.subr.mxu0 0.0
  %1857 = vmatpush1.msra.mxu0 0.0
  %1858 = vmatprep.subr.mxu0 0.0
  %1859 = vmatpush1.msra.mxu0 0.0
  %1860 = vmatprep.subr.mxu0 0.0
  %1861 = vmatpush1.msra.mxu0 0.0
  %1862 = vmatprep.mubr.f32.mxu0 0.0
  %1863 = vmatmul.mubr.f32.gmra.mrb[0].mxu0 %v1698
  %v1864 = vpop.f32.mrb[0].mxu0
  %v1865 = vadd.f32 %v1776, %v1864
  %v1866 = vpop.f32.mrb[0].mxu0
  %v1867 = vadd.f32 %v1778, %v1866
  %1868 = vmatprep.mubr.f32.mxu0 0.0
  %1869 = vmatmul.mubr.f32.gmra.mrb[0].mxu0 %v1701
  %v1870 = vpop.f32.mrb[0].mxu0
  %v1871 = vadd.f32 %v1782, %v1870
  %v1872 = vpop.f32.mrb[0].mxu0
  %v1873 = vadd.f32 %v1784, %v1872
  %1874 = vmatprep.mubr.f32.mxu0 0.0
  %1875 = vmatmul.mubr.f32.gmra.mrb[0].mxu0 %v1704
  %v1876 = vpop.f32.mrb[0].mxu0
  %v1877 = vadd.f32 %v1788, %v1876
  %v1878 = vpop.f32.mrb[0].mxu0
  %v1879 = vadd.f32 %v1790, %v1878
  %1880 = vmatprep.mubr.f32.mxu0 0.0
  %1881 = vmatmul.mubr.f32.gmra.mrb[0].mxu0 %v1707
  %v1882 = vpop.f32.mrb[0].mxu0
  %v1883 = vadd.f32 %v1794, %v1882
  %v1884 = vpop.f32.mrb[0].mxu0
  %v1885 = vadd.f32 %v1796, %v1884
  %1886 = vdwg.mxu0
  %1887 = vmatprep.subr.mxu0 %v1555
  %1888 = vmatpush1.msra.mxu0 %v1554
  %1889 = vmatprep.subr.mxu0 %v1559
  %1890 = vmatpush1.msra.mxu0 %v1558
  %1891 = vmatprep.subr.mxu0 %v1563
  %1892 = vmatpush1.msra.mxu0 %v1562
  %1893 = vmatprep.subr.mxu0 %v1567
  %1894 = vmatpush1.msra.mxu0 %v1566
  %1895 = vmatprep.subr.mxu0 %v1571
  %1896 = vmatpush1.msra.mxu0 %v1570
  %1897 = vmatprep.subr.mxu0 %v1575
  %1898 = vmatpush1.msra.mxu0 %v1574
  %1899 = vmatprep.subr.mxu0 %v1579
  %1900 = vmatpush1.msra.mxu0 %v1578
  %1901 = vmatprep.subr.mxu0 %v1583
  %1902 = vmatpush1.msra.mxu0 %v1582
  %1903 = vmatprep.subr.mxu0 %v1587
  %1904 = vmatpush1.msra.mxu0 %v1586
  %1905 = vmatprep.subr.mxu0 %v1591
  %1906 = vmatpush1.msra.mxu0 %v1590
  %1907 = vmatprep.subr.mxu0 %v1595
  %1908 = vmatpush1.msra.mxu0 %v1594
  %1909 = vmatprep.subr.mxu0 %v1599
  %1910 = vmatpush1.msra.mxu0 %v1598
  %1911 = vmatprep.subr.mxu0 %v1603
  %1912 = vmatpush1.msra.mxu0 %v1602
  %1913 = vmatprep.subr.mxu0 %v1607
  %1914 = vmatpush1.msra.mxu0 %v1606
  %1915 = vmatprep.subr.mxu0 %v1611
  %1916 = vmatpush1.msra.mxu0 %v1610
  %1917 = vmatprep.subr.mxu0 %v1615
  %1918 = vmatpush1.msra.mxu0 %v1614
  %1919 = vmatprep.subr.mxu0 %v1619
  %1920 = vmatpush1.msra.mxu0 %v1618
  %1921 = vmatprep.subr.mxu0 %v1623
  %1922 = vmatpush1.msra.mxu0 %v1622
  %1923 = vmatprep.subr.mxu0 %v1627
  %1924 = vmatpush1.msra.mxu0 %v1626
  %1925 = vmatprep.subr.mxu0 %v1631
  %1926 = vmatpush1.msra.mxu0 %v1630
  %1927 = vmatprep.subr.mxu0 %v1635
  %1928 = vmatpush1.msra.mxu0 %v1634
  %1929 = vmatprep.subr.mxu0 %v1639
  %1930 = vmatpush1.msra.mxu0 %v1638
  %1931 = vmatprep.subr.mxu0 %v1643
  %1932 = vmatpush1.msra.mxu0 %v1642
  %1933 = vmatprep.subr.mxu0 %v1647
  %1934 = vmatpush1.msra.mxu0 %v1646
  %1935 = vmatprep.subr.mxu0 %v1651
  %1936 = vmatpush1.msra.mxu0 %v1650
  %1937 = vmatprep.subr.mxu0 %v1655
  %1938 = vmatpush1.msra.mxu0 %v1654
  %1939 = vmatprep.subr.mxu0 %v1659
  %1940 = vmatpush1.msra.mxu0 %v1658
  %1941 = vmatprep.subr.mxu0 %v1663
  %1942 = vmatpush1.msra.mxu0 %v1662
  %1943 = vmatprep.subr.mxu0 %v1667
  %1944 = vmatpush1.msra.mxu0 %v1666
  %1945 = vmatprep.subr.mxu0 %v1671
  %1946 = vmatpush1.msra.mxu0 %v1670
  %1947 = vmatprep.subr.mxu0 %v1675
  %1948 = vmatpush1.msra.mxu0 %v1674
  %1949 = vmatprep.subr.mxu0 %v1679
  %1950 = vmatpush1.msra.mxu0 %v1678
  %1951 = vmatprep.mubr.f32.mxu0 %v1541
  %1952 = vmatmul.mubr.f32.gmra.mrb[0].mxu0 %v1540
  %v1953 = vpop.f32.mrb[0].mxu0
  %v1954 = vadd.f32 0.0, %v1953
  %v1955 = vpop.f32.mrb[0].mxu0
  %v1956 = vadd.f32 0.0, %v1955
  %1957 = vmatprep.mubr.f32.mxu0 %v1544
  %1958 = vmatmul.mubr.f32.gmra.mrb[0].mxu0 %v1543
  %v1959 = vpop.f32.mrb[0].mxu0
  %v1960 = vadd.f32 0.0, %v1959
  %v1961 = vpop.f32.mrb[0].mxu0
  %v1962 = vadd.f32 0.0, %v1961
  %1963 = vmatprep.mubr.f32.mxu0 %v1547
  %1964 = vmatmul.mubr.f32.gmra.mrb[0].mxu0 %v1546
  %v1965 = vpop.f32.mrb[0].mxu0
  %v1966 = vadd.f32 0.0, %v1965
  %v1967 = vpop.f32.mrb[0].mxu0
  %v1968 = vadd.f32 0.0, %v1967
  %1969 = vmatprep.mubr.f32.mxu0 %v1550
  %1970 = vmatmul.mubr.f32.gmra.mrb[0].mxu0 %v1549
  %v1971 = vpop.f32.mrb[0].mxu0
  %v1972 = vadd.f32 0.0, %v1971
  %v1973 = vpop.f32.mrb[0].mxu0
  %v1974 = vadd.f32 0.0, %v1973
  %1975 = vdwg.mxu0
  %1976 = vmatprep.subr.mxu0 %v1683
  %1977 = vmatpush1.msra.mxu0 %v1682
  %1978 = vmatprep.subr.mxu0 %v1687
  %1979 = vmatpush1.msra.mxu0 %v1686
  %1980 = vmatprep.subr.mxu0 %v1691
  %1981 = vmatpush1.msra.mxu0 %v1690
  %1982 = vmatprep.subr.mxu0 %v1695
  %1983 = vmatpush1.msra.mxu0 %v1694
  %1984 = vmatprep.subr.mxu0 0.0
  %1985 = vmatpush1.msra.mxu0 0.0
  %1986 = vmatprep.subr.mxu0 0.0
  %1987 = vmatpush1.msra.mxu0 0.0
  %1988 = vmatprep.subr.mxu0 0.0
  %1989 = vmatpush1.msra.mxu0 0.0
  %1990 = vmatprep.subr.mxu0 0.0
  %1991 = vmatpush1.msra.mxu0 0.0
  %1992 = vmatprep.subr.mxu0 0.0
  %1993 = vmatpush1.msra.mxu0 0.0
  %1994 = vmatprep.subr.mxu0 0.0
  %1995 = vmatpush1.msra.mxu0 0.0
  %1996 = vmatprep.subr.mxu0 0.0
  %1997 = vmatpush1.msra.mxu0 0.0
  %1998 = vmatprep.subr.mxu0 0.0
  %1999 = vmatpush1.msra.mxu0 0.0
  %2000 = vmatprep.subr.mxu0 0.0
  %2001 = vmatpush1.msra.mxu0 0.0
  %2002 = vmatprep.subr.mxu0 0.0
  %2003 = vmatpush1.msra.mxu0 0.0
  %2004 = vmatprep.subr.mxu0 0.0
  %2005 = vmatpush1.msra.mxu0 0.0
  %2006 = vmatprep.subr.mxu0 0.0
  %2007 = vmatpush1.msra.mxu0 0.0
  %2008 = vmatprep.subr.mxu0 0.0
  %2009 = vmatpush1.msra.mxu0 0.0
  %2010 = vmatprep.subr.mxu0 0.0
  %2011 = vmatpush1.msra.mxu0 0.0
  %2012 = vmatprep.subr.mxu0 0.0
  %2013 = vmatpush1.msra.mxu0 0.0
  %2014 = vmatprep.subr.mxu0 0.0
  %2015 = vmatpush1.msra.mxu0 0.0
  %2016 = vmatprep.subr.mxu0 0.0
  %2017 = vmatpush1.msra.mxu0 0.0
  %2018 = vmatprep.subr.mxu0 0.0
  %2019 = vmatpush1.msra.mxu0 0.0
  %2020 = vmatprep.subr.mxu0 0.0
  %2021 = vmatpush1.msra.mxu0 0.0
  %2022 = vmatprep.subr.mxu0 0.0
  %2023 = vmatpush1.msra.mxu0 0.0
  %2024 = vmatprep.subr.mxu0 0.0
  %2025 = vmatpush1.msra.mxu0 0.0
  %2026 = vmatprep.subr.mxu0 0.0
  %2027 = vmatpush1.msra.mxu0 0.0
  %2028 = vmatprep.subr.mxu0 0.0
  %2029 = vmatpush1.msra.mxu0 0.0
  %2030 = vmatprep.subr.mxu0 0.0
  %2031 = vmatpush1.msra.mxu0 0.0
  %2032 = vmatprep.subr.mxu0 0.0
  %2033 = vmatpush1.msra.mxu0 0.0
  %2034 = vmatprep.subr.mxu0 0.0
  %2035 = vmatpush1.msra.mxu0 0.0
  %2036 = vmatprep.subr.mxu0 0.0
  %2037 = vmatpush1.msra.mxu0 0.0
  %2038 = vmatprep.subr.mxu0 0.0
  %2039 = vmatpush1.msra.mxu0 0.0
  %2040 = vmatprep.mubr.f32.mxu0 0.0
  %2041 = vmatmul.mubr.f32.gmra.mrb[0].mxu0 %v1698
  %v2042 = vpop.f32.mrb[0].mxu0
  %v2043 = vadd.f32 %v1954, %v2042
  %v2044 = vpop.f32.mrb[0].mxu0
  %v2045 = vadd.f32 %v1956, %v2044
  %2046 = vmatprep.mubr.f32.mxu0 0.0
  %2047 = vmatmul.mubr.f32.gmra.mrb[0].mxu0 %v1701
  %v2048 = vpop.f32.mrb[0].mxu0
  %v2049 = vadd.f32 %v1960, %v2048
  %v2050 = vpop.f32.mrb[0].mxu0
  %v2051 = vadd.f32 %v1962, %v2050
  %2052 = vmatprep.mubr.f32.mxu0 0.0
  %2053 = vmatmul.mubr.f32.gmra.mrb[0].mxu0 %v1704
  %v2054 = vpop.f32.mrb[0].mxu0
  %v2055 = vadd.f32 %v1966, %v2054
  %v2056 = vpop.f32.mrb[0].mxu0
  %v2057 = vadd.f32 %v1968, %v2056
  %2058 = vmatprep.mubr.f32.mxu0 0.0
  %2059 = vmatmul.mubr.f32.gmra.mrb[0].mxu0 %v1707
  %v2060 = vpop.f32.mrb[0].mxu0
  %v2061 = vadd.f32 %v1972, %v2060
  %v2062 = vpop.f32.mrb[0].mxu0
  %v2063 = vadd.f32 %v1974, %v2062
  %2064 = vdwg.mxu0
  %v2065 = vadd.f32 %v1865, %v1867
  %v2066 = vadd.f32 %v2065, %v2043
  %v2067 = vadd.f32 %v2066, %v2045
  %2068 = vadd.xlane.f32.xlu0 %v2067
  %v2069 = vpop.xlane.xlu0 %2068
  %v2070 = vadd.f32 %v1871, %v1873
  %v2071 = vadd.f32 %v2070, %v2049
  %v2072 = vadd.f32 %v2071, %v2051
  %2073 = vadd.xlane.f32.xlu0 %v2072
  %v2074 = vpop.xlane.xlu0 %2073
  %v2075 = vadd.f32 %v1877, %v1879
  %v2076 = vadd.f32 %v2075, %v2055
  %v2077 = vadd.f32 %v2076, %v2057
  %2078 = vadd.xlane.f32.xlu0 %v2077
  %v2079 = vpop.xlane.xlu0 %2078
  %v2080 = vadd.f32 %v1883, %v1885
  %v2081 = vadd.f32 %v2080, %v2061
  %v2082 = vadd.f32 %v2081, %v2063
  %2083 = vadd.xlane.f32.xlu0 %v2082
  %v2084 = vpop.xlane.xlu0 %2083
  %v2085 = vmul.f32 %v1865, %v1865
  %v2086 = vmul.f32 %v1867, %v1867
  %v2087 = vmul.f32 %v2043, %v2043
  %v2088 = vmul.f32 %v2045, %v2045
  %v2089 = vmul.f32 %v1871, %v1871
  %v2090 = vmul.f32 %v1873, %v1873
  %v2091 = vmul.f32 %v2049, %v2049
  %v2092 = vmul.f32 %v2051, %v2051
  %v2093 = vmul.f32 %v1877, %v1877
  %v2094 = vmul.f32 %v1879, %v1879
  %v2095 = vmul.f32 %v2055, %v2055
  %v2096 = vmul.f32 %v2057, %v2057
  %v2097 = vmul.f32 %v1883, %v1883
  %v2098 = vmul.f32 %v1885, %v1885
  %v2099 = vmul.f32 %v2061, %v2061
  %v2100 = vmul.f32 %v2063, %v2063
  %v2101 = vadd.f32 %v2085, %v2086
  %v2102 = vadd.f32 %v2101, %v2087
  %v2103 = vadd.f32 %v2102, %v2088
  %2104 = vadd.xlane.f32.xlu0 %v2103
  %v2105 = vpop.xlane.xlu0 %2104
  %v2106 = vadd.f32 %v2089, %v2090
  %v2107 = vadd.f32 %v2106, %v2091
  %v2108 = vadd.f32 %v2107, %v2092
  %2109 = vadd.xlane.f32.xlu0 %v2108
  %v2110 = vpop.xlane.xlu0 %2109
  %v2111 = vadd.f32 %v2093, %v2094
  %v2112 = vadd.f32 %v2111, %v2095
  %v2113 = vadd.f32 %v2112, %v2096
  %2114 = vadd.xlane.f32.xlu0 %v2113
  %v2115 = vpop.xlane.xlu0 %2114
  %v2116 = vadd.f32 %v2097, %v2098
  %v2117 = vadd.f32 %v2116, %v2099
  %v2118 = vadd.f32 %v2117, %v2100
  %2119 = vadd.xlane.f32.xlu0 %v2118
  %v2120 = vpop.xlane.xlu0 %2119
  %v2121 = vmul.f32 %v2069, 0.001953125
  %v2122 = vmul.f32 %v2074, 0.001953125
  %v2123 = vmul.f32 %v2079, 0.001953125
  %v2124 = vmul.f32 %v2084, 0.001953125
  %v2125 = vmul.f32 %v2105, 0.001953125
  %v2126 = vmul.f32 %v2110, 0.001953125
  %v2127 = vmul.f32 %v2115, 0.001953125
  %v2128 = vmul.f32 %v2120, 0.001953125
  %v2129 = vmul.f32 %v2121, %v2121
  %v2130 = vmul.f32 %v2122, %v2122
  %v2131 = vmul.f32 %v2123, %v2123
  %v2132 = vmul.f32 %v2124, %v2124
  %v2133 = vsub.f32 %v2125, %v2129
  %v2134 = vsub.f32 %v2126, %v2130
  %v2135 = vsub.f32 %v2127, %v2131
  %v2136 = vsub.f32 %v2128, %v2132
  %v2137 = vld [vmem:[%s3] sm:$0xff]
  %v2138 = vld [vmem:[%s3 + $0x8] sm:$0xff]
  %v2139 = vld [vmem:[%s3 + $0x10] sm:$0xff]
  %v2140 = vld [vmem:[%s3 + $0x18] sm:$0xff]
  %v2141 = vadd.f32 %v2133, 1e-05
  %v2142 = vadd.f32 %v2134, 1e-05
  %v2143 = vadd.f32 %v2135, 1e-05
  %v2144 = vadd.f32 %v2136, 1e-05
  %v2145 = vrsqrt.pop %v2141
  %v2146 = vrsqrt.pop %v2142
  %v2147 = vrsqrt.pop %v2143
  %v2148 = vrsqrt.pop %v2144
  %v2149 = vmul.f32 %v2137, %v2145
  %v2150 = vmul.f32 %v2138, %v2146
  %v2151 = vmul.f32 %v2139, %v2147
  %v2152 = vmul.f32 %v2140, %v2148
  %v2153 = vld [vmem:[%s4] sm:$0xff]
  %v2154 = vld [vmem:[%s4 + $0x8] sm:$0xff]
  %v2155 = vld [vmem:[%s4 + $0x10] sm:$0xff]
  %v2156 = vld [vmem:[%s4 + $0x18] sm:$0xff]
  %v2157 = vmul.f32 %v2121, %v2149
  %v2158 = vmul.f32 %v2122, %v2150
  %v2159 = vmul.f32 %v2123, %v2151
  %v2160 = vmul.f32 %v2124, %v2152
  %v2161 = vsub.f32 %v2153, %v2157
  %v2162 = vsub.f32 %v2154, %v2158
  %v2163 = vsub.f32 %v2155, %v2159
  %v2164 = vsub.f32 %v2156, %v2160
  %2166 = vset.pattern.permute.xlu0 0
  %2167 = vperm.xlu0 %2166, %v2149
  %v2168 = vpop.permute.xlu0 %2167
  %2171 = vset.pattern.permute.xlu0 0
  %2172 = vperm.xlu0 %2171, %v2150
  %v2173 = vpop.permute.xlu0 %2172
  %2176 = vset.pattern.permute.xlu0 0
  %2177 = vperm.xlu0 %2176, %v2151
  %v2178 = vpop.permute.xlu0 %2177
  %2181 = vset.pattern.permute.xlu0 0
  %2182 = vperm.xlu0 %2181, %v2152
  %v2183 = vpop.permute.xlu0 %2182
  %v2185 = vmul.f32 %v1865, %v2168
  %v2186 = vmul.f32 %v1867, %v2168
  %v2187 = vmul.f32 %v2043, %v2168
  %v2188 = vmul.f32 %v2045, %v2168
  %v2189 = vmul.f32 %v1871, %v2173
  %v2190 = vmul.f32 %v1873, %v2173
  %v2191 = vmul.f32 %v2049, %v2173
  %v2192 = vmul.f32 %v2051, %v2173
  %v2193 = vmul.f32 %v1877, %v2178
  %v2194 = vmul.f32 %v1879, %v2178
  %v2195 = vmul.f32 %v2055, %v2178
  %v2196 = vmul.f32 %v2057, %v2178
  %v2197 = vmul.f32 %v1883, %v2183
  %v2198 = vmul.f32 %v1885, %v2183
  %v2199 = vmul.f32 %v2061, %v2183
  %v2200 = vmul.f32 %v2063, %v2183
  %2202 = vset.pattern.permute.xlu0 0
  %2203 = vperm.xlu0 %2202, %v2161
  %v2204 = vpop.permute.xlu0 %2203
  %2207 = vset.pattern.permute.xlu0 0
  %2208 = vperm.xlu0 %2207, %v2162
  %v2209 = vpop.permute.xlu0 %2208
  %2212 = vset.pattern.permute.xlu0 0
  %2213 = vperm.xlu0 %2212, %v2163
  %v2214 = vpop.permute.xlu0 %2213
  %2217 = vset.pattern.permute.xlu0 0
  %2218 = vperm.xlu0 %2217, %v2164
  %v2219 = vpop.permute.xlu0 %2218
  %v2221 = vadd.f32 %v2185, %v2204
  %v2222 = vadd.f32 %v2186, %v2204
  %v2223 = vadd.f32 %v2187, %v2204
  %v2224 = vadd.f32 %v2188, %v2204
  %v2225 = vadd.f32 %v2189, %v2209
  %v2226 = vadd.f32 %v2190, %v2209
  %v2227 = vadd.f32 %v2191, %v2209
  %v2228 = vadd.f32 %v2192, %v2209
  %v2229 = vadd.f32 %v2193, %v2214
  %v2230 = vadd.f32 %v2194, %v2214
  %v2231 = vadd.f32 %v2195, %v2214
  %v2232 = vadd.f32 %v2196, %v2214
  %v2233 = vadd.f32 %v2197, %v2219
  %v2234 = vadd.f32 %v2198, %v2219
  %v2235 = vadd.f32 %v2199, %v2219
  %v2236 = vadd.f32 %v2200, %v2219
  %v2237 = vmax.f32 %v2221, 0.0
  %v2238 = vmax.f32 %v2222, 0.0
  %v2239 = vmax.f32 %v2223, 0.0
  %v2240 = vmax.f32 %v2224, 0.0
  %v2241 = vmax.f32 %v2225, 0.0
  %v2242 = vmax.f32 %v2226, 0.0
  %v2243 = vmax.f32 %v2227, 0.0
  %v2244 = vmax.f32 %v2228, 0.0
  %v2245 = vmax.f32 %v2229, 0.0
  %v2246 = vmax.f32 %v2230, 0.0
  %v2247 = vmax.f32 %v2231, 0.0
  %v2248 = vmax.f32 %v2232, 0.0
  %v2249 = vmax.f32 %v2233, 0.0
  %v2250 = vmax.f32 %v2234, 0.0
  %v2251 = vmax.f32 %v2235, 0.0
  %v2252 = vmax.f32 %v2236, 0.0
  %2253 = vst [vmem:[#allocation2 + $0x8] sm:$0xff] %v2237
  %2254 = vst [vmem:[#allocation2 + $0x10] sm:$0xff] %v2238
  %2255 = vst [vmem:[#allocation2 + $0x18] sm:$0xff] %v2239
  %2256 = vst [vmem:[#allocation2 + $0x20] sm:$0xff] %v2240
  %2257 = vst [vmem:[#allocation2 + $0x38] sm:$0xff] %v2241
  %2258 = vst [vmem:[#allocation2 + $0x40] sm:$0xff] %v2242
  %2259 = vst [vmem:[#allocation2 + $0x48] sm:$0xff] %v2243
  %2260 = vst [vmem:[#allocation2 + $0x50] sm:$0xff] %v2244
  %2261 = vst [vmem:[#allocation2 + $0x68] sm:$0xff] %v2245
  %2262 = vst [vmem:[#allocation2 + $0x70] sm:$0xff] %v2246
  %2263 = vst [vmem:[#allocation2 + $0x78] sm:$0xff] %v2247
  %2264 = vst [vmem:[#allocation2 + $0x80] sm:$0xff] %v2248
  %2265 = vst [vmem:[#allocation2 + $0x98] sm:$0xff] %v2249
  %2266 = vst [vmem:[#allocation2 + $0xa0] sm:$0xff] %v2250
  %2267 = vst [vmem:[#allocation2 + $0xa8] sm:$0xff] %v2251
  %2268 = vst [vmem:[#allocation2 + $0xb0] sm:$0xff] %v2252
  %v2269 = vld [vmem:[#allocation2] sm:$0xff]
  %v2270 = vld [vmem:[#allocation2 + $0x8] sm:$0xff]
  %v2271 = vld [vmem:[#allocation2 + $0x10] sm:$0xff]
  %v2272 = vld [vmem:[#allocation2 + $0x18] sm:$0xff]
  %v2273 = vld [vmem:[#allocation2 + $0x20] sm:$0xff]
  %v2274 = vld [vmem:[#allocation2 + $0x30] sm:$0xff]
  %v2275 = vld [vmem:[#allocation2 + $0x38] sm:$0xff]
  %v2276 = vld [vmem:[#allocation2 + $0x40] sm:$0xff]
  %v2277 = vld [vmem:[#allocation2 + $0x48] sm:$0xff]
  %v2278 = vld [vmem:[#allocation2 + $0x50] sm:$0xff]
  %v2279 = vld [vmem:[#allocation2 + $0x60] sm:$0xff]
  %v2280 = vld [vmem:[#allocation2 + $0x68] sm:$0xff]
  %v2281 = vld [vmem:[#allocation2 + $0x70] sm:$0xff]
  %v2282 = vld [vmem:[#allocation2 + $0x78] sm:$0xff]
  %v2283 = vld [vmem:[#allocation2 + $0x80] sm:$0xff]
  %v2284 = vld [vmem:[#allocation2 + $0x90] sm:$0xff]
  %v2285 = vld [vmem:[#allocation2 + $0x98] sm:$0xff]
  %v2286 = vld [vmem:[#allocation2 + $0xa0] sm:$0xff]
  %v2287 = vld [vmem:[#allocation2 + $0xa8] sm:$0xff]
  %v2288 = vld [vmem:[#allocation2 + $0xb0] sm:$0xff]
  %v2289 = vld [vmem:[%s1] ss:$8 sm:$0xf]
  %v2291 = vlaneseq
  %v2292 = vshrl.u32 %v2291, 7
  %v2293 = vsub.s32 0, %v2292
  %v2294 = vrot.slane %v2289, %v2293
  %v2295 = vlaneseq
  %v2296 = vshrl.u32 %v2295, 7
  %v2297 = vsub.s32 1, %v2296
  %v2298 = vrot.slane %v2289, %v2297
  %v2299 = vlaneseq
  %v2300 = vshrl.u32 %v2299, 7
  %v2301 = vsub.s32 2, %v2300
  %v2302 = vrot.slane %v2289, %v2301
  %v2303 = vlaneseq
  %v2304 = vshrl.u32 %v2303, 7
  %v2305 = vsub.s32 3, %v2304
  %v2306 = vrot.slane %v2289, %v2305
  %2307 = vrot.lane.b32.xlu0 %v2294, 111
  %v2308 = vpop.permute.xlu0 %2307
  %2309 = vrot.lane.b32.xlu0 %v2298, 111
  %v2310 = vpop.permute.xlu0 %2309
  %2311 = vrot.lane.b32.xlu0 %v2302, 111
  %v2312 = vpop.permute.xlu0 %2311
  %2313 = vrot.lane.b32.xlu0 %v2306, 111
  %v2314 = vpop.permute.xlu0 %2313
  %v2315 = vsel %vm83, %v2308, %v2310
  %v2316 = vsel %vm83, %v2310, %v2312
  %v2317 = vsel %vm83, %v2312, %v2314
  %v2323 = vmul.f32 %v2269, %v2308
  %v2324 = vmul.f32 %v2270, %v2315
  %v2325 = vmul.f32 %v2271, %v2316
  %v2326 = vmul.f32 %v2272, %v2317
  %v2327 = vmul.f32 %v2273, %v2314
  %v2328 = vmul.f32 %v2274, %v2308
  %v2329 = vmul.f32 %v2275, %v2315
  %v2330 = vmul.f32 %v2276, %v2316
  %v2331 = vmul.f32 %v2277, %v2317
  %v2332 = vmul.f32 %v2278, %v2314
  %v2333 = vmul.f32 %v2279, %v2308
  %v2334 = vmul.f32 %v2280, %v2315
  %v2335 = vmul.f32 %v2281, %v2316
  %v2336 = vmul.f32 %v2282, %v2317
  %v2337 = vmul.f32 %v2283, %v2314
  %v2338 = vmul.f32 %v2284, %v2308
  %v2339 = vmul.f32 %v2285, %v2315
  %v2340 = vmul.f32 %v2286, %v2316
  %v2341 = vmul.f32 %v2287, %v2317
  %v2342 = vmul.f32 %v2288, %v2314
  %2363 = vrot.lane.b32.xlu0 %v2323, 17
  %v2364 = vpop.permute.xlu0 %2363
  %2365 = vrot.lane.b32.xlu0 %v2324, 17
  %v2366 = vpop.permute.xlu0 %2365
  %2367 = vrot.lane.b32.xlu0 %v2325, 17
  %v2368 = vpop.permute.xlu0 %2367
  %2369 = vrot.lane.b32.xlu0 %v2326, 17
  %v2370 = vpop.permute.xlu0 %2369
  %2371 = vrot.lane.b32.xlu0 %v2327, 17
  %v2372 = vpop.permute.xlu0 %2371
  %2373 = vrot.lane.b32.xlu0 %v2328, 17
  %v2374 = vpop.permute.xlu0 %2373
  %2375 = vrot.lane.b32.xlu0 %v2329, 17
  %v2376 = vpop.permute.xlu0 %2375
  %2377 = vrot.lane.b32.xlu0 %v2330, 17
  %v2378 = vpop.permute.xlu0 %2377
  %2379 = vrot.lane.b32.xlu0 %v2331, 17
  %v2380 = vpop.permute.xlu0 %2379
  %2381 = vrot.lane.b32.xlu0 %v2332, 17
  %v2382 = vpop.permute.xlu0 %2381
  %2383 = vrot.lane.b32.xlu0 %v2333, 17
  %v2384 = vpop.permute.xlu0 %2383
  %2385 = vrot.lane.b32.xlu0 %v2334, 17
  %v2386 = vpop.permute.xlu0 %2385
  %2387 = vrot.lane.b32.xlu0 %v2335, 17
  %v2388 = vpop.permute.xlu0 %2387
  %2389 = vrot.lane.b32.xlu0 %v2336, 17
  %v2390 = vpop.permute.xlu0 %2389
  %2391 = vrot.lane.b32.xlu0 %v2337, 17
  %v2392 = vpop.permute.xlu0 %2391
  %2393 = vrot.lane.b32.xlu0 %v2338, 17
  %v2394 = vpop.permute.xlu0 %2393
  %2395 = vrot.lane.b32.xlu0 %v2339, 17
  %v2396 = vpop.permute.xlu0 %2395
  %2397 = vrot.lane.b32.xlu0 %v2340, 17
  %v2398 = vpop.permute.xlu0 %2397
  %2399 = vrot.lane.b32.xlu0 %v2341, 17
  %v2400 = vpop.permute.xlu0 %2399
  %2401 = vrot.lane.b32.xlu0 %v2342, 17
  %v2402 = vpop.permute.xlu0 %2401
  %v2403 = vsel %vm172, %v2364, %v2366
  %v2404 = vsel %vm172, %v2366, %v2368
  %v2405 = vsel %vm172, %v2368, %v2370
  %v2406 = vsel %vm172, %v2370, %v2372
  %v2407 = vsel %vm172, %v2374, %v2376
  %v2408 = vsel %vm172, %v2376, %v2378
  %v2409 = vsel %vm172, %v2378, %v2380
  %v2410 = vsel %vm172, %v2380, %v2382
  %v2411 = vsel %vm172, %v2384, %v2386
  %v2412 = vsel %vm172, %v2386, %v2388
  %v2413 = vsel %vm172, %v2388, %v2390
  %v2414 = vsel %vm172, %v2390, %v2392
  %v2415 = vsel %vm172, %v2394, %v2396
  %v2416 = vsel %vm172, %v2396, %v2398
  %v2417 = vsel %vm172, %v2398, %v2400
  %v2418 = vsel %vm172, %v2400, %v2402
  %2435 = vst [vmem:[#allocation3] sm:$0xff] %v2403
  %2436 = vst [vmem:[#allocation3 + $0x8] sm:$0xff] %v2404
  %2437 = vst [vmem:[#allocation3 + $0x10] sm:$0xff] %v2405
  %2438 = vst [vmem:[#allocation3 + $0x18] sm:$0xff] %v2406
  %2439 = vst [vmem:[#allocation3 + $0x20] sm:$0xff] %v2407
  %2440 = vst [vmem:[#allocation3 + $0x28] sm:$0xff] %v2408
  %2441 = vst [vmem:[#allocation3 + $0x30] sm:$0xff] %v2409
  %2442 = vst [vmem:[#allocation3 + $0x38] sm:$0xff] %v2410
  %2443 = vst [vmem:[#allocation3 + $0x40] sm:$0xff] %v2411
  %2444 = vst [vmem:[#allocation3 + $0x48] sm:$0xff] %v2412
  %2445 = vst [vmem:[#allocation3 + $0x50] sm:$0xff] %v2413
  %2446 = vst [vmem:[#allocation3 + $0x58] sm:$0xff] %v2414
  %2447 = vst [vmem:[#allocation3 + $0x60] sm:$0xff] %v2415
  %2448 = vst [vmem:[#allocation3 + $0x68] sm:$0xff] %v2416
  %2449 = vst [vmem:[#allocation3 + $0x70] sm:$0xff] %v2417
  %2450 = vst [vmem:[#allocation3 + $0x78] sm:$0xff] %v2418
  %v2451 = vld [vmem:[#allocation2] sm:$0xff]
  %v2452 = vld [vmem:[#allocation2 + $0x8] sm:$0xff]
  %v2453 = vld [vmem:[#allocation2 + $0x10] sm:$0xff]
  %v2454 = vld [vmem:[#allocation2 + $0x18] sm:$0xff]
  %v2455 = vld [vmem:[#allocation2 + $0x20] sm:$0xff]
  %v2456 = vld [vmem:[#allocation2 + $0x30] sm:$0xff]
  %v2457 = vld [vmem:[#allocation2 + $0x38] sm:$0xff]
  %v2458 = vld [vmem:[#allocation2 + $0x40] sm:$0xff]
  %v2459 = vld [vmem:[#allocation2 + $0x48] sm:$0xff]
  %v2460 = vld [vmem:[#allocation2 + $0x50] sm:$0xff]
  %v2461 = vld [vmem:[#allocation2 + $0x60] sm:$0xff]
  %v2462 = vld [vmem:[#allocation2 + $0x68] sm:$0xff]
  %v2463 = vld [vmem:[#allocation2 + $0x70] sm:$0xff]
  %v2464 = vld [vmem:[#allocation2 + $0x78] sm:$0xff]
  %v2465 = vld [vmem:[#allocation2 + $0x80] sm:$0xff]
  %v2466 = vld [vmem:[#allocation2 + $0x90] sm:$0xff]
  %v2467 = vld [vmem:[#allocation2 + $0x98] sm:$0xff]
  %v2468 = vld [vmem:[#allocation2 + $0xa0] sm:$0xff]
  %v2469 = vld [vmem:[#allocation2 + $0xa8] sm:$0xff]
  %v2470 = vld [vmem:[#allocation2 + $0xb0] sm:$0xff]
  %v2471 = vld [vmem:[%s241] ss:$8 sm:$0xf]
  %v2473 = vlaneseq
  %v2474 = vshrl.u32 %v2473, 7
  %v2475 = vsub.s32 0, %v2474
  %v2476 = vrot.slane %v2471, %v2475
  %v2477 = vlaneseq
  %v2478 = vshrl.u32 %v2477, 7
  %v2479 = vsub.s32 1, %v2478
  %v2480 = vrot.slane %v2471, %v2479
  %v2481 = vlaneseq
  %v2482 = vshrl.u32 %v2481, 7
  %v2483 = vsub.s32 2, %v2482
  %v2484 = vrot.slane %v2471, %v2483
  %v2485 = vlaneseq
  %v2486 = vshrl.u32 %v2485, 7
  %v2487 = vsub.s32 3, %v2486
  %v2488 = vrot.slane %v2471, %v2487
  %2489 = vrot.lane.b32.xlu0 %v2476, 112
  %v2490 = vpop.permute.xlu0 %2489
  %2491 = vrot.lane.b32.xlu0 %v2480, 112
  %v2492 = vpop.permute.xlu0 %2491
  %2493 = vrot.lane.b32.xlu0 %v2484, 112
  %v2494 = vpop.permute.xlu0 %2493
  %2495 = vrot.lane.b32.xlu0 %v2488, 112
  %v2496 = vpop.permute.xlu0 %2495
  %v2497 = vsel %vm268, %v2490, %v2492
  %v2498 = vsel %vm268, %v2492, %v2494
  %v2499 = vsel %vm268, %v2494, %v2496
  %v2505 = vmul.f32 %v2451, %v2490
  %v2506 = vmul.f32 %v2452, %v2497
  %v2507 = vmul.f32 %v2453, %v2498
  %v2508 = vmul.f32 %v2454, %v2499
  %v2509 = vmul.f32 %v2455, %v2496
  %v2510 = vmul.f32 %v2456, %v2490
  %v2511 = vmul.f32 %v2457, %v2497
  %v2512 = vmul.f32 %v2458, %v2498
  %v2513 = vmul.f32 %v2459, %v2499
  %v2514 = vmul.f32 %v2460, %v2496
  %v2515 = vmul.f32 %v2461, %v2490
  %v2516 = vmul.f32 %v2462, %v2497
  %v2517 = vmul.f32 %v2463, %v2498
  %v2518 = vmul.f32 %v2464, %v2499
  %v2519 = vmul.f32 %v2465, %v2496
  %v2520 = vmul.f32 %v2466, %v2490
  %v2521 = vmul.f32 %v2467, %v2497
  %v2522 = vmul.f32 %v2468, %v2498
  %v2523 = vmul.f32 %v2469, %v2499
  %v2524 = vmul.f32 %v2470, %v2496
  %2545 = vrot.lane.b32.xlu0 %v2505, 16
  %v2546 = vpop.permute.xlu0 %2545
  %2547 = vrot.lane.b32.xlu0 %v2506, 16
  %v2548 = vpop.permute.xlu0 %2547
  %2549 = vrot.lane.b32.xlu0 %v2507, 16
  %v2550 = vpop.permute.xlu0 %2549
  %2551 = vrot.lane.b32.xlu0 %v2508, 16
  %v2552 = vpop.permute.xlu0 %2551
  %2553 = vrot.lane.b32.xlu0 %v2509, 16
  %v2554 = vpop.permute.xlu0 %2553
  %2555 = vrot.lane.b32.xlu0 %v2510, 16
  %v2556 = vpop.permute.xlu0 %2555
  %2557 = vrot.lane.b32.xlu0 %v2511, 16
  %v2558 = vpop.permute.xlu0 %2557
  %2559 = vrot.lane.b32.xlu0 %v2512, 16
  %v2560 = vpop.permute.xlu0 %2559
  %2561 = vrot.lane.b32.xlu0 %v2513, 16
  %v2562 = vpop.permute.xlu0 %2561
  %2563 = vrot.lane.b32.xlu0 %v2514, 16
  %v2564 = vpop.permute.xlu0 %2563
  %2565 = vrot.lane.b32.xlu0 %v2515, 16
  %v2566 = vpop.permute.xlu0 %2565
  %2567 = vrot.lane.b32.xlu0 %v2516, 16
  %v2568 = vpop.permute.xlu0 %2567
  %2569 = vrot.lane.b32.xlu0 %v2517, 16
  %v2570 = vpop.permute.xlu0 %2569
  %2571 = vrot.lane.b32.xlu0 %v2518, 16
  %v2572 = vpop.permute.xlu0 %2571
  %2573 = vrot.lane.b32.xlu0 %v2519, 16
  %v2574 = vpop.permute.xlu0 %2573
  %2575 = vrot.lane.b32.xlu0 %v2520, 16
  %v2576 = vpop.permute.xlu0 %2575
  %2577 = vrot.lane.b32.xlu0 %v2521, 16
  %v2578 = vpop.permute.xlu0 %2577
  %2579 = vrot.lane.b32.xlu0 %v2522, 16
  %v2580 = vpop.permute.xlu0 %2579
  %2581 = vrot.lane.b32.xlu0 %v2523, 16
  %v2582 = vpop.permute.xlu0 %2581
  %2583 = vrot.lane.b32.xlu0 %v2524, 16
  %v2584 = vpop.permute.xlu0 %2583
  %v2585 = vsel %vm357, %v2546, %v2548
  %v2586 = vsel %vm357, %v2548, %v2550
  %v2587 = vsel %vm357, %v2550, %v2552
  %v2588 = vsel %vm357, %v2552, %v2554
  %v2589 = vsel %vm357, %v2556, %v2558
  %v2590 = vsel %vm357, %v2558, %v2560
  %v2591 = vsel %vm357, %v2560, %v2562
  %v2592 = vsel %vm357, %v2562, %v2564
  %v2593 = vsel %vm357, %v2566, %v2568
  %v2594 = vsel %vm357, %v2568, %v2570
  %v2595 = vsel %vm357, %v2570, %v2572
  %v2596 = vsel %vm357, %v2572, %v2574
  %v2597 = vsel %vm357, %v2576, %v2578
  %v2598 = vsel %vm357, %v2578, %v2580
  %v2599 = vsel %vm357, %v2580, %v2582
  %v2600 = vsel %vm357, %v2582, %v2584
  %2617 = vst [vmem:[#allocation3 + $0x80] sm:$0xff] %v2585
  %2618 = vst [vmem:[#allocation3 + $0x88] sm:$0xff] %v2586
  %2619 = vst [vmem:[#allocation3 + $0x90] sm:$0xff] %v2587
  %2620 = vst [vmem:[#allocation3 + $0x98] sm:$0xff] %v2588
  %2621 = vst [vmem:[#allocation3 + $0xa0] sm:$0xff] %v2589
  %2622 = vst [vmem:[#allocation3 + $0xa8] sm:$0xff] %v2590
  %2623 = vst [vmem:[#allocation3 + $0xb0] sm:$0xff] %v2591
  %2624 = vst [vmem:[#allocation3 + $0xb8] sm:$0xff] %v2592
  %2625 = vst [vmem:[#allocation3 + $0xc0] sm:$0xff] %v2593
  %2626 = vst [vmem:[#allocation3 + $0xc8] sm:$0xff] %v2594
  %2627 = vst [vmem:[#allocation3 + $0xd0] sm:$0xff] %v2595
  %2628 = vst [vmem:[#allocation3 + $0xd8] sm:$0xff] %v2596
  %2629 = vst [vmem:[#allocation3 + $0xe0] sm:$0xff] %v2597
  %2630 = vst [vmem:[#allocation3 + $0xe8] sm:$0xff] %v2598
  %2631 = vst [vmem:[#allocation3 + $0xf0] sm:$0xff] %v2599
  %2632 = vst [vmem:[#allocation3 + $0xf8] sm:$0xff] %v2600
  %v2633 = vld [vmem:[#allocation2] sm:$0xff]
  %v2634 = vld [vmem:[#allocation2 + $0x8] sm:$0xff]
  %v2635 = vld [vmem:[#allocation2 + $0x10] sm:$0xff]
  %v2636 = vld [vmem:[#allocation2 + $0x18] sm:$0xff]
  %v2637 = vld [vmem:[#allocation2 + $0x20] sm:$0xff]
  %v2638 = vld [vmem:[#allocation2 + $0x30] sm:$0xff]
  %v2639 = vld [vmem:[#allocation2 + $0x38] sm:$0xff]
  %v2640 = vld [vmem:[#allocation2 + $0x40] sm:$0xff]
  %v2641 = vld [vmem:[#allocation2 + $0x48] sm:$0xff]
  %v2642 = vld [vmem:[#allocation2 + $0x50] sm:$0xff]
  %v2643 = vld [vmem:[#allocation2 + $0x60] sm:$0xff]
  %v2644 = vld [vmem:[#allocation2 + $0x68] sm:$0xff]
  %v2645 = vld [vmem:[#allocation2 + $0x70] sm:$0xff]
  %v2646 = vld [vmem:[#allocation2 + $0x78] sm:$0xff]
  %v2647 = vld [vmem:[#allocation2 + $0x80] sm:$0xff]
  %v2648 = vld [vmem:[#allocation2 + $0x90] sm:$0xff]
  %v2649 = vld [vmem:[#allocation2 + $0x98] sm:$0xff]
  %v2650 = vld [vmem:[#allocation2 + $0xa0] sm:$0xff]
  %v2651 = vld [vmem:[#allocation2 + $0xa8] sm:$0xff]
  %v2652 = vld [vmem:[#allocation2 + $0xb0] sm:$0xff]
  %v2653 = vld [vmem:[%s426] ss:$8 sm:$0xf]
  %v2655 = vlaneseq
  %v2656 = vshrl.u32 %v2655, 7
  %v2657 = vsub.s32 0, %v2656
  %v2658 = vrot.slane %v2653, %v2657
  %v2659 = vlaneseq
  %v2660 = vshrl.u32 %v2659, 7
  %v2661 = vsub.s32 1, %v2660
  %v2662 = vrot.slane %v2653, %v2661
  %v2663 = vlaneseq
  %v2664 = vshrl.u32 %v2663, 7
  %v2665 = vsub.s32 2, %v2664
  %v2666 = vrot.slane %v2653, %v2665
  %v2667 = vlaneseq
  %v2668 = vshrl.u32 %v2667, 7
  %v2669 = vsub.s32 3, %v2668
  %v2670 = vrot.slane %v2653, %v2669
  %2671 = vrot.lane.b32.xlu0 %v2658, 113
  %v2672 = vpop.permute.xlu0 %2671
  %2673 = vrot.lane.b32.xlu0 %v2662, 113
  %v2674 = vpop.permute.xlu0 %2673
  %2675 = vrot.lane.b32.xlu0 %v2666, 113
  %v2676 = vpop.permute.xlu0 %2675
  %2677 = vrot.lane.b32.xlu0 %v2670, 113
  %v2678 = vpop.permute.xlu0 %2677
  %v2679 = vsel %vm453, %v2672, %v2674
  %v2680 = vsel %vm453, %v2674, %v2676
  %v2681 = vsel %vm453, %v2676, %v2678
  %v2687 = vmul.f32 %v2633, %v2672
  %v2688 = vmul.f32 %v2634, %v2679
  %v2689 = vmul.f32 %v2635, %v2680
  %v2690 = vmul.f32 %v2636, %v2681
  %v2691 = vmul.f32 %v2637, %v2678
  %v2692 = vmul.f32 %v2638, %v2672
  %v2693 = vmul.f32 %v2639, %v2679
  %v2694 = vmul.f32 %v2640, %v2680
  %v2695 = vmul.f32 %v2641, %v2681
  %v2696 = vmul.f32 %v2642, %v2678
  %v2697 = vmul.f32 %v2643, %v2672
  %v2698 = vmul.f32 %v2644, %v2679
  %v2699 = vmul.f32 %v2645, %v2680
  %v2700 = vmul.f32 %v2646, %v2681
  %v2701 = vmul.f32 %v2647, %v2678
  %v2702 = vmul.f32 %v2648, %v2672
  %v2703 = vmul.f32 %v2649, %v2679
  %v2704 = vmul.f32 %v2650, %v2680
  %v2705 = vmul.f32 %v2651, %v2681
  %v2706 = vmul.f32 %v2652, %v2678
  %2727 = vrot.lane.b32.xlu0 %v2687, 15
  %v2728 = vpop.permute.xlu0 %2727
  %2729 = vrot.lane.b32.xlu0 %v2688, 15
  %v2730 = vpop.permute.xlu0 %2729
  %2731 = vrot.lane.b32.xlu0 %v2689, 15
  %v2732 = vpop.permute.xlu0 %2731
  %2733 = vrot.lane.b32.xlu0 %v2690, 15
  %v2734 = vpop.permute.xlu0 %2733
  %2735 = vrot.lane.b32.xlu0 %v2691, 15
  %v2736 = vpop.permute.xlu0 %2735
  %2737 = vrot.lane.b32.xlu0 %v2692, 15
  %v2738 = vpop.permute.xlu0 %2737
  %2739 = vrot.lane.b32.xlu0 %v2693, 15
  %v2740 = vpop.permute.xlu0 %2739
  %2741 = vrot.lane.b32.xlu0 %v2694, 15
  %v2742 = vpop.permute.xlu0 %2741
  %2743 = vrot.lane.b32.xlu0 %v2695, 15
  %v2744 = vpop.permute.xlu0 %2743
  %2745 = vrot.lane.b32.xlu0 %v2696, 15
  %v2746 = vpop.permute.xlu0 %2745
  %2747 = vrot.lane.b32.xlu0 %v2697, 15
  %v2748 = vpop.permute.xlu0 %2747
  %2749 = vrot.lane.b32.xlu0 %v2698, 15
  %v2750 = vpop.permute.xlu0 %2749
  %2751 = vrot.lane.b32.xlu0 %v2699, 15
  %v2752 = vpop.permute.xlu0 %2751
  %2753 = vrot.lane.b32.xlu0 %v2700, 15
  %v2754 = vpop.permute.xlu0 %2753
  %2755 = vrot.lane.b32.xlu0 %v2701, 15
  %v2756 = vpop.permute.xlu0 %2755
  %2757 = vrot.lane.b32.xlu0 %v2702, 15
  %v2758 = vpop.permute.xlu0 %2757
  %2759 = vrot.lane.b32.xlu0 %v2703, 15
  %v2760 = vpop.permute.xlu0 %2759
  %2761 = vrot.lane.b32.xlu0 %v2704, 15
  %v2762 = vpop.permute.xlu0 %2761
  %2763 = vrot.lane.b32.xlu0 %v2705, 15
  %v2764 = vpop.permute.xlu0 %2763
  %2765 = vrot.lane.b32.xlu0 %v2706, 15
  %v2766 = vpop.permute.xlu0 %2765
  %v2767 = vsel %vm542, %v2728, %v2730
  %v2768 = vsel %vm542, %v2730, %v2732
  %v2769 = vsel %vm542, %v2732, %v2734
  %v2770 = vsel %vm542, %v2734, %v2736
  %v2771 = vsel %vm542, %v2738, %v2740
  %v2772 = vsel %vm542, %v2740, %v2742
  %v2773 = vsel %vm542, %v2742, %v2744
  %v2774 = vsel %vm542, %v2744, %v2746
  %v2775 = vsel %vm542, %v2748, %v2750
  %v2776 = vsel %vm542, %v2750, %v2752
  %v2777 = vsel %vm542, %v2752, %v2754
  %v2778 = vsel %vm542, %v2754, %v2756
  %v2779 = vsel %vm542, %v2758, %v2760
  %v2780 = vsel %vm542, %v2760, %v2762
  %v2781 = vsel %vm542, %v2762, %v2764
  %v2782 = vsel %vm542, %v2764, %v2766
  %2799 = vst [vmem:[#allocation3 + $0x100] sm:$0xff] %v2767
  %2800 = vst [vmem:[#allocation3 + $0x108] sm:$0xff] %v2768
  %2801 = vst [vmem:[#allocation3 + $0x110] sm:$0xff] %v2769
  %2802 = vst [vmem:[#allocation3 + $0x118] sm:$0xff] %v2770
  %2803 = vst [vmem:[#allocation3 + $0x120] sm:$0xff] %v2771
  %2804 = vst [vmem:[#allocation3 + $0x128] sm:$0xff] %v2772
  %2805 = vst [vmem:[#allocation3 + $0x130] sm:$0xff] %v2773
  %2806 = vst [vmem:[#allocation3 + $0x138] sm:$0xff] %v2774
  %2807 = vst [vmem:[#allocation3 + $0x140] sm:$0xff] %v2775
  %2808 = vst [vmem:[#allocation3 + $0x148] sm:$0xff] %v2776
  %2809 = vst [vmem:[#allocation3 + $0x150] sm:$0xff] %v2777
  %2810 = vst [vmem:[#allocation3 + $0x158] sm:$0xff] %v2778
  %2811 = vst [vmem:[#allocation3 + $0x160] sm:$0xff] %v2779
  %2812 = vst [vmem:[#allocation3 + $0x168] sm:$0xff] %v2780
  %2813 = vst [vmem:[#allocation3 + $0x170] sm:$0xff] %v2781
  %2814 = vst [vmem:[#allocation3 + $0x178] sm:$0xff] %v2782
  %v2815 = vld [vmem:[#allocation2] sm:$0xff]
  %v2816 = vld [vmem:[#allocation2 + $0x8] sm:$0xff]
  %v2817 = vld [vmem:[#allocation2 + $0x10] sm:$0xff]
  %v2818 = vld [vmem:[#allocation2 + $0x18] sm:$0xff]
  %v2819 = vld [vmem:[#allocation2 + $0x20] sm:$0xff]
  %v2820 = vld [vmem:[#allocation2 + $0x30] sm:$0xff]
  %v2821 = vld [vmem:[#allocation2 + $0x38] sm:$0xff]
  %v2822 = vld [vmem:[#allocation2 + $0x40] sm:$0xff]
  %v2823 = vld [vmem:[#allocation2 + $0x48] sm:$0xff]
  %v2824 = vld [vmem:[#allocation2 + $0x50] sm:$0xff]
  %v2825 = vld [vmem:[#allocation2 + $0x60] sm:$0xff]
  %v2826 = vld [vmem:[#allocation2 + $0x68] sm:$0xff]
  %v2827 = vld [vmem:[#allocation2 + $0x70] sm:$0xff]
  %v2828 = vld [vmem:[#allocation2 + $0x78] sm:$0xff]
  %v2829 = vld [vmem:[#allocation2 + $0x80] sm:$0xff]
  %v2830 = vld [vmem:[#allocation2 + $0x90] sm:$0xff]
  %v2831 = vld [vmem:[#allocation2 + $0x98] sm:$0xff]
  %v2832 = vld [vmem:[#allocation2 + $0xa0] sm:$0xff]
  %v2833 = vld [vmem:[#allocation2 + $0xa8] sm:$0xff]
  %v2834 = vld [vmem:[#allocation2 + $0xb0] sm:$0xff]
  %v2835 = vld [vmem:[%s611] ss:$8 sm:$0xf]
  %v2837 = vlaneseq
  %v2838 = vshrl.u32 %v2837, 7
  %v2839 = vsub.s32 0, %v2838
  %v2840 = vrot.slane %v2835, %v2839
  %v2841 = vlaneseq
  %v2842 = vshrl.u32 %v2841, 7
  %v2843 = vsub.s32 1, %v2842
  %v2844 = vrot.slane %v2835, %v2843
  %v2845 = vlaneseq
  %v2846 = vshrl.u32 %v2845, 7
  %v2847 = vsub.s32 2, %v2846
  %v2848 = vrot.slane %v2835, %v2847
  %v2849 = vlaneseq
  %v2850 = vshrl.u32 %v2849, 7
  %v2851 = vsub.s32 3, %v2850
  %v2852 = vrot.slane %v2835, %v2851
  %2853 = vrot.lane.b32.xlu0 %v2840, 127
  %v2854 = vpop.permute.xlu0 %2853
  %2855 = vrot.lane.b32.xlu0 %v2844, 127
  %v2856 = vpop.permute.xlu0 %2855
  %2857 = vrot.lane.b32.xlu0 %v2848, 127
  %v2858 = vpop.permute.xlu0 %2857
  %2859 = vrot.lane.b32.xlu0 %v2852, 127
  %v2860 = vpop.permute.xlu0 %2859
  %v2861 = vsel %vm638, %v2854, %v2856
  %v2862 = vsel %vm638, %v2856, %v2858
  %v2863 = vsel %vm638, %v2858, %v2860
  %v2869 = vmul.f32 %v2815, %v2854
  %v2870 = vmul.f32 %v2816, %v2861
  %v2871 = vmul.f32 %v2817, %v2862
  %v2872 = vmul.f32 %v2818, %v2863
  %v2873 = vmul.f32 %v2819, %v2860
  %v2874 = vmul.f32 %v2820, %v2854
  %v2875 = vmul.f32 %v2821, %v2861
  %v2876 = vmul.f32 %v2822, %v2862
  %v2877 = vmul.f32 %v2823, %v2863
  %v2878 = vmul.f32 %v2824, %v2860
  %v2879 = vmul.f32 %v2825, %v2854
  %v2880 = vmul.f32 %v2826, %v2861
  %v2881 = vmul.f32 %v2827, %v2862
  %v2882 = vmul.f32 %v2828, %v2863
  %v2883 = vmul.f32 %v2829, %v2860
  %v2884 = vmul.f32 %v2830, %v2854
  %v2885 = vmul.f32 %v2831, %v2861
  %v2886 = vmul.f32 %v2832, %v2862
  %v2887 = vmul.f32 %v2833, %v2863
  %v2888 = vmul.f32 %v2834, %v2860
  %2909 = vrot.lane.b32.xlu0 %v2869, 1
  %v2910 = vpop.permute.xlu0 %2909
  %2911 = vrot.lane.b32.xlu0 %v2870, 1
  %v2912 = vpop.permute.xlu0 %2911
  %2913 = vrot.lane.b32.xlu0 %v2871, 1
  %v2914 = vpop.permute.xlu0 %2913
  %2915 = vrot.lane.b32.xlu0 %v2872, 1
  %v2916 = vpop.permute.xlu0 %2915
  %2917 = vrot.lane.b32.xlu0 %v2873, 1
  %v2918 = vpop.permute.xlu0 %2917
  %2919 = vrot.lane.b32.xlu0 %v2874, 1
  %v2920 = vpop.permute.xlu0 %2919
  %2921 = vrot.lane.b32.xlu0 %v2875, 1
  %v2922 = vpop.permute.xlu0 %2921
  %2923 = vrot.lane.b32.xlu0 %v2876, 1
  %v2924 = vpop.permute.xlu0 %2923
  %2925 = vrot.lane.b32.xlu0 %v2877, 1
  %v2926 = vpop.permute.xlu0 %2925
  %2927 = vrot.lane.b32.xlu0 %v2878, 1
  %v2928 = vpop.permute.xlu0 %2927
  %2929 = vrot.lane.b32.xlu0 %v2879, 1
  %v2930 = vpop.permute.xlu0 %2929
  %2931 = vrot.lane.b32.xlu0 %v2880, 1
  %v2932 = vpop.permute.xlu0 %2931
  %2933 = vrot.lane.b32.xlu0 %v2881, 1
  %v2934 = vpop.permute.xlu0 %2933
  %2935 = vrot.lane.b32.xlu0 %v2882, 1
  %v2936 = vpop.permute.xlu0 %2935
  %2937 = vrot.lane.b32.xlu0 %v2883, 1
  %v2938 = vpop.permute.xlu0 %2937
  %2939 = vrot.lane.b32.xlu0 %v2884, 1
  %v2940 = vpop.permute.xlu0 %2939
  %2941 = vrot.lane.b32.xlu0 %v2885, 1
  %v2942 = vpop.permute.xlu0 %2941
  %2943 = vrot.lane.b32.xlu0 %v2886, 1
  %v2944 = vpop.permute.xlu0 %2943
  %2945 = vrot.lane.b32.xlu0 %v2887, 1
  %v2946 = vpop.permute.xlu0 %2945
  %2947 = vrot.lane.b32.xlu0 %v2888, 1
  %v2948 = vpop.permute.xlu0 %2947
  %v2949 = vsel %vm727, %v2910, %v2912
  %v2950 = vsel %vm727, %v2912, %v2914
  %v2951 = vsel %vm727, %v2914, %v2916
  %v2952 = vsel %vm727, %v2916, %v2918
  %v2953 = vsel %vm727, %v2920, %v2922
  %v2954 = vsel %vm727, %v2922, %v2924
  %v2955 = vsel %vm727, %v2924, %v2926
  %v2956 = vsel %vm727, %v2926, %v2928
  %v2957 = vsel %vm727, %v2930, %v2932
  %v2958 = vsel %vm727, %v2932, %v2934
  %v2959 = vsel %vm727, %v2934, %v2936
  %v2960 = vsel %vm727, %v2936, %v2938
  %v2961 = vsel %vm727, %v2940, %v2942
  %v2962 = vsel %vm727, %v2942, %v2944
  %v2963 = vsel %vm727, %v2944, %v2946
  %v2964 = vsel %vm727, %v2946, %v2948
  %2981 = vst [vmem:[#allocation3 + $0x180] sm:$0xff] %v2949
  %2982 = vst [vmem:[#allocation3 + $0x188] sm:$0xff] %v2950
  %2983 = vst [vmem:[#allocation3 + $0x190] sm:$0xff] %v2951
  %2984 = vst [vmem:[#allocation3 + $0x198] sm:$0xff] %v2952
  %2985 = vst [vmem:[#allocation3 + $0x1a0] sm:$0xff] %v2953
  %2986 = vst [vmem:[#allocation3 + $0x1a8] sm:$0xff] %v2954
  %2987 = vst [vmem:[#allocation3 + $0x1b0] sm:$0xff] %v2955
  %2988 = vst [vmem:[#allocation3 + $0x1b8] sm:$0xff] %v2956
  %2989 = vst [vmem:[#allocation3 + $0x1c0] sm:$0xff] %v2957
  %2990 = vst [vmem:[#allocation3 + $0x1c8] sm:$0xff] %v2958
  %2991 = vst [vmem:[#allocation3 + $0x1d0] sm:$0xff] %v2959
  %2992 = vst [vmem:[#allocation3 + $0x1d8] sm:$0xff] %v2960
  %2993 = vst [vmem:[#allocation3 + $0x1e0] sm:$0xff] %v2961
  %2994 = vst [vmem:[#allocation3 + $0x1e8] sm:$0xff] %v2962
  %2995 = vst [vmem:[#allocation3 + $0x1f0] sm:$0xff] %v2963
  %2996 = vst [vmem:[#allocation3 + $0x1f8] sm:$0xff] %v2964
  %v2997 = vld [vmem:[#allocation2 + $0x8] sm:$0xff]
  %v2998 = vld [vmem:[#allocation2 + $0x10] sm:$0xff]
  %v2999 = vld [vmem:[#allocation2 + $0x18] sm:$0xff]
  %v3000 = vld [vmem:[#allocation2 + $0x20] sm:$0xff]
  %v3001 = vld [vmem:[#allocation2 + $0x38] sm:$0xff]
  %v3002 = vld [vmem:[#allocation2 + $0x40] sm:$0xff]
  %v3003 = vld [vmem:[#allocation2 + $0x48] sm:$0xff]
  %v3004 = vld [vmem:[#allocation2 + $0x50] sm:$0xff]
  %v3005 = vld [vmem:[#allocation2 + $0x68] sm:$0xff]
  %v3006 = vld [vmem:[#allocation2 + $0x70] sm:$0xff]
  %v3007 = vld [vmem:[#allocation2 + $0x78] sm:$0xff]
  %v3008 = vld [vmem:[#allocation2 + $0x80] sm:$0xff]
  %v3009 = vld [vmem:[#allocation2 + $0x98] sm:$0xff]
  %v3010 = vld [vmem:[#allocation2 + $0xa0] sm:$0xff]
  %v3011 = vld [vmem:[#allocation2 + $0xa8] sm:$0xff]
  %v3012 = vld [vmem:[#allocation2 + $0xb0] sm:$0xff]
  %3013 = vst [vmem:[#allocation3 + $0x200] sm:$0xff] %v2997
  %3014 = vst [vmem:[#allocation3 + $0x208] sm:$0xff] %v2998
  %3015 = vst [vmem:[#allocation3 + $0x210] sm:$0xff] %v2999
  %3016 = vst [vmem:[#allocation3 + $0x218] sm:$0xff] %v3000
  %3017 = vst [vmem:[#allocation3 + $0x220] sm:$0xff] %v3001
  %3018 = vst [vmem:[#allocation3 + $0x228] sm:$0xff] %v3002
  %3019 = vst [vmem:[#allocation3 + $0x230] sm:$0xff] %v3003
  %3020 = vst [vmem:[#allocation3 + $0x238] sm:$0xff] %v3004
  %3021 = vst [vmem:[#allocation3 + $0x240] sm:$0xff] %v3005
  %3022 = vst [vmem:[#allocation3 + $0x248] sm:$0xff] %v3006
  %3023 = vst [vmem:[#allocation3 + $0x250] sm:$0xff] %v3007
  %3024 = vst [vmem:[#allocation3 + $0x258] sm:$0xff] %v3008
  %3025 = vst [vmem:[#allocation3 + $0x260] sm:$0xff] %v3009
  %3026 = vst [vmem:[#allocation3 + $0x268] sm:$0xff] %v3010
  %3027 = vst [vmem:[#allocation3 + $0x270] sm:$0xff] %v3011
  %3028 = vst [vmem:[#allocation3 + $0x278] sm:$0xff] %v3012
  %v3029 = vld [vmem:[#allocation2 + $0x8] sm:$0xff]
  %v3030 = vld [vmem:[#allocation2 + $0x10] sm:$0xff]
  %v3031 = vld [vmem:[#allocation2 + $0x18] sm:$0xff]
  %v3032 = vld [vmem:[#allocation2 + $0x20] sm:$0xff]
  %v3033 = vld [vmem:[#allocation2 + $0x28] sm:$0xff]
  %v3034 = vld [vmem:[#allocation2 + $0x38] sm:$0xff]
  %v3035 = vld [vmem:[#allocation2 + $0x40] sm:$0xff]
  %v3036 = vld [vmem:[#allocation2 + $0x48] sm:$0xff]
  %v3037 = vld [vmem:[#allocation2 + $0x50] sm:$0xff]
  %v3038 = vld [vmem:[#allocation2 + $0x58] sm:$0xff]
  %v3039 = vld [vmem:[#allocation2 + $0x68] sm:$0xff]
  %v3040 = vld [vmem:[#allocation2 + $0x70] sm:$0xff]
  %v3041 = vld [vmem:[#allocation2 + $0x78] sm:$0xff]
  %v3042 = vld [vmem:[#allocation2 + $0x80] sm:$0xff]
  %v3043 = vld [vmem:[#allocation2 + $0x88] sm:$0xff]
  %v3044 = vld [vmem:[#allocation2 + $0x98] sm:$0xff]
  %v3045 = vld [vmem:[#allocation2 + $0xa0] sm:$0xff]
  %v3046 = vld [vmem:[#allocation2 + $0xa8] sm:$0xff]
  %v3047 = vld [vmem:[#allocation2 + $0xb0] sm:$0xff]
  %v3048 = vld [vmem:[#allocation2 + $0xb8] sm:$0xff]
  %v3049 = vld [vmem:[%s828] ss:$8 sm:$0xf]
  %v3051 = vlaneseq
  %v3052 = vshrl.u32 %v3051, 7
  %v3053 = vsub.s32 0, %v3052
  %v3054 = vrot.slane %v3049, %v3053
  %v3055 = vlaneseq
  %v3056 = vshrl.u32 %v3055, 7
  %v3057 = vsub.s32 1, %v3056
  %v3058 = vrot.slane %v3049, %v3057
  %v3059 = vlaneseq
  %v3060 = vshrl.u32 %v3059, 7
  %v3061 = vsub.s32 2, %v3060
  %v3062 = vrot.slane %v3049, %v3061
  %v3063 = vlaneseq
  %v3064 = vshrl.u32 %v3063, 7
  %v3065 = vsub.s32 3, %v3064
  %v3066 = vrot.slane %v3049, %v3065
  %3067 = vrot.lane.b32.xlu0 %v3054, 1
  %v3068 = vpop.permute.xlu0 %3067
  %3069 = vrot.lane.b32.xlu0 %v3058, 1
  %v3070 = vpop.permute.xlu0 %3069
  %3071 = vrot.lane.b32.xlu0 %v3062, 1
  %v3072 = vpop.permute.xlu0 %3071
  %3073 = vrot.lane.b32.xlu0 %v3066, 1
  %v3074 = vpop.permute.xlu0 %3073
  %v3075 = vsel %vm727, %v3068, %v3070
  %v3076 = vsel %vm727, %v3070, %v3072
  %v3077 = vsel %vm727, %v3072, %v3074
  %v3083 = vmul.f32 %v3029, %v3068
  %v3084 = vmul.f32 %v3030, %v3075
  %v3085 = vmul.f32 %v3031, %v3076
  %v3086 = vmul.f32 %v3032, %v3077
  %v3087 = vmul.f32 %v3033, %v3074
  %v3088 = vmul.f32 %v3034, %v3068
  %v3089 = vmul.f32 %v3035, %v3075
  %v3090 = vmul.f32 %v3036, %v3076
  %v3091 = vmul.f32 %v3037, %v3077
  %v3092 = vmul.f32 %v3038, %v3074
  %v3093 = vmul.f32 %v3039, %v3068
  %v3094 = vmul.f32 %v3040, %v3075
  %v3095 = vmul.f32 %v3041, %v3076
  %v3096 = vmul.f32 %v3042, %v3077
  %v3097 = vmul.f32 %v3043, %v3074
  %v3098 = vmul.f32 %v3044, %v3068
  %v3099 = vmul.f32 %v3045, %v3075
  %v3100 = vmul.f32 %v3046, %v3076
  %v3101 = vmul.f32 %v3047, %v3077
  %v3102 = vmul.f32 %v3048, %v3074
  %3123 = vrot.lane.b32.xlu0 %v3083, 127
  %v3124 = vpop.permute.xlu0 %3123
  %3125 = vrot.lane.b32.xlu0 %v3084, 127
  %v3126 = vpop.permute.xlu0 %3125
  %3127 = vrot.lane.b32.xlu0 %v3085, 127
  %v3128 = vpop.permute.xlu0 %3127
  %3129 = vrot.lane.b32.xlu0 %v3086, 127
  %v3130 = vpop.permute.xlu0 %3129
  %3131 = vrot.lane.b32.xlu0 %v3087, 127
  %v3132 = vpop.permute.xlu0 %3131
  %3133 = vrot.lane.b32.xlu0 %v3088, 127
  %v3134 = vpop.permute.xlu0 %3133
  %3135 = vrot.lane.b32.xlu0 %v3089, 127
  %v3136 = vpop.permute.xlu0 %3135
  %3137 = vrot.lane.b32.xlu0 %v3090, 127
  %v3138 = vpop.permute.xlu0 %3137
  %3139 = vrot.lane.b32.xlu0 %v3091, 127
  %v3140 = vpop.permute.xlu0 %3139
  %3141 = vrot.lane.b32.xlu0 %v3092, 127
  %v3142 = vpop.permute.xlu0 %3141
  %3143 = vrot.lane.b32.xlu0 %v3093, 127
  %v3144 = vpop.permute.xlu0 %3143
  %3145 = vrot.lane.b32.xlu0 %v3094, 127
  %v3146 = vpop.permute.xlu0 %3145
  %3147 = vrot.lane.b32.xlu0 %v3095, 127
  %v3148 = vpop.permute.xlu0 %3147
  %3149 = vrot.lane.b32.xlu0 %v3096, 127
  %v3150 = vpop.permute.xlu0 %3149
  %3151 = vrot.lane.b32.xlu0 %v3097, 127
  %v3152 = vpop.permute.xlu0 %3151
  %3153 = vrot.lane.b32.xlu0 %v3098, 127
  %v3154 = vpop.permute.xlu0 %3153
  %3155 = vrot.lane.b32.xlu0 %v3099, 127
  %v3156 = vpop.permute.xlu0 %3155
  %3157 = vrot.lane.b32.xlu0 %v3100, 127
  %v3158 = vpop.permute.xlu0 %3157
  %3159 = vrot.lane.b32.xlu0 %v3101, 127
  %v3160 = vpop.permute.xlu0 %3159
  %3161 = vrot.lane.b32.xlu0 %v3102, 127
  %v3162 = vpop.permute.xlu0 %3161
  %v3163 = vsel %vm638, %v3124, %v3126
  %v3164 = vsel %vm638, %v3126, %v3128
  %v3165 = vsel %vm638, %v3128, %v3130
  %v3166 = vsel %vm638, %v3130, %v3132
  %v3167 = vsel %vm638, %v3134, %v3136
  %v3168 = vsel %vm638, %v3136, %v3138
  %v3169 = vsel %vm638, %v3138, %v3140
  %v3170 = vsel %vm638, %v3140, %v3142
  %v3171 = vsel %vm638, %v3144, %v3146
  %v3172 = vsel %vm638, %v3146, %v3148
  %v3173 = vsel %vm638, %v3148, %v3150
  %v3174 = vsel %vm638, %v3150, %v3152
  %v3175 = vsel %vm638, %v3154, %v3156
  %v3176 = vsel %vm638, %v3156, %v3158
  %v3177 = vsel %vm638, %v3158, %v3160
  %v3178 = vsel %vm638, %v3160, %v3162
  %3195 = vst [vmem:[#allocation3 + $0x280] sm:$0xff] %v3163
  %3196 = vst [vmem:[#allocation3 + $0x288] sm:$0xff] %v3164
  %3197 = vst [vmem:[#allocation3 + $0x290] sm:$0xff] %v3165
  %3198 = vst [vmem:[#allocation3 + $0x298] sm:$0xff] %v3166
  %3199 = vst [vmem:[#allocation3 + $0x2a0] sm:$0xff] %v3167
  %3200 = vst [vmem:[#allocation3 + $0x2a8] sm:$0xff] %v3168
  %3201 = vst [vmem:[#allocation3 + $0x2b0] sm:$0xff] %v3169
  %3202 = vst [vmem:[#allocation3 + $0x2b8] sm:$0xff] %v3170
  %3203 = vst [vmem:[#allocation3 + $0x2c0] sm:$0xff] %v3171
  %3204 = vst [vmem:[#allocation3 + $0x2c8] sm:$0xff] %v3172
  %3205 = vst [vmem:[#allocation3 + $0x2d0] sm:$0xff] %v3173
  %3206 = vst [vmem:[#allocation3 + $0x2d8] sm:$0xff] %v3174
  %3207 = vst [vmem:[#allocation3 + $0x2e0] sm:$0xff] %v3175
  %3208 = vst [vmem:[#allocation3 + $0x2e8] sm:$0xff] %v3176
  %3209 = vst [vmem:[#allocation3 + $0x2f0] sm:$0xff] %v3177
  %3210 = vst [vmem:[#allocation3 + $0x2f8] sm:$0xff] %v3178
  %v3211 = vld [vmem:[#allocation2 + $0x8] sm:$0xff]
  %v3212 = vld [vmem:[#allocation2 + $0x10] sm:$0xff]
  %v3213 = vld [vmem:[#allocation2 + $0x18] sm:$0xff]
  %v3214 = vld [vmem:[#allocation2 + $0x20] sm:$0xff]
  %v3215 = vld [vmem:[#allocation2 + $0x28] sm:$0xff]
  %v3216 = vld [vmem:[#allocation2 + $0x38] sm:$0xff]
  %v3217 = vld [vmem:[#allocation2 + $0x40] sm:$0xff]
  %v3218 = vld [vmem:[#allocation2 + $0x48] sm:$0xff]
  %v3219 = vld [vmem:[#allocation2 + $0x50] sm:$0xff]
  %v3220 = vld [vmem:[#allocation2 + $0x58] sm:$0xff]
  %v3221 = vld [vmem:[#allocation2 + $0x68] sm:$0xff]
  %v3222 = vld [vmem:[#allocation2 + $0x70] sm:$0xff]
  %v3223 = vld [vmem:[#allocation2 + $0x78] sm:$0xff]
  %v3224 = vld [vmem:[#allocation2 + $0x80] sm:$0xff]
  %v3225 = vld [vmem:[#allocation2 + $0x88] sm:$0xff]
  %v3226 = vld [vmem:[#allocation2 + $0x98] sm:$0xff]
  %v3227 = vld [vmem:[#allocation2 + $0xa0] sm:$0xff]
  %v3228 = vld [vmem:[#allocation2 + $0xa8] sm:$0xff]
  %v3229 = vld [vmem:[#allocation2 + $0xb0] sm:$0xff]
  %v3230 = vld [vmem:[#allocation2 + $0xb8] sm:$0xff]
  %v3231 = vld [vmem:[%s1011] ss:$8 sm:$0xf]
  %v3233 = vlaneseq
  %v3234 = vshrl.u32 %v3233, 7
  %v3235 = vsub.s32 0, %v3234
  %v3236 = vrot.slane %v3231, %v3235
  %v3237 = vlaneseq
  %v3238 = vshrl.u32 %v3237, 7
  %v3239 = vsub.s32 1, %v3238
  %v3240 = vrot.slane %v3231, %v3239
  %v3241 = vlaneseq
  %v3242 = vshrl.u32 %v3241, 7
  %v3243 = vsub.s32 2, %v3242
  %v3244 = vrot.slane %v3231, %v3243
  %v3245 = vlaneseq
  %v3246 = vshrl.u32 %v3245, 7
  %v3247 = vsub.s32 3, %v3246
  %v3248 = vrot.slane %v3231, %v3247
  %3249 = vrot.lane.b32.xlu0 %v3236, 15
  %v3250 = vpop.permute.xlu0 %3249
  %3251 = vrot.lane.b32.xlu0 %v3240, 15
  %v3252 = vpop.permute.xlu0 %3251
  %3253 = vrot.lane.b32.xlu0 %v3244, 15
  %v3254 = vpop.permute.xlu0 %3253
  %3255 = vrot.lane.b32.xlu0 %v3248, 15
  %v3256 = vpop.permute.xlu0 %3255
  %v3257 = vsel %vm542, %v3250, %v3252
  %v3258 = vsel %vm542, %v3252, %v3254
  %v3259 = vsel %vm542, %v3254, %v3256
  %v3265 = vmul.f32 %v3211, %v3250
  %v3266 = vmul.f32 %v3212, %v3257
  %v3267 = vmul.f32 %v3213, %v3258
  %v3268 = vmul.f32 %v3214, %v3259
  %v3269 = vmul.f32 %v3215, %v3256
  %v3270 = vmul.f32 %v3216, %v3250
  %v3271 = vmul.f32 %v3217, %v3257
  %v3272 = vmul.f32 %v3218, %v3258
  %v3273 = vmul.f32 %v3219, %v3259
  %v3274 = vmul.f32 %v3220, %v3256
  %v3275 = vmul.f32 %v3221, %v3250
  %v3276 = vmul.f32 %v3222, %v3257
  %v3277 = vmul.f32 %v3223, %v3258
  %v3278 = vmul.f32 %v3224, %v3259
  %v3279 = vmul.f32 %v3225, %v3256
  %v3280 = vmul.f32 %v3226, %v3250
  %v3281 = vmul.f32 %v3227, %v3257
  %v3282 = vmul.f32 %v3228, %v3258
  %v3283 = vmul.f32 %v3229, %v3259
  %v3284 = vmul.f32 %v3230, %v3256
  %3305 = vrot.lane.b32.xlu0 %v3265, 113
  %v3306 = vpop.permute.xlu0 %3305
  %3307 = vrot.lane.b32.xlu0 %v3266, 113
  %v3308 = vpop.permute.xlu0 %3307
  %3309 = vrot.lane.b32.xlu0 %v3267, 113
  %v3310 = vpop.permute.xlu0 %3309
  %3311 = vrot.lane.b32.xlu0 %v3268, 113
  %v3312 = vpop.permute.xlu0 %3311
  %3313 = vrot.lane.b32.xlu0 %v3269, 113
  %v3314 = vpop.permute.xlu0 %3313
  %3315 = vrot.lane.b32.xlu0 %v3270, 113
  %v3316 = vpop.permute.xlu0 %3315
  %3317 = vrot.lane.b32.xlu0 %v3271, 113
  %v3318 = vpop.permute.xlu0 %3317
  %3319 = vrot.lane.b32.xlu0 %v3272, 113
  %v3320 = vpop.permute.xlu0 %3319
  %3321 = vrot.lane.b32.xlu0 %v3273, 113
  %v3322 = vpop.permute.xlu0 %3321
  %3323 = vrot.lane.b32.xlu0 %v3274, 113
  %v3324 = vpop.permute.xlu0 %3323
  %3325 = vrot.lane.b32.xlu0 %v3275, 113
  %v3326 = vpop.permute.xlu0 %3325
  %3327 = vrot.lane.b32.xlu0 %v3276, 113
  %v3328 = vpop.permute.xlu0 %3327
  %3329 = vrot.lane.b32.xlu0 %v3277, 113
  %v3330 = vpop.permute.xlu0 %3329
  %3331 = vrot.lane.b32.xlu0 %v3278, 113
  %v3332 = vpop.permute.xlu0 %3331
  %3333 = vrot.lane.b32.xlu0 %v3279, 113
  %v3334 = vpop.permute.xlu0 %3333
  %3335 = vrot.lane.b32.xlu0 %v3280, 113
  %v3336 = vpop.permute.xlu0 %3335
  %3337 = vrot.lane.b32.xlu0 %v3281, 113
  %v3338 = vpop.permute.xlu0 %3337
  %3339 = vrot.lane.b32.xlu0 %v3282, 113
  %v3340 = vpop.permute.xlu0 %3339
  %3341 = vrot.lane.b32.xlu0 %v3283, 113
  %v3342 = vpop.permute.xlu0 %3341
  %3343 = vrot.lane.b32.xlu0 %v3284, 113
  %v3344 = vpop.permute.xlu0 %3343
  %v3345 = vsel %vm453, %v3306, %v3308
  %v3346 = vsel %vm453, %v3308, %v3310
  %v3347 = vsel %vm453, %v3310, %v3312
  %v3348 = vsel %vm453, %v3312, %v3314
  %v3349 = vsel %vm453, %v3316, %v3318
  %v3350 = vsel %vm453, %v3318, %v3320
  %v3351 = vsel %vm453, %v3320, %v3322
  %v3352 = vsel %vm453, %v3322, %v3324
  %v3353 = vsel %vm453, %v3326, %v3328
  %v3354 = vsel %vm453, %v3328, %v3330
  %v3355 = vsel %vm453, %v3330, %v3332
  %v3356 = vsel %vm453, %v3332, %v3334
  %v3357 = vsel %vm453, %v3336, %v3338
  %v3358 = vsel %vm453, %v3338, %v3340
  %v3359 = vsel %vm453, %v3340, %v3342
  %v3360 = vsel %vm453, %v3342, %v3344
  %3377 = vst [vmem:[#allocation3 + $0x300] sm:$0xff] %v3345
  %3378 = vst [vmem:[#allocation3 + $0x308] sm:$0xff] %v3346
  %3379 = vst [vmem:[#allocation3 + $0x310] sm:$0xff] %v3347
  %3380 = vst [vmem:[#allocation3 + $0x318] sm:$0xff] %v3348
  %3381 = vst [vmem:[#allocation3 + $0x320] sm:$0xff] %v3349
  %3382 = vst [vmem:[#allocation3 + $0x328] sm:$0xff] %v3350
  %3383 = vst [vmem:[#allocation3 + $0x330] sm:$0xff] %v3351
  %3384 = vst [vmem:[#allocation3 + $0x338] sm:$0xff] %v3352
  %3385 = vst [vmem:[#allocation3 + $0x340] sm:$0xff] %v3353
  %3386 = vst [vmem:[#allocation3 + $0x348] sm:$0xff] %v3354
  %3387 = vst [vmem:[#allocation3 + $0x350] sm:$0xff] %v3355
  %3388 = vst [vmem:[#allocation3 + $0x358] sm:$0xff] %v3356
  %3389 = vst [vmem:[#allocation3 + $0x360] sm:$0xff] %v3357
  %3390 = vst [vmem:[#allocation3 + $0x368] sm:$0xff] %v3358
  %3391 = vst [vmem:[#allocation3 + $0x370] sm:$0xff] %v3359
  %3392 = vst [vmem:[#allocation3 + $0x378] sm:$0xff] %v3360
  %v3393 = vld [vmem:[#allocation2 + $0x8] sm:$0xff]
  %v3394 = vld [vmem:[#allocation2 + $0x10] sm:$0xff]
  %v3395 = vld [vmem:[#allocation2 + $0x18] sm:$0xff]
  %v3396 = vld [vmem:[#allocation2 + $0x20] sm:$0xff]
  %v3397 = vld [vmem:[#allocation2 + $0x28] sm:$0xff]
  %v3398 = vld [vmem:[#allocation2 + $0x38] sm:$0xff]
  %v3399 = vld [vmem:[#allocation2 + $0x40] sm:$0xff]
  %v3400 = vld [vmem:[#allocation2 + $0x48] sm:$0xff]
  %v3401 = vld [vmem:[#allocation2 + $0x50] sm:$0xff]
  %v3402 = vld [vmem:[#allocation2 + $0x58] sm:$0xff]
  %v3403 = vld [vmem:[#allocation2 + $0x68] sm:$0xff]
  %v3404 = vld [vmem:[#allocation2 + $0x70] sm:$0xff]
  %v3405 = vld [vmem:[#allocation2 + $0x78] sm:$0xff]
  %v3406 = vld [vmem:[#allocation2 + $0x80] sm:$0xff]
  %v3407 = vld [vmem:[#allocation2 + $0x88] sm:$0xff]
  %v3408 = vld [vmem:[#allocation2 + $0x98] sm:$0xff]
  %v3409 = vld [vmem:[#allocation2 + $0xa0] sm:$0xff]
  %v3410 = vld [vmem:[#allocation2 + $0xa8] sm:$0xff]
  %v3411 = vld [vmem:[#allocation2 + $0xb0] sm:$0xff]
  %v3412 = vld [vmem:[#allocation2 + $0xb8] sm:$0xff]
  %v3413 = vld [vmem:[%s1194] ss:$8 sm:$0xf]
  %v3415 = vlaneseq
  %v3416 = vshrl.u32 %v3415, 7
  %v3417 = vsub.s32 0, %v3416
  %v3418 = vrot.slane %v3413, %v3417
  %v3419 = vlaneseq
  %v3420 = vshrl.u32 %v3419, 7
  %v3421 = vsub.s32 1, %v3420
  %v3422 = vrot.slane %v3413, %v3421
  %v3423 = vlaneseq
  %v3424 = vshrl.u32 %v3423, 7
  %v3425 = vsub.s32 2, %v3424
  %v3426 = vrot.slane %v3413, %v3425
  %v3427 = vlaneseq
  %v3428 = vshrl.u32 %v3427, 7
  %v3429 = vsub.s32 3, %v3428
  %v3430 = vrot.slane %v3413, %v3429
  %3431 = vrot.lane.b32.xlu0 %v3418, 16
  %v3432 = vpop.permute.xlu0 %3431
  %3433 = vrot.lane.b32.xlu0 %v3422, 16
  %v3434 = vpop.permute.xlu0 %3433
  %3435 = vrot.lane.b32.xlu0 %v3426, 16
  %v3436 = vpop.permute.xlu0 %3435
  %3437 = vrot.lane.b32.xlu0 %v3430, 16
  %v3438 = vpop.permute.xlu0 %3437
  %v3439 = vsel %vm357, %v3432, %v3434
  %v3440 = vsel %vm357, %v3434, %v3436
  %v3441 = vsel %vm357, %v3436, %v3438
  %v3447 = vmul.f32 %v3393, %v3432
  %v3448 = vmul.f32 %v3394, %v3439
  %v3449 = vmul.f32 %v3395, %v3440
  %v3450 = vmul.f32 %v3396, %v3441
  %v3451 = vmul.f32 %v3397, %v3438
  %v3452 = vmul.f32 %v3398, %v3432
  %v3453 = vmul.f32 %v3399, %v3439
  %v3454 = vmul.f32 %v3400, %v3440
  %v3455 = vmul.f32 %v3401, %v3441
  %v3456 = vmul.f32 %v3402, %v3438
  %v3457 = vmul.f32 %v3403, %v3432
  %v3458 = vmul.f32 %v3404, %v3439
  %v3459 = vmul.f32 %v3405, %v3440
  %v3460 = vmul.f32 %v3406, %v3441
  %v3461 = vmul.f32 %v3407, %v3438
  %v3462 = vmul.f32 %v3408, %v3432
  %v3463 = vmul.f32 %v3409, %v3439
  %v3464 = vmul.f32 %v3410, %v3440
  %v3465 = vmul.f32 %v3411, %v3441
  %v3466 = vmul.f32 %v3412, %v3438
  %3487 = vrot.lane.b32.xlu0 %v3447, 112
  %v3488 = vpop.permute.xlu0 %3487
  %3489 = vrot.lane.b32.xlu0 %v3448, 112
  %v3490 = vpop.permute.xlu0 %3489
  %3491 = vrot.lane.b32.xlu0 %v3449, 112
  %v3492 = vpop.permute.xlu0 %3491
  %3493 = vrot.lane.b32.xlu0 %v3450, 112
  %v3494 = vpop.permute.xlu0 %3493
  %3495 = vrot.lane.b32.xlu0 %v3451, 112
  %v3496 = vpop.permute.xlu0 %3495
  %3497 = vrot.lane.b32.xlu0 %v3452, 112
  %v3498 = vpop.permute.xlu0 %3497
  %3499 = vrot.lane.b32.xlu0 %v3453, 112
  %v3500 = vpop.permute.xlu0 %3499
  %3501 = vrot.lane.b32.xlu0 %v3454, 112
  %v3502 = vpop.permute.xlu0 %3501
  %3503 = vrot.lane.b32.xlu0 %v3455, 112
  %v3504 = vpop.permute.xlu0 %3503
  %3505 = vrot.lane.b32.xlu0 %v3456, 112
  %v3506 = vpop.permute.xlu0 %3505
  %3507 = vrot.lane.b32.xlu0 %v3457, 112
  %v3508 = vpop.permute.xlu0 %3507
  %3509 = vrot.lane.b32.xlu0 %v3458, 112
  %v3510 = vpop.permute.xlu0 %3509
  %3511 = vrot.lane.b32.xlu0 %v3459, 112
  %v3512 = vpop.permute.xlu0 %3511
  %3513 = vrot.lane.b32.xlu0 %v3460, 112
  %v3514 = vpop.permute.xlu0 %3513
  %3515 = vrot.lane.b32.xlu0 %v3461, 112
  %v3516 = vpop.permute.xlu0 %3515
  %3517 = vrot.lane.b32.xlu0 %v3462, 112
  %v3518 = vpop.permute.xlu0 %3517
  %3519 = vrot.lane.b32.xlu0 %v3463, 112
  %v3520 = vpop.permute.xlu0 %3519
  %3521 = vrot.lane.b32.xlu0 %v3464, 112
  %v3522 = vpop.permute.xlu0 %3521
  %3523 = vrot.lane.b32.xlu0 %v3465, 112
  %v3524 = vpop.permute.xlu0 %3523
  %3525 = vrot.lane.b32.xlu0 %v3466, 112
  %v3526 = vpop.permute.xlu0 %3525
  %v3527 = vsel %vm268, %v3488, %v3490
  %v3528 = vsel %vm268, %v3490, %v3492
  %v3529 = vsel %vm268, %v3492, %v3494
  %v3530 = vsel %vm268, %v3494, %v3496
  %v3531 = vsel %vm268, %v3498, %v3500
  %v3532 = vsel %vm268, %v3500, %v3502
  %v3533 = vsel %vm268, %v3502, %v3504
  %v3534 = vsel %vm268, %v3504, %v3506
  %v3535 = vsel %vm268, %v3508, %v3510
  %v3536 = vsel %vm268, %v3510, %v3512
  %v3537 = vsel %vm268, %v3512, %v3514
  %v3538 = vsel %vm268, %v3514, %v3516
  %v3539 = vsel %vm268, %v3518, %v3520
  %v3540 = vsel %vm268, %v3520, %v3522
  %v3541 = vsel %vm268, %v3522, %v3524
  %v3542 = vsel %vm268, %v3524, %v3526
  %3559 = vst [vmem:[#allocation3 + $0x380] sm:$0xff] %v3527
  %3560 = vst [vmem:[#allocation3 + $0x388] sm:$0xff] %v3528
  %3561 = vst [vmem:[#allocation3 + $0x390] sm:$0xff] %v3529
  %3562 = vst [vmem:[#allocation3 + $0x398] sm:$0xff] %v3530
  %3563 = vst [vmem:[#allocation3 + $0x3a0] sm:$0xff] %v3531
  %3564 = vst [vmem:[#allocation3 + $0x3a8] sm:$0xff] %v3532
  %3565 = vst [vmem:[#allocation3 + $0x3b0] sm:$0xff] %v3533
  %3566 = vst [vmem:[#allocation3 + $0x3b8] sm:$0xff] %v3534
  %3567 = vst [vmem:[#allocation3 + $0x3c0] sm:$0xff] %v3535
  %3568 = vst [vmem:[#allocation3 + $0x3c8] sm:$0xff] %v3536
  %3569 = vst [vmem:[#allocation3 + $0x3d0] sm:$0xff] %v3537
  %3570 = vst [vmem:[#allocation3 + $0x3d8] sm:$0xff] %v3538
  %3571 = vst [vmem:[#allocation3 + $0x3e0] sm:$0xff] %v3539
  %3572 = vst [vmem:[#allocation3 + $0x3e8] sm:$0xff] %v3540
  %3573 = vst [vmem:[#allocation3 + $0x3f0] sm:$0xff] %v3541
  %3574 = vst [vmem:[#allocation3 + $0x3f8] sm:$0xff] %v3542
  %v3575 = vld [vmem:[#allocation2 + $0x8] sm:$0xff]
  %v3576 = vld [vmem:[#allocation2 + $0x10] sm:$0xff]
  %v3577 = vld [vmem:[#allocation2 + $0x18] sm:$0xff]
  %v3578 = vld [vmem:[#allocation2 + $0x20] sm:$0xff]
  %v3579 = vld [vmem:[#allocation2 + $0x28] sm:$0xff]
  %v3580 = vld [vmem:[#allocation2 + $0x38] sm:$0xff]
  %v3581 = vld [vmem:[#allocation2 + $0x40] sm:$0xff]
  %v3582 = vld [vmem:[#allocation2 + $0x48] sm:$0xff]
  %v3583 = vld [vmem:[#allocation2 + $0x50] sm:$0xff]
  %v3584 = vld [vmem:[#allocation2 + $0x58] sm:$0xff]
  %v3585 = vld [vmem:[#allocation2 + $0x68] sm:$0xff]
  %v3586 = vld [vmem:[#allocation2 + $0x70] sm:$0xff]
  %v3587 = vld [vmem:[#allocation2 + $0x78] sm:$0xff]
  %v3588 = vld [vmem:[#allocation2 + $0x80] sm:$0xff]
  %v3589 = vld [vmem:[#allocation2 + $0x88] sm:$0xff]
  %v3590 = vld [vmem:[#allocation2 + $0x98] sm:$0xff]
  %v3591 = vld [vmem:[#allocation2 + $0xa0] sm:$0xff]
  %v3592 = vld [vmem:[#allocation2 + $0xa8] sm:$0xff]
  %v3593 = vld [vmem:[#allocation2 + $0xb0] sm:$0xff]
  %v3594 = vld [vmem:[#allocation2 + $0xb8] sm:$0xff]
  %v3595 = vld [vmem:[%s1377] ss:$8 sm:$0xf]
  %v3597 = vlaneseq
  %v3598 = vshrl.u32 %v3597, 7
  %v3599 = vsub.s32 0, %v3598
  %v3600 = vrot.slane %v3595, %v3599
  %v3601 = vlaneseq
  %v3602 = vshrl.u32 %v3601, 7
  %v3603 = vsub.s32 1, %v3602
  %v3604 = vrot.slane %v3595, %v3603
  %v3605 = vlaneseq
  %v3606 = vshrl.u32 %v3605, 7
  %v3607 = vsub.s32 2, %v3606
  %v3608 = vrot.slane %v3595, %v3607
  %v3609 = vlaneseq
  %v3610 = vshrl.u32 %v3609, 7
  %v3611 = vsub.s32 3, %v3610
  %v3612 = vrot.slane %v3595, %v3611
  %3613 = vrot.lane.b32.xlu0 %v3600, 17
  %v3614 = vpop.permute.xlu0 %3613
  %3615 = vrot.lane.b32.xlu0 %v3604, 17
  %v3616 = vpop.permute.xlu0 %3615
  %3617 = vrot.lane.b32.xlu0 %v3608, 17
  %v3618 = vpop.permute.xlu0 %3617
  %3619 = vrot.lane.b32.xlu0 %v3612, 17
  %v3620 = vpop.permute.xlu0 %3619
  %v3621 = vsel %vm172, %v3614, %v3616
  %v3622 = vsel %vm172, %v3616, %v3618
  %v3623 = vsel %vm172, %v3618, %v3620
  %v3629 = vmul.f32 %v3575, %v3614
  %v3630 = vmul.f32 %v3576, %v3621
  %v3631 = vmul.f32 %v3577, %v3622
  %v3632 = vmul.f32 %v3578, %v3623
  %v3633 = vmul.f32 %v3579, %v3620
  %v3634 = vmul.f32 %v3580, %v3614
  %v3635 = vmul.f32 %v3581, %v3621
  %v3636 = vmul.f32 %v3582, %v3622
  %v3637 = vmul.f32 %v3583, %v3623
  %v3638 = vmul.f32 %v3584, %v3620
  %v3639 = vmul.f32 %v3585, %v3614
  %v3640 = vmul.f32 %v3586, %v3621
  %v3641 = vmul.f32 %v3587, %v3622
  %v3642 = vmul.f32 %v3588, %v3623
  %v3643 = vmul.f32 %v3589, %v3620
  %v3644 = vmul.f32 %v3590, %v3614
  %v3645 = vmul.f32 %v3591, %v3621
  %v3646 = vmul.f32 %v3592, %v3622
  %v3647 = vmul.f32 %v3593, %v3623
  %v3648 = vmul.f32 %v3594, %v3620
  %3669 = vrot.lane.b32.xlu0 %v3629, 111
  %v3670 = vpop.permute.xlu0 %3669
  %3671 = vrot.lane.b32.xlu0 %v3630, 111
  %v3672 = vpop.permute.xlu0 %3671
  %3673 = vrot.lane.b32.xlu0 %v3631, 111
  %v3674 = vpop.permute.xlu0 %3673
  %3675 = vrot.lane.b32.xlu0 %v3632, 111
  %v3676 = vpop.permute.xlu0 %3675
  %3677 = vrot.lane.b32.xlu0 %v3633, 111
  %v3678 = vpop.permute.xlu0 %3677
  %3679 = vrot.lane.b32.xlu0 %v3634, 111
  %v3680 = vpop.permute.xlu0 %3679
  %3681 = vrot.lane.b32.xlu0 %v3635, 111
  %v3682 = vpop.permute.xlu0 %3681
  %3683 = vrot.lane.b32.xlu0 %v3636, 111
  %v3684 = vpop.permute.xlu0 %3683
  %3685 = vrot.lane.b32.xlu0 %v3637, 111
  %v3686 = vpop.permute.xlu0 %3685
  %3687 = vrot.lane.b32.xlu0 %v3638, 111
  %v3688 = vpop.permute.xlu0 %3687
  %3689 = vrot.lane.b32.xlu0 %v3639, 111
  %v3690 = vpop.permute.xlu0 %3689
  %3691 = vrot.lane.b32.xlu0 %v3640, 111
  %v3692 = vpop.permute.xlu0 %3691
  %3693 = vrot.lane.b32.xlu0 %v3641, 111
  %v3694 = vpop.permute.xlu0 %3693
  %3695 = vrot.lane.b32.xlu0 %v3642, 111
  %v3696 = vpop.permute.xlu0 %3695
  %3697 = vrot.lane.b32.xlu0 %v3643, 111
  %v3698 = vpop.permute.xlu0 %3697
  %3699 = vrot.lane.b32.xlu0 %v3644, 111
  %v3700 = vpop.permute.xlu0 %3699
  %3701 = vrot.lane.b32.xlu0 %v3645, 111
  %v3702 = vpop.permute.xlu0 %3701
  %3703 = vrot.lane.b32.xlu0 %v3646, 111
  %v3704 = vpop.permute.xlu0 %3703
  %3705 = vrot.lane.b32.xlu0 %v3647, 111
  %v3706 = vpop.permute.xlu0 %3705
  %3707 = vrot.lane.b32.xlu0 %v3648, 111
  %v3708 = vpop.permute.xlu0 %3707
  %v3709 = vsel %vm83, %v3670, %v3672
  %v3710 = vsel %vm83, %v3672, %v3674
  %v3711 = vsel %vm83, %v3674, %v3676
  %v3712 = vsel %vm83, %v3676, %v3678
  %v3713 = vsel %vm83, %v3680, %v3682
  %v3714 = vsel %vm83, %v3682, %v3684
  %v3715 = vsel %vm83, %v3684, %v3686
  %v3716 = vsel %vm83, %v3686, %v3688
  %v3717 = vsel %vm83, %v3690, %v3692
  %v3718 = vsel %vm83, %v3692, %v3694
  %v3719 = vsel %vm83, %v3694, %v3696
  %v3720 = vsel %vm83, %v3696, %v3698
  %v3721 = vsel %vm83, %v3700, %v3702
  %v3722 = vsel %vm83, %v3702, %v3704
  %v3723 = vsel %vm83, %v3704, %v3706
  %v3724 = vsel %vm83, %v3706, %v3708
  %3741 = vst [vmem:[#allocation3 + $0x400] sm:$0xff] %v3709
  %3742 = vst [vmem:[#allocation3 + $0x408] sm:$0xff] %v3710
  %3743 = vst [vmem:[#allocation3 + $0x410] sm:$0xff] %v3711
  %3744 = vst [vmem:[#allocation3 + $0x418] sm:$0xff] %v3712
  %3745 = vst [vmem:[#allocation3 + $0x420] sm:$0xff] %v3713
  %3746 = vst [vmem:[#allocation3 + $0x428] sm:$0xff] %v3714
  %3747 = vst [vmem:[#allocation3 + $0x430] sm:$0xff] %v3715
  %3748 = vst [vmem:[#allocation3 + $0x438] sm:$0xff] %v3716
  %3749 = vst [vmem:[#allocation3 + $0x440] sm:$0xff] %v3717
  %3750 = vst [vmem:[#allocation3 + $0x448] sm:$0xff] %v3718
  %3751 = vst [vmem:[#allocation3 + $0x450] sm:$0xff] %v3719
  %3752 = vst [vmem:[#allocation3 + $0x458] sm:$0xff] %v3720
  %3753 = vst [vmem:[#allocation3 + $0x460] sm:$0xff] %v3721
  %3754 = vst [vmem:[#allocation3 + $0x468] sm:$0xff] %v3722
  %3755 = vst [vmem:[#allocation3 + $0x470] sm:$0xff] %v3723
  %3756 = vst [vmem:[#allocation3 + $0x478] sm:$0xff] %v3724
  %v3757 = vld [vmem:[%s5] sm:$0xff]
  %v3758 = vld [vmem:[%s5 + $0x8] sm:$0xff]
  %v3759 = vld [vmem:[%s5 + $0x10] sm:$0xff]
  %v3760 = vld [vmem:[%s5 + $0x18] sm:$0xff]
  %v3761 = vld [vmem:[%s5 + $0x20] sm:$0xff]
  %v3762 = vld [vmem:[%s5 + $0x28] sm:$0xff]
  %v3763 = vld [vmem:[%s5 + $0x30] sm:$0xff]
  %v3764 = vld [vmem:[%s5 + $0x38] sm:$0xff]
  %v3765 = vld [vmem:[%s5 + $0x40] sm:$0xff]
  %v3766 = vld [vmem:[%s5 + $0x48] sm:$0xff]
  %v3767 = vld [vmem:[%s5 + $0x50] sm:$0xff]
  %v3768 = vld [vmem:[%s5 + $0x58] sm:$0xff]
  %v3769 = vld [vmem:[#allocation3] sm:$0xff]
  %v3770 = vld [vmem:[#allocation3 + $0x8] sm:$0xff]
  %v3771 = vld [vmem:[#allocation3 + $0x10] sm:$0xff]
  %v3772 = vld [vmem:[#allocation3 + $0x18] sm:$0xff]
  %v3773 = vld [vmem:[#allocation3 + $0x20] sm:$0xff]
  %v3774 = vld [vmem:[#allocation3 + $0x28] sm:$0xff]
  %v3775 = vld [vmem:[#allocation3 + $0x30] sm:$0xff]
  %v3776 = vld [vmem:[#allocation3 + $0x38] sm:$0xff]
  %v3777 = vld [vmem:[#allocation3 + $0x40] sm:$0xff]
  %v3778 = vld [vmem:[#allocation3 + $0x48] sm:$0xff]
  %v3779 = vld [vmem:[#allocation3 + $0x50] sm:$0xff]
  %v3780 = vld [vmem:[#allocation3 + $0x58] sm:$0xff]
  %v3781 = vld [vmem:[#allocation3 + $0x60] sm:$0xff]
  %v3782 = vld [vmem:[#allocation3 + $0x68] sm:$0xff]
  %v3783 = vld [vmem:[#allocation3 + $0x70] sm:$0xff]
  %v3784 = vld [vmem:[#allocation3 + $0x78] sm:$0xff]
  %v3785 = vld [vmem:[#allocation3 + $0x80] sm:$0xff]
  %v3786 = vld [vmem:[#allocation3 + $0x88] sm:$0xff]
  %v3787 = vld [vmem:[#allocation3 + $0x90] sm:$0xff]
  %v3788 = vld [vmem:[#allocation3 + $0x98] sm:$0xff]
  %v3789 = vld [vmem:[#allocation3 + $0xa0] sm:$0xff]
  %v3790 = vld [vmem:[#allocation3 + $0xa8] sm:$0xff]
  %v3791 = vld [vmem:[#allocation3 + $0xb0] sm:$0xff]
  %v3792 = vld [vmem:[#allocation3 + $0xb8] sm:$0xff]
  %v3793 = vld [vmem:[#allocation3 + $0xc0] sm:$0xff]
  %v3794 = vld [vmem:[#allocation3 + $0xc8] sm:$0xff]
  %v3795 = vld [vmem:[#allocation3 + $0xd0] sm:$0xff]
  %v3796 = vld [vmem:[#allocation3 + $0xd8] sm:$0xff]
  %v3797 = vld [vmem:[#allocation3 + $0xe0] sm:$0xff]
  %v3798 = vld [vmem:[#allocation3 + $0xe8] sm:$0xff]
  %v3799 = vld [vmem:[#allocation3 + $0xf0] sm:$0xff]
  %v3800 = vld [vmem:[#allocation3 + $0xf8] sm:$0xff]
  %v3801 = vld [vmem:[#allocation3 + $0x100] sm:$0xff]
  %v3802 = vld [vmem:[#allocation3 + $0x108] sm:$0xff]
  %v3803 = vld [vmem:[#allocation3 + $0x110] sm:$0xff]
  %v3804 = vld [vmem:[#allocation3 + $0x118] sm:$0xff]
  %v3805 = vld [vmem:[#allocation3 + $0x120] sm:$0xff]
  %v3806 = vld [vmem:[#allocation3 + $0x128] sm:$0xff]
  %v3807 = vld [vmem:[#allocation3 + $0x130] sm:$0xff]
  %v3808 = vld [vmem:[#allocation3 + $0x138] sm:$0xff]
  %v3809 = vld [vmem:[#allocation3 + $0x140] sm:$0xff]
  %v3810 = vld [vmem:[#allocation3 + $0x148] sm:$0xff]
  %v3811 = vld [vmem:[#allocation3 + $0x150] sm:$0xff]
  %v3812 = vld [vmem:[#allocation3 + $0x158] sm:$0xff]
  %v3813 = vld [vmem:[#allocation3 + $0x160] sm:$0xff]
  %v3814 = vld [vmem:[#allocation3 + $0x168] sm:$0xff]
  %v3815 = vld [vmem:[#allocation3 + $0x170] sm:$0xff]
  %v3816 = vld [vmem:[#allocation3 + $0x178] sm:$0xff]
  %v3817 = vld [vmem:[#allocation3 + $0x180] sm:$0xff]
  %v3818 = vld [vmem:[#allocation3 + $0x188] sm:$0xff]
  %v3819 = vld [vmem:[#allocation3 + $0x190] sm:$0xff]
  %v3820 = vld [vmem:[#allocation3 + $0x198] sm:$0xff]
  %v3821 = vld [vmem:[#allocation3 + $0x1a0] sm:$0xff]
  %v3822 = vld [vmem:[#allocation3 + $0x1a8] sm:$0xff]
  %v3823 = vld [vmem:[#allocation3 + $0x1b0] sm:$0xff]
  %v3824 = vld [vmem:[#allocation3 + $0x1b8] sm:$0xff]
  %v3825 = vld [vmem:[#allocation3 + $0x1c0] sm:$0xff]
  %v3826 = vld [vmem:[#allocation3 + $0x1c8] sm:$0xff]
  %v3827 = vld [vmem:[#allocation3 + $0x1d0] sm:$0xff]
  %v3828 = vld [vmem:[#allocation3 + $0x1d8] sm:$0xff]
  %v3829 = vld [vmem:[#allocation3 + $0x1e0] sm:$0xff]
  %v3830 = vld [vmem:[#allocation3 + $0x1e8] sm:$0xff]
  %v3831 = vld [vmem:[#allocation3 + $0x1f0] sm:$0xff]
  %v3832 = vld [vmem:[#allocation3 + $0x1f8] sm:$0xff]
  %v3833 = vld [vmem:[#allocation3 + $0x200] sm:$0xff]
  %v3834 = vld [vmem:[#allocation3 + $0x208] sm:$0xff]
  %v3835 = vld [vmem:[#allocation3 + $0x210] sm:$0xff]
  %v3836 = vld [vmem:[#allocation3 + $0x218] sm:$0xff]
  %v3837 = vld [vmem:[#allocation3 + $0x220] sm:$0xff]
  %v3838 = vld [vmem:[#allocation3 + $0x228] sm:$0xff]
  %v3839 = vld [vmem:[#allocation3 + $0x230] sm:$0xff]
  %v3840 = vld [vmem:[#allocation3 + $0x238] sm:$0xff]
  %v3841 = vld [vmem:[#allocation3 + $0x240] sm:$0xff]
  %v3842 = vld [vmem:[#allocation3 + $0x248] sm:$0xff]
  %v3843 = vld [vmem:[#allocation3 + $0x250] sm:$0xff]
  %v3844 = vld [vmem:[#allocation3 + $0x258] sm:$0xff]
  %v3845 = vld [vmem:[#allocation3 + $0x260] sm:$0xff]
  %v3846 = vld [vmem:[#allocation3 + $0x268] sm:$0xff]
  %v3847 = vld [vmem:[#allocation3 + $0x270] sm:$0xff]
  %v3848 = vld [vmem:[#allocation3 + $0x278] sm:$0xff]
  %v3849 = vld [vmem:[#allocation3 + $0x280] sm:$0xff]
  %v3850 = vld [vmem:[#allocation3 + $0x288] sm:$0xff]
  %v3851 = vld [vmem:[#allocation3 + $0x290] sm:$0xff]
  %v3852 = vld [vmem:[#allocation3 + $0x298] sm:$0xff]
  %v3853 = vld [vmem:[#allocation3 + $0x2a0] sm:$0xff]
  %v3854 = vld [vmem:[#allocation3 + $0x2a8] sm:$0xff]
  %v3855 = vld [vmem:[#allocation3 + $0x2b0] sm:$0xff]
  %v3856 = vld [vmem:[#allocation3 + $0x2b8] sm:$0xff]
  %v3857 = vld [vmem:[#allocation3 + $0x2c0] sm:$0xff]
  %v3858 = vld [vmem:[#allocation3 + $0x2c8] sm:$0xff]
  %v3859 = vld [vmem:[#allocation3 + $0x2d0] sm:$0xff]
  %v3860 = vld [vmem:[#allocation3 + $0x2d8] sm:$0xff]
  %v3861 = vld [vmem:[#allocation3 + $0x2e0] sm:$0xff]
  %v3862 = vld [vmem:[#allocation3 + $0x2e8] sm:$0xff]
  %v3863 = vld [vmem:[#allocation3 + $0x2f0] sm:$0xff]
  %v3864 = vld [vmem:[#allocation3 + $0x2f8] sm:$0xff]
  %v3865 = vld [vmem:[#allocation3 + $0x300] sm:$0xff]
  %v3866 = vld [vmem:[#allocation3 + $0x308] sm:$0xff]
  %v3867 = vld [vmem:[#allocation3 + $0x310] sm:$0xff]
  %v3868 = vld [vmem:[#allocation3 + $0x318] sm:$0xff]
  %v3869 = vld [vmem:[#allocation3 + $0x320] sm:$0xff]
  %v3870 = vld [vmem:[#allocation3 + $0x328] sm:$0xff]
  %v3871 = vld [vmem:[#allocation3 + $0x330] sm:$0xff]
  %v3872 = vld [vmem:[#allocation3 + $0x338] sm:$0xff]
  %v3873 = vld [vmem:[#allocation3 + $0x340] sm:$0xff]
  %v3874 = vld [vmem:[#allocation3 + $0x348] sm:$0xff]
  %v3875 = vld [vmem:[#allocation3 + $0x350] sm:$0xff]
  %v3876 = vld [vmem:[#allocation3 + $0x358] sm:$0xff]
  %v3877 = vld [vmem:[#allocation3 + $0x360] sm:$0xff]
  %v3878 = vld [vmem:[#allocation3 + $0x368] sm:$0xff]
  %v3879 = vld [vmem:[#allocation3 + $0x370] sm:$0xff]
  %v3880 = vld [vmem:[#allocation3 + $0x378] sm:$0xff]
  %v3881 = vld [vmem:[#allocation3 + $0x380] sm:$0xff]
  %v3882 = vld [vmem:[#allocation3 + $0x388] sm:$0xff]
  %v3883 = vld [vmem:[#allocation3 + $0x390] sm:$0xff]
  %v3884 = vld [vmem:[#allocation3 + $0x398] sm:$0xff]
  %v3885 = vld [vmem:[#allocation3 + $0x3a0] sm:$0xff]
  %v3886 = vld [vmem:[#allocation3 + $0x3a8] sm:$0xff]
  %v3887 = vld [vmem:[#allocation3 + $0x3b0] sm:$0xff]
  %v3888 = vld [vmem:[#allocation3 + $0x3b8] sm:$0xff]
  %v3889 = vld [vmem:[#allocation3 + $0x3c0] sm:$0xff]
  %v3890 = vld [vmem:[#allocation3 + $0x3c8] sm:$0xff]
  %v3891 = vld [vmem:[#allocation3 + $0x3d0] sm:$0xff]
  %v3892 = vld [vmem:[#allocation3 + $0x3d8] sm:$0xff]
  %v3893 = vld [vmem:[#allocation3 + $0x3e0] sm:$0xff]
  %v3894 = vld [vmem:[#allocation3 + $0x3e8] sm:$0xff]
  %v3895 = vld [vmem:[#allocation3 + $0x3f0] sm:$0xff]
  %v3896 = vld [vmem:[#allocation3 + $0x3f8] sm:$0xff]
  %v3897 = vld [vmem:[#allocation3 + $0x400] sm:$0xff]
  %v3898 = vld [vmem:[#allocation3 + $0x408] sm:$0xff]
  %v3899 = vld [vmem:[#allocation3 + $0x410] sm:$0xff]
  %v3900 = vld [vmem:[#allocation3 + $0x418] sm:$0xff]
  %v3901 = vld [vmem:[#allocation3 + $0x420] sm:$0xff]
  %v3902 = vld [vmem:[#allocation3 + $0x428] sm:$0xff]
  %v3903 = vld [vmem:[#allocation3 + $0x430] sm:$0xff]
  %v3904 = vld [vmem:[#allocation3 + $0x438] sm:$0xff]
  %v3905 = vld [vmem:[#allocation3 + $0x440] sm:$0xff]
  %v3906 = vld [vmem:[#allocation3 + $0x448] sm:$0xff]
  %v3907 = vld [vmem:[#allocation3 + $0x450] sm:$0xff]
  %v3908 = vld [vmem:[#allocation3 + $0x458] sm:$0xff]
  %v3909 = vld [vmem:[#allocation3 + $0x460] sm:$0xff]
  %v3910 = vld [vmem:[#allocation3 + $0x468] sm:$0xff]
  %v3911 = vld [vmem:[#allocation3 + $0x470] sm:$0xff]
  %v3912 = vld [vmem:[#allocation3 + $0x478] sm:$0xff]
  %v3914 = vsel %vm1696, %v3759, 0
  %v3917 = vsel %vm1696, %v3762, 0
  %v3920 = vsel %vm1696, %v3765, 0
  %v3923 = vsel %vm1696, %v3768, 0
  %3925 = vmatprep.subr.mxu0 %v3770
  %3926 = vmatpush1.msra.mxu0 %v3769
  %3927 = vmatprep.subr.mxu0 %v3774
  %3928 = vmatpush1.msra.mxu0 %v3773
  %3929 = vmatprep.subr.mxu0 %v3778
  %3930 = vmatpush1.msra.mxu0 %v3777
  %3931 = vmatprep.subr.mxu0 %v3782
  %3932 = vmatpush1.msra.mxu0 %v3781
  %3933 = vmatprep.subr.mxu0 %v3786
  %3934 = vmatpush1.msra.mxu0 %v3785
  %3935 = vmatprep.subr.mxu0 %v3790
  %3936 = vmatpush1.msra.mxu0 %v3789
  %3937 = vmatprep.subr.mxu0 %v3794
  %3938 = vmatpush1.msra.mxu0 %v3793
  %3939 = vmatprep.subr.mxu0 %v3798
  %3940 = vmatpush1.msra.mxu0 %v3797
  %3941 = vmatprep.subr.mxu0 %v3802
  %3942 = vmatpush1.msra.mxu0 %v3801
  %3943 = vmatprep.subr.mxu0 %v3806
  %3944 = vmatpush1.msra.mxu0 %v3805
  %3945 = vmatprep.subr.mxu0 %v3810
  %3946 = vmatpush1.msra.mxu0 %v3809
  %3947 = vmatprep.subr.mxu0 %v3814
  %3948 = vmatpush1.msra.mxu0 %v3813
  %3949 = vmatprep.subr.mxu0 %v3818
  %3950 = vmatpush1.msra.mxu0 %v3817
  %3951 = vmatprep.subr.mxu0 %v3822
  %3952 = vmatpush1.msra.mxu0 %v3821
  %3953 = vmatprep.subr.mxu0 %v3826
  %3954 = vmatpush1.msra.mxu0 %v3825
  %3955 = vmatprep.subr.mxu0 %v3830
  %3956 = vmatpush1.msra.mxu0 %v3829
  %3957 = vmatprep.subr.mxu0 %v3834
  %3958 = vmatpush1.msra.mxu0 %v3833
  %3959 = vmatprep.subr.mxu0 %v3838
  %3960 = vmatpush1.msra.mxu0 %v3837
  %3961 = vmatprep.subr.mxu0 %v3842
  %3962 = vmatpush1.msra.mxu0 %v3841
  %3963 = vmatprep.subr.mxu0 %v3846
  %3964 = vmatpush1.msra.mxu0 %v3845
  %3965 = vmatprep.subr.mxu0 %v3850
  %3966 = vmatpush1.msra.mxu0 %v3849
  %3967 = vmatprep.subr.mxu0 %v3854
  %3968 = vmatpush1.msra.mxu0 %v3853
  %3969 = vmatprep.subr.mxu0 %v3858
  %3970 = vmatpush1.msra.mxu0 %v3857
  %3971 = vmatprep.subr.mxu0 %v3862
  %3972 = vmatpush1.msra.mxu0 %v3861
  %3973 = vmatprep.subr.mxu0 %v3866
  %3974 = vmatpush1.msra.mxu0 %v3865
  %3975 = vmatprep.subr.mxu0 %v3870
  %3976 = vmatpush1.msra.mxu0 %v3869
  %3977 = vmatprep.subr.mxu0 %v3874
  %3978 = vmatpush1.msra.mxu0 %v3873
  %3979 = vmatprep.subr.mxu0 %v3878
  %3980 = vmatpush1.msra.mxu0 %v3877
  %3981 = vmatprep.subr.mxu0 %v3882
  %3982 = vmatpush1.msra.mxu0 %v3881
  %3983 = vmatprep.subr.mxu0 %v3886
  %3984 = vmatpush1.msra.mxu0 %v3885
  %3985 = vmatprep.subr.mxu0 %v3890
  %3986 = vmatpush1.msra.mxu0 %v3889
  %3987 = vmatprep.subr.mxu0 %v3894
  %3988 = vmatpush1.msra.mxu0 %v3893
  %3989 = vmatprep.mubr.f32.mxu0 %v3758
  %3990 = vmatmul.mubr.f32.gmra.mrb[0].mxu0 %v3757
  %v3991 = vpop.f32.mrb[0].mxu0
  %v3992 = vadd.f32 0.0, %v3991
  %v3993 = vpop.f32.mrb[0].mxu0
  %v3994 = vadd.f32 0.0, %v3993
  %3995 = vmatprep.mubr.f32.mxu0 %v3761
  %3996 = vmatmul.mubr.f32.gmra.mrb[0].mxu0 %v3760
  %v3997 = vpop.f32.mrb[0].mxu0
  %v3998 = vadd.f32 0.0, %v3997
  %v3999 = vpop.f32.mrb[0].mxu0
  %v4000 = vadd.f32 0.0, %v3999
  %4001 = vmatprep.mubr.f32.mxu0 %v3764
  %4002 = vmatmul.mubr.f32.gmra.mrb[0].mxu0 %v3763
  %v4003 = vpop.f32.mrb[0].mxu0
  %v4004 = vadd.f32 0.0, %v4003
  %v4005 = vpop.f32.mrb[0].mxu0
  %v4006 = vadd.f32 0.0, %v4005
  %4007 = vmatprep.mubr.f32.mxu0 %v3767
  %4008 = vmatmul.mubr.f32.gmra.mrb[0].mxu0 %v3766
  %v4009 = vpop.f32.mrb[0].mxu0
  %v4010 = vadd.f32 0.0, %v4009
  %v4011 = vpop.f32.mrb[0].mxu0
  %v4012 = vadd.f32 0.0, %v4011
  %4013 = vdwg.mxu0
  %4014 = vmatprep.subr.mxu0 %v3898
  %4015 = vmatpush1.msra.mxu0 %v3897
  %4016 = vmatprep.subr.mxu0 %v3902
  %4017 = vmatpush1.msra.mxu0 %v3901
  %4018 = vmatprep.subr.mxu0 %v3906
  %4019 = vmatpush1.msra.mxu0 %v3905
  %4020 = vmatprep.subr.mxu0 %v3910
  %4021 = vmatpush1.msra.mxu0 %v3909
  %4022 = vmatprep.subr.mxu0 0.0
  %4023 = vmatpush1.msra.mxu0 0.0
  %4024 = vmatprep.subr.mxu0 0.0
  %4025 = vmatpush1.msra.mxu0 0.0
  %4026 = vmatprep.subr.mxu0 0.0
  %4027 = vmatpush1.msra.mxu0 0.0
  %4028 = vmatprep.subr.mxu0 0.0
  %4029 = vmatpush1.msra.mxu0 0.0
  %4030 = vmatprep.subr.mxu0 0.0
  %4031 = vmatpush1.msra.mxu0 0.0
  %4032 = vmatprep.subr.mxu0 0.0
  %4033 = vmatpush1.msra.mxu0 0.0
  %4034 = vmatprep.subr.mxu0 0.0
  %4035 = vmatpush1.msra.mxu0 0.0
  %4036 = vmatprep.subr.mxu0 0.0
  %4037 = vmatpush1.msra.mxu0 0.0
  %4038 = vmatprep.subr.mxu0 0.0
  %4039 = vmatpush1.msra.mxu0 0.0
  %4040 = vmatprep.subr.mxu0 0.0
  %4041 = vmatpush1.msra.mxu0 0.0
  %4042 = vmatprep.subr.mxu0 0.0
  %4043 = vmatpush1.msra.mxu0 0.0
  %4044 = vmatprep.subr.mxu0 0.0
  %4045 = vmatpush1.msra.mxu0 0.0
  %4046 = vmatprep.subr.mxu0 0.0
  %4047 = vmatpush1.msra.mxu0 0.0
  %4048 = vmatprep.subr.mxu0 0.0
  %4049 = vmatpush1.msra.mxu0 0.0
  %4050 = vmatprep.subr.mxu0 0.0
  %4051 = vmatpush1.msra.mxu0 0.0
  %4052 = vmatprep.subr.mxu0 0.0
  %4053 = vmatpush1.msra.mxu0 0.0
  %4054 = vmatprep.subr.mxu0 0.0
  %4055 = vmatpush1.msra.mxu0 0.0
  %4056 = vmatprep.subr.mxu0 0.0
  %4057 = vmatpush1.msra.mxu0 0.0
  %4058 = vmatprep.subr.mxu0 0.0
  %4059 = vmatpush1.msra.mxu0 0.0
  %4060 = vmatprep.subr.mxu0 0.0
  %4061 = vmatpush1.msra.mxu0 0.0
  %4062 = vmatprep.subr.mxu0 0.0
  %4063 = vmatpush1.msra.mxu0 0.0
  %4064 = vmatprep.subr.mxu0 0.0
  %4065 = vmatpush1.msra.mxu0 0.0
  %4066 = vmatprep.subr.mxu0 0.0
  %4067 = vmatpush1.msra.mxu0 0.0
  %4068 = vmatprep.subr.mxu0 0.0
  %4069 = vmatpush1.msra.mxu0 0.0
  %4070 = vmatprep.subr.mxu0 0.0
  %4071 = vmatpush1.msra.mxu0 0.0
  %4072 = vmatprep.subr.mxu0 0.0
  %4073 = vmatpush1.msra.mxu0 0.0
  %4074 = vmatprep.subr.mxu0 0.0
  %4075 = vmatpush1.msra.mxu0 0.0
  %4076 = vmatprep.subr.mxu0 0.0
  %4077 = vmatpush1.msra.mxu0 0.0
  %4078 = vmatprep.mubr.f32.mxu0 0.0
  %4079 = vmatmul.mubr.f32.gmra.mrb[0].mxu0 %v3914
  %v4080 = vpop.f32.mrb[0].mxu0
  %v4081 = vadd.f32 %v3992, %v4080
  %v4082 = vpop.f32.mrb[0].mxu0
  %v4083 = vadd.f32 %v3994, %v4082
  %4084 = vmatprep.mubr.f32.mxu0 0.0
  %4085 = vmatmul.mubr.f32.gmra.mrb[0].mxu0 %v3917
  %v4086 = vpop.f32.mrb[0].mxu0
  %v4087 = vadd.f32 %v3998, %v4086
  %v4088 = vpop.f32.mrb[0].mxu0
  %v4089 = vadd.f32 %v4000, %v4088
  %4090 = vmatprep.mubr.f32.mxu0 0.0
  %4091 = vmatmul.mubr.f32.gmra.mrb[0].mxu0 %v3920
  %v4092 = vpop.f32.mrb[0].mxu0
  %v4093 = vadd.f32 %v4004, %v4092
  %v4094 = vpop.f32.mrb[0].mxu0
  %v4095 = vadd.f32 %v4006, %v4094
  %4096 = vmatprep.mubr.f32.mxu0 0.0
  %4097 = vmatmul.mubr.f32.gmra.mrb[0].mxu0 %v3923
  %v4098 = vpop.f32.mrb[0].mxu0
  %v4099 = vadd.f32 %v4010, %v4098
  %v4100 = vpop.f32.mrb[0].mxu0
  %v4101 = vadd.f32 %v4012, %v4100
  %4102 = vdwg.mxu0
  %4103 = vmatprep.subr.mxu0 %v3772
  %4104 = vmatpush1.msra.mxu0 %v3771
  %4105 = vmatprep.subr.mxu0 %v3776
  %4106 = vmatpush1.msra.mxu0 %v3775
  %4107 = vmatprep.subr.mxu0 %v3780
  %4108 = vmatpush1.msra.mxu0 %v3779
  %4109 = vmatprep.subr.mxu0 %v3784
  %4110 = vmatpush1.msra.mxu0 %v3783
  %4111 = vmatprep.subr.mxu0 %v3788
  %4112 = vmatpush1.msra.mxu0 %v3787
  %4113 = vmatprep.subr.mxu0 %v3792
  %4114 = vmatpush1.msra.mxu0 %v3791
  %4115 = vmatprep.subr.mxu0 %v3796
  %4116 = vmatpush1.msra.mxu0 %v3795
  %4117 = vmatprep.subr.mxu0 %v3800
  %4118 = vmatpush1.msra.mxu0 %v3799
  %4119 = vmatprep.subr.mxu0 %v3804
  %4120 = vmatpush1.msra.mxu0 %v3803
  %4121 = vmatprep.subr.mxu0 %v3808
  %4122 = vmatpush1.msra.mxu0 %v3807
  %4123 = vmatprep.subr.mxu0 %v3812
  %4124 = vmatpush1.msra.mxu0 %v3811
  %4125 = vmatprep.subr.mxu0 %v3816
  %4126 = vmatpush1.msra.mxu0 %v3815
  %4127 = vmatprep.subr.mxu0 %v3820
  %4128 = vmatpush1.msra.mxu0 %v3819
  %4129 = vmatprep.subr.mxu0 %v3824
  %4130 = vmatpush1.msra.mxu0 %v3823
  %4131 = vmatprep.subr.mxu0 %v3828
  %4132 = vmatpush1.msra.mxu0 %v3827
  %4133 = vmatprep.subr.mxu0 %v3832
  %4134 = vmatpush1.msra.mxu0 %v3831
  %4135 = vmatprep.subr.mxu0 %v3836
  %4136 = vmatpush1.msra.mxu0 %v3835
  %4137 = vmatprep.subr.mxu0 %v3840
  %4138 = vmatpush1.msra.mxu0 %v3839
  %4139 = vmatprep.subr.mxu0 %v3844
  %4140 = vmatpush1.msra.mxu0 %v3843
  %4141 = vmatprep.subr.mxu0 %v3848
  %4142 = vmatpush1.msra.mxu0 %v3847
  %4143 = vmatprep.subr.mxu0 %v3852
  %4144 = vmatpush1.msra.mxu0 %v3851
  %4145 = vmatprep.subr.mxu0 %v3856
  %4146 = vmatpush1.msra.mxu0 %v3855
  %4147 = vmatprep.subr.mxu0 %v3860
  %4148 = vmatpush1.msra.mxu0 %v3859
  %4149 = vmatprep.subr.mxu0 %v3864
  %4150 = vmatpush1.msra.mxu0 %v3863
  %4151 = vmatprep.subr.mxu0 %v3868
  %4152 = vmatpush1.msra.mxu0 %v3867
  %4153 = vmatprep.subr.mxu0 %v3872
  %4154 = vmatpush1.msra.mxu0 %v3871
  %4155 = vmatprep.subr.mxu0 %v3876
  %4156 = vmatpush1.msra.mxu0 %v3875
  %4157 = vmatprep.subr.mxu0 %v3880
  %4158 = vmatpush1.msra.mxu0 %v3879
  %4159 = vmatprep.subr.mxu0 %v3884
  %4160 = vmatpush1.msra.mxu0 %v3883
  %4161 = vmatprep.subr.mxu0 %v3888
  %4162 = vmatpush1.msra.mxu0 %v3887
  %4163 = vmatprep.subr.mxu0 %v3892
  %4164 = vmatpush1.msra.mxu0 %v3891
  %4165 = vmatprep.subr.mxu0 %v3896
  %4166 = vmatpush1.msra.mxu0 %v3895
  %4167 = vmatprep.mubr.f32.mxu0 %v3758
  %4168 = vmatmul.mubr.f32.gmra.mrb[0].mxu0 %v3757
  %v4169 = vpop.f32.mrb[0].mxu0
  %v4170 = vadd.f32 0.0, %v4169
  %v4171 = vpop.f32.mrb[0].mxu0
  %v4172 = vadd.f32 0.0, %v4171
  %4173 = vmatprep.mubr.f32.mxu0 %v3761
  %4174 = vmatmul.mubr.f32.gmra.mrb[0].mxu0 %v3760
  %v4175 = vpop.f32.mrb[0].mxu0
  %v4176 = vadd.f32 0.0, %v4175
  %v4177 = vpop.f32.mrb[0].mxu0
  %v4178 = vadd.f32 0.0, %v4177
  %4179 = vmatprep.mubr.f32.mxu0 %v3764
  %4180 = vmatmul.mubr.f32.gmra.mrb[0].mxu0 %v3763
  %v4181 = vpop.f32.mrb[0].mxu0
  %v4182 = vadd.f32 0.0, %v4181
  %v4183 = vpop.f32.mrb[0].mxu0
  %v4184 = vadd.f32 0.0, %v4183
  %4185 = vmatprep.mubr.f32.mxu0 %v3767
  %4186 = vmatmul.mubr.f32.gmra.mrb[0].mxu0 %v3766
  %v4187 = vpop.f32.mrb[0].mxu0
  %v4188 = vadd.f32 0.0, %v4187
  %v4189 = vpop.f32.mrb[0].mxu0
  %v4190 = vadd.f32 0.0, %v4189
  %4191 = vdwg.mxu0
  %4192 = vmatprep.subr.mxu0 %v3900
  %4193 = vmatpush1.msra.mxu0 %v3899
  %4194 = vmatprep.subr.mxu0 %v3904
  %4195 = vmatpush1.msra.mxu0 %v3903
  %4196 = vmatprep.subr.mxu0 %v3908
  %4197 = vmatpush1.msra.mxu0 %v3907
  %4198 = vmatprep.subr.mxu0 %v3912
  %4199 = vmatpush1.msra.mxu0 %v3911
  %4200 = vmatprep.subr.mxu0 0.0
  %4201 = vmatpush1.msra.mxu0 0.0
  %4202 = vmatprep.subr.mxu0 0.0
  %4203 = vmatpush1.msra.mxu0 0.0
  %4204 = vmatprep.subr.mxu0 0.0
  %4205 = vmatpush1.msra.mxu0 0.0
  %4206 = vmatprep.subr.mxu0 0.0
  %4207 = vmatpush1.msra.mxu0 0.0
  %4208 = vmatprep.subr.mxu0 0.0
  %4209 = vmatpush1.msra.mxu0 0.0
  %4210 = vmatprep.subr.mxu0 0.0
  %4211 = vmatpush1.msra.mxu0 0.0
  %4212 = vmatprep.subr.mxu0 0.0
  %4213 = vmatpush1.msra.mxu0 0.0
  %4214 = vmatprep.subr.mxu0 0.0
  %4215 = vmatpush1.msra.mxu0 0.0
  %4216 = vmatprep.subr.mxu0 0.0
  %4217 = vmatpush1.msra.mxu0 0.0
  %4218 = vmatprep.subr.mxu0 0.0
  %4219 = vmatpush1.msra.mxu0 0.0
  %4220 = vmatprep.subr.mxu0 0.0
  %4221 = vmatpush1.msra.mxu0 0.0
  %4222 = vmatprep.subr.mxu0 0.0
  %4223 = vmatpush1.msra.mxu0 0.0
  %4224 = vmatprep.subr.mxu0 0.0
  %4225 = vmatpush1.msra.mxu0 0.0
  %4226 = vmatprep.subr.mxu0 0.0
  %4227 = vmatpush1.msra.mxu0 0.0
  %4228 = vmatprep.subr.mxu0 0.0
  %4229 = vmatpush1.msra.mxu0 0.0
  %4230 = vmatprep.subr.mxu0 0.0
  %4231 = vmatpush1.msra.mxu0 0.0
  %4232 = vmatprep.subr.mxu0 0.0
  %4233 = vmatpush1.msra.mxu0 0.0
  %4234 = vmatprep.subr.mxu0 0.0
  %4235 = vmatpush1.msra.mxu0 0.0
  %4236 = vmatprep.subr.mxu0 0.0
  %4237 = vmatpush1.msra.mxu0 0.0
  %4238 = vmatprep.subr.mxu0 0.0
  %4239 = vmatpush1.msra.mxu0 0.0
  %4240 = vmatprep.subr.mxu0 0.0
  %4241 = vmatpush1.msra.mxu0 0.0
  %4242 = vmatprep.subr.mxu0 0.0
  %4243 = vmatpush1.msra.mxu0 0.0
  %4244 = vmatprep.subr.mxu0 0.0
  %4245 = vmatpush1.msra.mxu0 0.0
  %4246 = vmatprep.subr.mxu0 0.0
  %4247 = vmatpush1.msra.mxu0 0.0
  %4248 = vmatprep.subr.mxu0 0.0
  %4249 = vmatpush1.msra.mxu0 0.0
  %4250 = vmatprep.subr.mxu0 0.0
  %4251 = vmatpush1.msra.mxu0 0.0
  %4252 = vmatprep.subr.mxu0 0.0
  %4253 = vmatpush1.msra.mxu0 0.0
  %4254 = vmatprep.subr.mxu0 0.0
  %4255 = vmatpush1.msra.mxu0 0.0
  %4256 = vmatprep.mubr.f32.mxu0 0.0
  %4257 = vmatmul.mubr.f32.gmra.mrb[0].mxu0 %v3914
  %v4258 = vpop.f32.mrb[0].mxu0
  %v4259 = vadd.f32 %v4170, %v4258
  %v4260 = vpop.f32.mrb[0].mxu0
  %v4261 = vadd.f32 %v4172, %v4260
  %4262 = vmatprep.mubr.f32.mxu0 0.0
  %4263 = vmatmul.mubr.f32.gmra.mrb[0].mxu0 %v3917
  %v4264 = vpop.f32.mrb[0].mxu0
  %v4265 = vadd.f32 %v4176, %v4264
  %v4266 = vpop.f32.mrb[0].mxu0
  %v4267 = vadd.f32 %v4178, %v4266
  %4268 = vmatprep.mubr.f32.mxu0 0.0
  %4269 = vmatmul.mubr.f32.gmra.mrb[0].mxu0 %v3920
  %v4270 = vpop.f32.mrb[0].mxu0
  %v4271 = vadd.f32 %v4182, %v4270
  %v4272 = vpop.f32.mrb[0].mxu0
  %v4273 = vadd.f32 %v4184, %v4272
  %4274 = vmatprep.mubr.f32.mxu0 0.0
  %4275 = vmatmul.mubr.f32.gmra.mrb[0].mxu0 %v3923
  %v4276 = vpop.f32.mrb[0].mxu0
  %v4277 = vadd.f32 %v4188, %v4276
  %v4278 = vpop.f32.mrb[0].mxu0
  %v4279 = vadd.f32 %v4190, %v4278
  %4280 = vdwg.mxu0
  %v4281 = vadd.f32 %v4081, %v4083
  %v4282 = vadd.f32 %v4281, %v4259
  %v4283 = vadd.f32 %v4282, %v4261
  %4284 = vadd.xlane.f32.xlu0 %v4283
  %v4285 = vpop.xlane.xlu0 %4284
  %v4286 = vadd.f32 %v4087, %v4089
  %v4287 = vadd.f32 %v4286, %v4265
  %v4288 = vadd.f32 %v4287, %v4267
  %4289 = vadd.xlane.f32.xlu0 %v4288
  %v4290 = vpop.xlane.xlu0 %4289
  %v4291 = vadd.f32 %v4093, %v4095
  %v4292 = vadd.f32 %v4291, %v4271
  %v4293 = vadd.f32 %v4292, %v4273
  %4294 = vadd.xlane.f32.xlu0 %v4293
  %v4295 = vpop.xlane.xlu0 %4294
  %v4296 = vadd.f32 %v4099, %v4101
  %v4297 = vadd.f32 %v4296, %v4277
  %v4298 = vadd.f32 %v4297, %v4279
  %4299 = vadd.xlane.f32.xlu0 %v4298
  %v4300 = vpop.xlane.xlu0 %4299
  %v4301 = vmul.f32 %v4081, %v4081
  %v4302 = vmul.f32 %v4083, %v4083
  %v4303 = vmul.f32 %v4259, %v4259
  %v4304 = vmul.f32 %v4261, %v4261
  %v4305 = vmul.f32 %v4087, %v4087
  %v4306 = vmul.f32 %v4089, %v4089
  %v4307 = vmul.f32 %v4265, %v4265
  %v4308 = vmul.f32 %v4267, %v4267
  %v4309 = vmul.f32 %v4093, %v4093
  %v4310 = vmul.f32 %v4095, %v4095
  %v4311 = vmul.f32 %v4271, %v4271
  %v4312 = vmul.f32 %v4273, %v4273
  %v4313 = vmul.f32 %v4099, %v4099
  %v4314 = vmul.f32 %v4101, %v4101
  %v4315 = vmul.f32 %v4277, %v4277
  %v4316 = vmul.f32 %v4279, %v4279
  %v4317 = vadd.f32 %v4301, %v4302
  %v4318 = vadd.f32 %v4317, %v4303
  %v4319 = vadd.f32 %v4318, %v4304
  %4320 = vadd.xlane.f32.xlu0 %v4319
  %v4321 = vpop.xlane.xlu0 %4320
  %v4322 = vadd.f32 %v4305, %v4306
  %v4323 = vadd.f32 %v4322, %v4307
  %v4324 = vadd.f32 %v4323, %v4308
  %4325 = vadd.xlane.f32.xlu0 %v4324
  %v4326 = vpop.xlane.xlu0 %4325
  %v4327 = vadd.f32 %v4309, %v4310
  %v4328 = vadd.f32 %v4327, %v4311
  %v4329 = vadd.f32 %v4328, %v4312
  %4330 = vadd.xlane.f32.xlu0 %v4329
  %v4331 = vpop.xlane.xlu0 %4330
  %v4332 = vadd.f32 %v4313, %v4314
  %v4333 = vadd.f32 %v4332, %v4315
  %v4334 = vadd.f32 %v4333, %v4316
  %4335 = vadd.xlane.f32.xlu0 %v4334
  %v4336 = vpop.xlane.xlu0 %4335
  %v4337 = vmul.f32 %v4285, 0.001953125
  %v4338 = vmul.f32 %v4290, 0.001953125
  %v4339 = vmul.f32 %v4295, 0.001953125
  %v4340 = vmul.f32 %v4300, 0.001953125
  %v4341 = vmul.f32 %v4321, 0.001953125
  %v4342 = vmul.f32 %v4326, 0.001953125
  %v4343 = vmul.f32 %v4331, 0.001953125
  %v4344 = vmul.f32 %v4336, 0.001953125
  %v4345 = vmul.f32 %v4337, %v4337
  %v4346 = vmul.f32 %v4338, %v4338
  %v4347 = vmul.f32 %v4339, %v4339
  %v4348 = vmul.f32 %v4340, %v4340
  %v4349 = vsub.f32 %v4341, %v4345
  %v4350 = vsub.f32 %v4342, %v4346
  %v4351 = vsub.f32 %v4343, %v4347
  %v4352 = vsub.f32 %v4344, %v4348
  %v4353 = vld [vmem:[%s6] sm:$0xff]
  %v4354 = vld [vmem:[%s6 + $0x8] sm:$0xff]
  %v4355 = vld [vmem:[%s6 + $0x10] sm:$0xff]
  %v4356 = vld [vmem:[%s6 + $0x18] sm:$0xff]
  %v4357 = vadd.f32 %v4349, 1e-05
  %v4358 = vadd.f32 %v4350, 1e-05
  %v4359 = vadd.f32 %v4351, 1e-05
  %v4360 = vadd.f32 %v4352, 1e-05
  %v4361 = vrsqrt.pop %v4357
  %v4362 = vrsqrt.pop %v4358
  %v4363 = vrsqrt.pop %v4359
  %v4364 = vrsqrt.pop %v4360
  %v4365 = vmul.f32 %v4353, %v4361
  %v4366 = vmul.f32 %v4354, %v4362
  %v4367 = vmul.f32 %v4355, %v4363
  %v4368 = vmul.f32 %v4356, %v4364
  %v4369 = vld [vmem:[%s7] sm:$0xff]
  %v4370 = vld [vmem:[%s7 + $0x8] sm:$0xff]
  %v4371 = vld [vmem:[%s7 + $0x10] sm:$0xff]
  %v4372 = vld [vmem:[%s7 + $0x18] sm:$0xff]
  %v4373 = vmul.f32 %v4337, %v4365
  %v4374 = vmul.f32 %v4338, %v4366
  %v4375 = vmul.f32 %v4339, %v4367
  %v4376 = vmul.f32 %v4340, %v4368
  %v4377 = vsub.f32 %v4369, %v4373
  %v4378 = vsub.f32 %v4370, %v4374
  %v4379 = vsub.f32 %v4371, %v4375
  %v4380 = vsub.f32 %v4372, %v4376
  %4382 = vset.pattern.permute.xlu0 0
  %4383 = vperm.xlu0 %4382, %v4365
  %v4384 = vpop.permute.xlu0 %4383
  %4387 = vset.pattern.permute.xlu0 0
  %4388 = vperm.xlu0 %4387, %v4366
  %v4389 = vpop.permute.xlu0 %4388
  %4392 = vset.pattern.permute.xlu0 0
  %4393 = vperm.xlu0 %4392, %v4367
  %v4394 = vpop.permute.xlu0 %4393
  %4397 = vset.pattern.permute.xlu0 0
  %4398 = vperm.xlu0 %4397, %v4368
  %v4399 = vpop.permute.xlu0 %4398
  %v4401 = vmul.f32 %v4081, %v4384
  %v4402 = vmul.f32 %v4083, %v4384
  %v4403 = vmul.f32 %v4259, %v4384
  %v4404 = vmul.f32 %v4261, %v4384
  %v4405 = vmul.f32 %v4087, %v4389
  %v4406 = vmul.f32 %v4089, %v4389
  %v4407 = vmul.f32 %v4265, %v4389
  %v4408 = vmul.f32 %v4267, %v4389
  %v4409 = vmul.f32 %v4093, %v4394
  %v4410 = vmul.f32 %v4095, %v4394
  %v4411 = vmul.f32 %v4271, %v4394
  %v4412 = vmul.f32 %v4273, %v4394
  %v4413 = vmul.f32 %v4099, %v4399
  %v4414 = vmul.f32 %v4101, %v4399
  %v4415 = vmul.f32 %v4277, %v4399
  %v4416 = vmul.f32 %v4279, %v4399
  %4418 = vset.pattern.permute.xlu0 0
  %4419 = vperm.xlu0 %4418, %v4377
  %v4420 = vpop.permute.xlu0 %4419
  %4423 = vset.pattern.permute.xlu0 0
  %4424 = vperm.xlu0 %4423, %v4378
  %v4425 = vpop.permute.xlu0 %4424
  %4428 = vset.pattern.permute.xlu0 0
  %4429 = vperm.xlu0 %4428, %v4379
  %v4430 = vpop.permute.xlu0 %4429
  %4433 = vset.pattern.permute.xlu0 0
  %4434 = vperm.xlu0 %4433, %v4380
  %v4435 = vpop.permute.xlu0 %4434
  %v4437 = vadd.f32 %v4401, %v4420
  %v4438 = vadd.f32 %v4402, %v4420
  %v4439 = vadd.f32 %v4403, %v4420
  %v4440 = vadd.f32 %v4404, %v4420
  %v4441 = vadd.f32 %v4405, %v4425
  %v4442 = vadd.f32 %v4406, %v4425
  %v4443 = vadd.f32 %v4407, %v4425
  %v4444 = vadd.f32 %v4408, %v4425
  %v4445 = vadd.f32 %v4409, %v4430
  %v4446 = vadd.f32 %v4410, %v4430
  %v4447 = vadd.f32 %v4411, %v4430
  %v4448 = vadd.f32 %v4412, %v4430
  %v4449 = vadd.f32 %v4413, %v4435
  %v4450 = vadd.f32 %v4414, %v4435
  %v4451 = vadd.f32 %v4415, %v4435
  %v4452 = vadd.f32 %v4416, %v4435
  %v4453 = vmax.f32 %v4437, 0.0
  %v4454 = vmax.f32 %v4438, 0.0
  %v4455 = vmax.f32 %v4439, 0.0
  %v4456 = vmax.f32 %v4440, 0.0
  %v4457 = vmax.f32 %v4441, 0.0
  %v4458 = vmax.f32 %v4442, 0.0
  %v4459 = vmax.f32 %v4443, 0.0
  %v4460 = vmax.f32 %v4444, 0.0
  %v4461 = vmax.f32 %v4445, 0.0
  %v4462 = vmax.f32 %v4446, 0.0
  %v4463 = vmax.f32 %v4447, 0.0
  %v4464 = vmax.f32 %v4448, 0.0
  %v4465 = vmax.f32 %v4449, 0.0
  %v4466 = vmax.f32 %v4450, 0.0
  %v4467 = vmax.f32 %v4451, 0.0
  %v4468 = vmax.f32 %v4452, 0.0
  %4469 = vst [vmem:[%s8] sm:$0xff] %v4453
  %4470 = vst [vmem:[%s8 + $0x8] sm:$0xff] %v4454
  %4471 = vst [vmem:[%s8 + $0x10] sm:$0xff] %v4455
  %4472 = vst [vmem:[%s8 + $0x18] sm:$0xff] %v4456
  %4473 = vst [vmem:[%s8 + $0x20] sm:$0xff] %v4457
  %4474 = vst [vmem:[%s8 + $0x28] sm:$0xff] %v4458
  %4475 = vst [vmem:[%s8 + $0x30] sm:$0xff] %v4459
  %4476 = vst [vmem:[%s8 + $0x38] sm:$0xff] %v4460
  %4477 = vst [vmem:[%s8 + $0x40] sm:$0xff] %v4461
  %4478 = vst [vmem:[%s8 + $0x48] sm:$0xff] %v4462
  %4479 = vst [vmem:[%s8 + $0x50] sm:$0xff] %v4463
  %4480 = vst [vmem:[%s8 + $0x58] sm:$0xff] %v4464
  %4481 = vst [vmem:[%s8 + $0x60] sm:$0xff] %v4465
  %4482 = vst [vmem:[%s8 + $0x68] sm:$0xff] %v4466
  %4483 = vst [vmem:[%s8 + $0x70] sm:$0xff] %v4467
  %4484 = vst [vmem:[%s8 + $0x78] sm:$0xff] %v4468
  // Predicated region
  $region34: #{net_forward.1} parent=0 // pred_check
    _
  $region35: #{net_forward.1} parent=0 // pred_check_branch
    %4486 = sbr.rel (0) target = $region37
  $region36: #{net_forward.1} parent=0 // pred_region
    _
  $region37: #{net_forward.1} parent=0 // pred_fallthru
    _
  // Predicated region
  $region38: #{net_forward.1} parent=0 // pred_check
    _
  $region39: #{net_forward.1} parent=0 // pred_check_branch
    %4488 = sbr.rel (0) target = $region41
  $region40: #{net_forward.1} parent=0 // pred_region
    _
  $region41: #{net_forward.1} parent=0 // pred_fallthru
    _

</llo_original>
